<compile_context>
chip_gen: v7x
topology: tpu7x:2x2x1
jax: 0.10.0
libtpu: 0.0.40
codegen_flags: <defaults>
</compile_context>

<pallas_src>
import functools

import jax
import jax.numpy as jnp
import numpy as np
from jax import lax
from jax.experimental import pallas as pl
from jax.experimental.pallas import tpu as pltpu


# ----------------------------------------------------------------------------
# Pallas kernel: fused pos-add + batched q/kv projection + per-head softmax
# attention (batched over the batch block) + single output projection.
# ----------------------------------------------------------------------------
def cross_attn_kernel(s_ref, t_ref, spos_ref, tpos_ref,
                      wq_ref, qb_ref, wkv_ref, kvb_ref, wp_ref, pb_ref,
                      o_ref, *, num_head):
    bblk, Sq, D = s_ref.shape
    Sk = t_ref.shape[1]
    dh = D // num_head

    # Fused positional adds (tokens arrive bf16; add in f32 for fidelity).
    s = s_ref[...].astype(jnp.float32) + spos_ref[...]        # (bblk, Sq, D)
    tk = t_ref[...].astype(jnp.float32) + tpos_ref[...]       # (bblk, Sk, D)

    # ONE batched Q projection and ONE batched KV projection per grid step.
    # `scale` is already folded into wq_t / qb (prepare_params).
    s2 = s.reshape(bblk * Sq, D).astype(jnp.bfloat16)
    t2 = tk.reshape(bblk * Sk, D).astype(jnp.bfloat16)
    q = jnp.dot(s2, wq_ref[...], preferred_element_type=jnp.float32) + qb_ref[...]
    kv = jnp.dot(t2, wkv_ref[...], preferred_element_type=jnp.float32) + kvb_ref[...]

    # Cast kv to bf16 once, slice the bf16 value (no duplicated f32 slices).
    qh = q.astype(jnp.bfloat16).reshape(bblk, Sq, D)
    kv_bf = kv.astype(jnp.bfloat16)
    kh = kv_bf[:, :D].reshape(bblk, Sk, D)
    vh = kv_bf[:, D:].reshape(bblk, Sk, D)

    # Per-head attention, batched over the batch block via 3-D dot_general
    # (single batch dim -> well-supported Mosaic lowering).
    ctx_heads = []
    for h in range(num_head):
        sl = slice(h * dh, (h + 1) * dh)
        scores = lax.dot_general(
            qh[:, :, sl], kh[:, :, sl],
            dimension_numbers=(((2,), (2,)), ((0,), (0,))),
            preferred_element_type=jnp.float32)                # (bblk, Sq, Sk)
        scores = scores - jnp.max(scores, axis=-1, keepdims=True)
        p = jnp.exp(scores)
        p = p * pl.reciprocal(jnp.sum(p, axis=-1, keepdims=True), approx=True)
        ctx_heads.append(
            lax.dot_general(
                p.astype(jnp.bfloat16), vh[:, :, sl],
                dimension_numbers=(((2,), (1,)), ((0,), (0,))),
                preferred_element_type=jnp.float32,
            ).astype(jnp.bfloat16))                            # (bblk, Sq, dh)

    # Assemble the dense context buffer and run ONE output projection with
    # contraction dim D (not dh); single bias add afterwards.
    ctx = jnp.concatenate(ctx_heads, axis=-1).reshape(bblk * Sq, D)
    out = jnp.dot(ctx, wp_ref[...], preferred_element_type=jnp.float32) + pb_ref[...]
    o_ref[...] = out.reshape(bblk, Sq, D).astype(o_ref.dtype)


# ----------------------------------------------------------------------------
# One-time parameter preparation: pre-transpose / cast weights, fold the
# attention scale into Wq^T / q-bias, build combined positional tables
# (space + temporal) in the (n, t) sequence order.
# ----------------------------------------------------------------------------
def prepare_params(params, *, num_head):
    dim = params["wq"].shape[1]
    scale = (dim // num_head) ** (-0.5)
    spos = (params["clip_space_pos"][:, None, :]
            + params["clip_temporal_pos"][None, :, :]).reshape(-1, dim)
    tpos = (params["vmae_space_pos"][:, None, :]
            + params["vmae_temporal_pos"][None, :, :]).reshape(-1, dim)
    return {
        "spos": spos.astype(jnp.float32),                          # (Sq, D)
        "tpos": tpos.astype(jnp.float32),                          # (Sk, D)
        "wq_t": (scale * params["wq"].T).astype(jnp.bfloat16),     # (D, D), scale folded
        "qb": (scale * params["qb"])[None, :].astype(jnp.float32), # (1, D), scale folded
        "wkv_t": params["wkv"].T.astype(jnp.bfloat16),             # (D, 2D)
        "kvb": params["kvb"][None, :].astype(jnp.float32),         # (1, 2D)
        "wp_t": params["wproj"].T.astype(jnp.bfloat16),            # (D, D)
        "pb": params["pb"][None, :].astype(jnp.float32),           # (1, D)
    }


def _vmem_budget():
    try:
        cap = int(pltpu.get_tpu_info().vmem_capacity_bytes)
    except Exception:
        cap = 64 * 1024 * 1024
    # Leave headroom; v6e/v5e (128 MiB) -> 96 MiB limit, v7x (64 MiB) -> 48 MiB.
    limit = min(cap * 3 // 4, 96 * 1024 * 1024)
    return limit, limit // 2


def _pick_bblk(b, Sq, Sk, dim, budget):
    """Largest batch block that (a) divides b, (b) keeps >=2 grid steps when
    possible (v7x has 2 TCs), and (c) fits the per-step VMEM budget."""
    def step_bytes(c):
        return (2 * c * Sq * dim * 2          # s tokens, bf16, double-buffered
                + 2 * c * Sk * dim * 2        # t tokens, bf16, double-buffered
                + 2 * c * Sq * dim * 4        # output, f32, double-buffered
                + c * (Sq + Sk) * dim * 8     # live f32/bf16 q/kv intermediates
                + c * Sq * Sk * 4             # live (bblk,Sq,Sk) f32 score block
                + 3 * dim * dim * 2           # weights (bf16)
                + (Sq + Sk) * dim * 4)        # pos tables (f32)
    min_steps = 2 if b >= 2 else 1
    best = 1
    for cand in range(1, b + 1):
        if b % cand:
            continue
        if b // cand < min_steps:
            continue
        if step_bytes(cand) <= budget:
            best = cand
    return best


# ----------------------------------------------------------------------------
# Wrapper: pure layout rearranges only (done at bf16), then pallas_call over
# batch blocks.
# ----------------------------------------------------------------------------
def cross_attention_t2s(s_x, t_x, prepared, *, num_head, num_frames,
                        spec_frames, bblk=None):
    dim = s_x.shape[-1]
    t = num_frames // 2
    n_a = s_x.shape[0]
    b = s_x.shape[1] // spec_frames

    t_x_pat = t_x[1:]                                 # drop CLS row
    n_v = t_x_pat.shape[0]

    # bf16 cast BEFORE the layout transpose: halves HBM traffic of both the
    # rearrange and the kernel input blocks (pos adds happen in-kernel, f32).
    s_bf = s_x.astype(jnp.bfloat16)
    t_bf = t_x_pat.astype(jnp.bfloat16)

    # 'n (b t) d -> b (n t) d'
    s_pat = (s_bf.reshape(n_a, b, spec_frames, dim)
             .transpose(1, 0, 2, 3).reshape(b, n_a * spec_frames, dim))
    t_pat = (t_bf.reshape(n_v, b, t, dim)
             .transpose(1, 0, 2, 3).reshape(b, n_v * t, dim))

    Sq = n_a * spec_frames
    Sk = n_v * t

    vmem_limit, budget = _vmem_budget()
    if bblk is None:
        bblk = _pick_bblk(b, Sq, Sk, dim, budget)
    assert b % bblk == 0

    kernel = functools.partial(cross_attn_kernel, num_head=num_head)

    args = (s_pat, t_pat,
            prepared["spos"], prepared["tpos"],
            prepared["wq_t"], prepared["qb"],
            prepared["wkv_t"], prepared["kvb"],
            prepared["wp_t"], prepared["pb"])

    def build_call(single_buffer_consts):
        const_kwargs = (
            {"pipeline_mode": pl.Buffered(1)} if single_buffer_consts else {})

        def tok_spec(seq):
            return pl.BlockSpec((bblk, seq, dim), lambda i: (i, 0, 0))

        def const_spec(shape):
            nd = len(shape)
            return pl.BlockSpec(shape, lambda i: (0,) * nd, **const_kwargs)

        return pl.pallas_call(
            kernel,
            out_shape=jax.ShapeDtypeStruct((b, Sq, dim), s_x.dtype),
            grid_spec=pltpu.PrefetchScalarGridSpec(
                num_scalar_prefetch=0,
                grid=(b // bblk,),
                in_specs=[
                    tok_spec(Sq),                       # s tokens (bf16)
                    tok_spec(Sk),                       # t tokens (bf16)
                    const_spec((Sq, dim)),              # s pos (f32)
                    const_spec((Sk, dim)),              # t pos (f32)
                    const_spec((dim, dim)),             # scale*Wq^T (bf16)
                    const_spec((1, dim)),               # scale*q bias (f32)
                    const_spec((dim, 2 * dim)),         # Wkv^T (bf16)
                    const_spec((1, 2 * dim)),           # kv bias (f32)
                    const_spec((dim, dim)),             # Wproj^T (bf16)
                    const_spec((1, dim)),               # proj bias (f32)
                ],
                out_specs=pl.BlockSpec((bblk, Sq, dim), lambda i: (i, 0, 0)),
            ),
            compiler_params=pltpu.CompilerParams(
                dimension_semantics=("parallel",),
                vmem_limit_bytes=vmem_limit,
            ),
        )

    try:
        out = build_call(True)(*args)
    except Exception:
        # Fallback for JAX versions without pipeline_mode=pl.Buffered support.
        out = build_call(False)(*args)

    # 'b (n t) d -> n (b t) d', t = spec_frames
    out = out.reshape(b, n_a, spec_frames, dim).transpose(1, 0, 2, 3)
    return out.reshape(n_a, b * spec_frames, dim)


# ----------------------------------------------------------------------------
# Pure-JAX f32 reference (mirrors the PyTorch forward) for correctness check.
# ----------------------------------------------------------------------------
def reference(s_x, t_x, params, *, num_head, num_frames, spec_frames):
    dim = s_x.shape[-1]
    t = num_frames // 2
    n_a = s_x.shape[0]
    b = s_x.shape[1] // spec_frames
    dh = dim // num_head
    scale = dh ** (-0.5)

    t_xp = t_x[1:]
    n_v = t_xp.shape[0]

    s_pat = s_x.reshape(n_a, b, spec_frames, dim).transpose(1, 2, 0, 3)
    s_pat = s_pat + params["clip_space_pos"]
    s_pat = s_pat.transpose(0, 2, 1, 3) + params["clip_temporal_pos"]
    s_pat = s_pat.reshape(b, n_a * spec_frames, dim)

    t_pat = t_xp.reshape(n_v, b, t, dim).transpose(1, 2, 0, 3) + params["vmae_space_pos"]
    t_pat = t_pat.transpose(0, 2, 1, 3) + params["vmae_temporal_pos"]
    t_pat = t_pat.reshape(b, n_v * t, dim)

    q = s_pat @ params["wq"].T + params["qb"]
    kv = t_pat @ params["wkv"].T + params["kvb"]
    k, v = kv[..., :dim], kv[..., dim:]

    q = q.reshape(b, -1, num_head, dh).transpose(0, 2, 1, 3) * scale
    k = k.reshape(b, -1, num_head, dh).transpose(0, 2, 1, 3)
    v = v.reshape(b, -1, num_head, dh).transpose(0, 2, 1, 3)

    attn = jax.nn.softmax(q @ k.transpose(0, 1, 3, 2), axis=-1)
    o = (attn @ v).transpose(0, 2, 1, 3).reshape(b, -1, dim)
    o = o @ params["wproj"].T + params["pb"]
    o = o.reshape(b, n_a, spec_frames, dim).transpose(1, 0, 2, 3)
    return o.reshape(n_a, b * spec_frames, dim)


# ----------------------------------------------------------------------------
if __name__ == "__main__":
    dim = 32
    n_head = 4
    num_frames = 4            # -> t = num_frames // 2 = 2
    spec_frames = 2
    audio_patch = 8
    video_patch = 8
    batch = 2
    head_dim = dim // n_head
    scale = head_dim ** (-0.5)

    key = jax.random.PRNGKey(0)
    keys = jax.random.split(key, 12)

    params = {
        "clip_space_pos": scale * jax.random.normal(keys[0], (audio_patch, dim), jnp.float32),
        "vmae_space_pos": scale * jax.random.normal(keys[1], (video_patch, dim), jnp.float32),
        "clip_temporal_pos": scale * jax.random.normal(keys[2], (spec_frames, dim), jnp.float32),
        "vmae_temporal_pos": scale * jax.random.normal(keys[3], (num_frames // 2, dim), jnp.float32),
        "wq": 0.05 * jax.random.normal(keys[4], (dim, dim), jnp.float32),     # (out, in)
        "qb": 0.01 * jax.random.normal(keys[5], (dim,), jnp.float32),
        "wkv": 0.05 * jax.random.normal(keys[6], (2 * dim, dim), jnp.float32),
        "kvb": 0.01 * jax.random.normal(keys[7], (2 * dim,), jnp.float32),
        "wproj": 0.05 * jax.random.normal(keys[8], (dim, dim), jnp.float32),
        "pb": 0.01 * jax.random.normal(keys[9], (dim,), jnp.float32),
    }

    s_x = jax.random.normal(keys[10], (audio_patch, batch * spec_frames, dim), jnp.float32)
    t_x = jax.random.normal(keys[11], (video_patch + 1, batch * (num_frames // 2), dim), jnp.float32)

    prepared = prepare_params(params, num_head=n_head)

    out = cross_attention_t2s(s_x, t_x, prepared,
                              num_head=n_head, num_frames=num_frames,
                              spec_frames=spec_frames)
    out = jax.block_until_ready(out)

    ref = reference(s_x, t_x, params,
                    num_head=n_head, num_frames=num_frames,
                    spec_frames=spec_frames)

    # bf16 tokens/weights + approx reciprocal -> loosened tolerance vs f32 ref.
    np.testing.assert_allclose(np.asarray(out), np.asarray(ref), rtol=2e-2, atol=2e-2)
    print("KERNEL_OK")
</pallas_src>

<mosaic_0001>
module attributes {stable_mosaic.version = 11 : i64} {
  func.func @cross_attn_kernel(%arg0: i32, %arg1: memref<1x16x32xbf16, #tpu.memory_space<vmem>>, %arg2: memref<1x16x32xbf16, #tpu.memory_space<vmem>>, %arg3: memref<16x32xf32, #tpu.memory_space<vmem>>, %arg4: memref<16x32xf32, #tpu.memory_space<vmem>>, %arg5: memref<32x32xbf16, #tpu.memory_space<vmem>>, %arg6: memref<1x32xf32, #tpu.memory_space<vmem>>, %arg7: memref<32x64xbf16, #tpu.memory_space<vmem>>, %arg8: memref<1x64xf32, #tpu.memory_space<vmem>>, %arg9: memref<32x32xbf16, #tpu.memory_space<vmem>>, %arg10: memref<1x32xf32, #tpu.memory_space<vmem>>, %arg11: memref<1x16x32xf32, #tpu.memory_space<vmem>>) attributes {dimension_semantics = [#tpu.dimension_semantics<parallel>], iteration_bounds = array<i64: 2>, scalar_prefetch = 0 : i64, scratch_operands = 0 : i64, tpu.core_type = #tpu.core_type<tc>, window_params = [{transform_indices = @transform_0, window_bounds = array<i64: 1, 16, 32>}, {transform_indices = @transform_1, window_bounds = array<i64: 1, 16, 32>}, {pipeline_mode = #tpu.pipeline_mode<synchronous>, transform_indices = @transform_2, window_bounds = array<i64: 16, 32>}, {pipeline_mode = #tpu.pipeline_mode<synchronous>, transform_indices = @transform_3, window_bounds = array<i64: 16, 32>}, {pipeline_mode = #tpu.pipeline_mode<synchronous>, transform_indices = @transform_4, window_bounds = array<i64: 32, 32>}, {pipeline_mode = #tpu.pipeline_mode<synchronous>, transform_indices = @transform_5, window_bounds = array<i64: 1, 32>}, {pipeline_mode = #tpu.pipeline_mode<synchronous>, transform_indices = @transform_6, window_bounds = array<i64: 32, 64>}, {pipeline_mode = #tpu.pipeline_mode<synchronous>, transform_indices = @transform_7, window_bounds = array<i64: 1, 64>}, {pipeline_mode = #tpu.pipeline_mode<synchronous>, transform_indices = @transform_8, window_bounds = array<i64: 32, 32>}, {pipeline_mode = #tpu.pipeline_mode<synchronous>, transform_indices = @transform_9, window_bounds = array<i64: 1, 32>}, {transform_indices = @transform_10, window_bounds = array<i64: 1, 16, 32>}]} {
    %c0 = arith.constant 0 : index
    %c0_0 = arith.constant 0 : index
    %c0_1 = arith.constant 0 : index
    %0 = vector.load %arg1[%c0, %c0_0, %c0_1] : memref<1x16x32xbf16, #tpu.memory_space<vmem>>, vector<1x16x32xbf16>
    %1 = arith.extf %0 : vector<1x16x32xbf16> to vector<1x16x32xf32>
    %c0_2 = arith.constant 0 : index
    %c0_3 = arith.constant 0 : index
    %2 = vector.load %arg3[%c0_2, %c0_3] : memref<16x32xf32, #tpu.memory_space<vmem>>, vector<16x32xf32>
    %3 = vector.shape_cast %2 : vector<16x32xf32> to vector<1x16x32xf32>
    %4 = arith.addf %1, %3 : vector<1x16x32xf32>
    %c0_4 = arith.constant 0 : index
    %c0_5 = arith.constant 0 : index
    %c0_6 = arith.constant 0 : index
    %5 = vector.load %arg2[%c0_4, %c0_5, %c0_6] : memref<1x16x32xbf16, #tpu.memory_space<vmem>>, vector<1x16x32xbf16>
    %6 = arith.extf %5 : vector<1x16x32xbf16> to vector<1x16x32xf32>
    %c0_7 = arith.constant 0 : index
    %c0_8 = arith.constant 0 : index
    %7 = vector.load %arg4[%c0_7, %c0_8] : memref<16x32xf32, #tpu.memory_space<vmem>>, vector<16x32xf32>
    %8 = vector.shape_cast %7 : vector<16x32xf32> to vector<1x16x32xf32>
    %9 = arith.addf %6, %8 : vector<1x16x32xf32>
    %10 = vector.shape_cast %4 : vector<1x16x32xf32> to vector<16x32xf32>
    %11 = arith.truncf %10 : vector<16x32xf32> to vector<16x32xbf16>
    %12 = vector.shape_cast %9 : vector<1x16x32xf32> to vector<16x32xf32>
    %13 = arith.truncf %12 : vector<16x32xf32> to vector<16x32xbf16>
    %c0_9 = arith.constant 0 : index
    %c0_10 = arith.constant 0 : index
    %14 = vector.load %arg5[%c0_9, %c0_10] : memref<32x32xbf16, #tpu.memory_space<vmem>>, vector<32x32xbf16>
    %cst = arith.constant dense<0.000000e+00> : vector<16x32xf32>
    %15 = tpu.matmul %11, %14, %cst {dimension_numbers = #tpu.dot_dimension_numbers<[1], [0], [0], [1], [0, 0, 1, 1], [], []>} : vector<16x32xbf16>, vector<32x32xbf16>, vector<16x32xf32> -> vector<16x32xf32>
    %c0_11 = arith.constant 0 : index
    %c0_12 = arith.constant 0 : index
    %16 = vector.load %arg6[%c0_11, %c0_12] : memref<1x32xf32, #tpu.memory_space<vmem>>, vector<1x32xf32>
    %17 = vector.broadcast %16 : vector<1x32xf32> to vector<16x32xf32>
    %18 = arith.addf %15, %17 : vector<16x32xf32>
    %c0_13 = arith.constant 0 : index
    %c0_14 = arith.constant 0 : index
    %19 = vector.load %arg7[%c0_13, %c0_14] : memref<32x64xbf16, #tpu.memory_space<vmem>>, vector<32x64xbf16>
    %cst_15 = arith.constant dense<0.000000e+00> : vector<16x64xf32>
    %20 = tpu.matmul %13, %19, %cst_15 {dimension_numbers = #tpu.dot_dimension_numbers<[1], [0], [0], [1], [0, 0, 1, 1], [], []>} : vector<16x32xbf16>, vector<32x64xbf16>, vector<16x64xf32> -> vector<16x64xf32>
    %c0_16 = arith.constant 0 : index
    %c0_17 = arith.constant 0 : index
    %21 = vector.load %arg8[%c0_16, %c0_17] : memref<1x64xf32, #tpu.memory_space<vmem>>, vector<1x64xf32>
    %22 = vector.broadcast %21 : vector<1x64xf32> to vector<16x64xf32>
    %23 = arith.addf %20, %22 : vector<16x64xf32>
    %24 = arith.truncf %18 : vector<16x32xf32> to vector<16x32xbf16>
    %25 = vector.shape_cast %24 : vector<16x32xbf16> to vector<1x16x32xbf16>
    %26 = arith.truncf %23 : vector<16x64xf32> to vector<16x64xbf16>
    %27 = vector.extract_strided_slice %26 {offsets = [0, 0], sizes = [16, 32], strides = [1, 1]} : vector<16x64xbf16> to vector<16x32xbf16>
    %28 = vector.shape_cast %27 : vector<16x32xbf16> to vector<1x16x32xbf16>
    %29 = vector.extract_strided_slice %26 {offsets = [0, 32], sizes = [16, 32], strides = [1, 1]} : vector<16x64xbf16> to vector<16x32xbf16>
    %30 = vector.shape_cast %29 : vector<16x32xbf16> to vector<1x16x32xbf16>
    %31 = vector.extract_strided_slice %25 {offsets = [0, 0, 0], sizes = [1, 16, 8], strides = [1, 1, 1]} : vector<1x16x32xbf16> to vector<1x16x8xbf16>
    %32 = vector.extract_strided_slice %28 {offsets = [0, 0, 0], sizes = [1, 16, 8], strides = [1, 1, 1]} : vector<1x16x32xbf16> to vector<1x16x8xbf16>
    %cst_18 = arith.constant dense<0.000000e+00> : vector<1x16x16xf32>
    %33 = tpu.matmul %31, %32, %cst_18 {dimension_numbers = #tpu.dot_dimension_numbers<[2], [2], [1], [1], [0, 0, 0, 1, 1, 1], [0], [0]>} : vector<1x16x8xbf16>, vector<1x16x8xbf16>, vector<1x16x16xf32> -> vector<1x16x16xf32>
    %cst_19 = arith.constant dense<0xFF800000> : vector<1x16xf32>
    %34 = vector.multi_reduction <maximumf>, %33, %cst_19 [2] : vector<1x16x16xf32> to vector<1x16xf32>
    %35 = vector.shape_cast %34 : vector<1x16xf32> to vector<1x16x1xf32>
    %36 = vector.broadcast %35 : vector<1x16x1xf32> to vector<1x16x16xf32>
    %37 = arith.subf %33, %36 : vector<1x16x16xf32>
    %38 = math.exp %37 : vector<1x16x16xf32>
    %cst_20 = arith.constant dense<0.000000e+00> : vector<1x16xf32>
    %39 = vector.multi_reduction <add>, %38, %cst_20 [2] : vector<1x16x16xf32> to vector<1x16xf32>
    %40 = vector.shape_cast %39 : vector<1x16xf32> to vector<1x16x1xf32>
    %41 = tpu.reciprocal %40 {approx = true} : vector<1x16x1xf32> -> vector<1x16x1xf32>
    %42 = vector.broadcast %41 : vector<1x16x1xf32> to vector<1x16x16xf32>
    %43 = arith.mulf %38, %42 : vector<1x16x16xf32>
    %44 = arith.truncf %43 : vector<1x16x16xf32> to vector<1x16x16xbf16>
    %45 = vector.extract_strided_slice %30 {offsets = [0, 0, 0], sizes = [1, 16, 8], strides = [1, 1, 1]} : vector<1x16x32xbf16> to vector<1x16x8xbf16>
    %cst_21 = arith.constant dense<0.000000e+00> : vector<1x16x8xf32>
    %46 = tpu.matmul %44, %45, %cst_21 {dimension_numbers = #tpu.dot_dimension_numbers<[2], [1], [1], [2], [0, 0, 0, 1, 1, 2], [0], [0]>} : vector<1x16x16xbf16>, vector<1x16x8xbf16>, vector<1x16x8xf32> -> vector<1x16x8xf32>
    %47 = arith.truncf %46 : vector<1x16x8xf32> to vector<1x16x8xbf16>
    %48 = vector.extract_strided_slice %25 {offsets = [0, 0, 8], sizes = [1, 16, 8], strides = [1, 1, 1]} : vector<1x16x32xbf16> to vector<1x16x8xbf16>
    %49 = vector.extract_strided_slice %28 {offsets = [0, 0, 8], sizes = [1, 16, 8], strides = [1, 1, 1]} : vector<1x16x32xbf16> to vector<1x16x8xbf16>
    %cst_22 = arith.constant dense<0.000000e+00> : vector<1x16x16xf32>
    %50 = tpu.matmul %48, %49, %cst_22 {dimension_numbers = #tpu.dot_dimension_numbers<[2], [2], [1], [1], [0, 0, 0, 1, 1, 1], [0], [0]>} : vector<1x16x8xbf16>, vector<1x16x8xbf16>, vector<1x16x16xf32> -> vector<1x16x16xf32>
    %cst_23 = arith.constant dense<0xFF800000> : vector<1x16xf32>
    %51 = vector.multi_reduction <maximumf>, %50, %cst_23 [2] : vector<1x16x16xf32> to vector<1x16xf32>
    %52 = vector.shape_cast %51 : vector<1x16xf32> to vector<1x16x1xf32>
    %53 = vector.broadcast %52 : vector<1x16x1xf32> to vector<1x16x16xf32>
    %54 = arith.subf %50, %53 : vector<1x16x16xf32>
    %55 = math.exp %54 : vector<1x16x16xf32>
    %cst_24 = arith.constant dense<0.000000e+00> : vector<1x16xf32>
    %56 = vector.multi_reduction <add>, %55, %cst_24 [2] : vector<1x16x16xf32> to vector<1x16xf32>
    %57 = vector.shape_cast %56 : vector<1x16xf32> to vector<1x16x1xf32>
    %58 = tpu.reciprocal %57 {approx = true} : vector<1x16x1xf32> -> vector<1x16x1xf32>
    %59 = vector.broadcast %58 : vector<1x16x1xf32> to vector<1x16x16xf32>
    %60 = arith.mulf %55, %59 : vector<1x16x16xf32>
    %61 = arith.truncf %60 : vector<1x16x16xf32> to vector<1x16x16xbf16>
    %62 = vector.extract_strided_slice %30 {offsets = [0, 0, 8], sizes = [1, 16, 8], strides = [1, 1, 1]} : vector<1x16x32xbf16> to vector<1x16x8xbf16>
    %cst_25 = arith.constant dense<0.000000e+00> : vector<1x16x8xf32>
    %63 = tpu.matmul %61, %62, %cst_25 {dimension_numbers = #tpu.dot_dimension_numbers<[2], [1], [1], [2], [0, 0, 0, 1, 1, 2], [0], [0]>} : vector<1x16x16xbf16>, vector<1x16x8xbf16>, vector<1x16x8xf32> -> vector<1x16x8xf32>
    %64 = arith.truncf %63 : vector<1x16x8xf32> to vector<1x16x8xbf16>
    %65 = vector.extract_strided_slice %25 {offsets = [0, 0, 16], sizes = [1, 16, 8], strides = [1, 1, 1]} : vector<1x16x32xbf16> to vector<1x16x8xbf16>
    %66 = vector.extract_strided_slice %28 {offsets = [0, 0, 16], sizes = [1, 16, 8], strides = [1, 1, 1]} : vector<1x16x32xbf16> to vector<1x16x8xbf16>
    %cst_26 = arith.constant dense<0.000000e+00> : vector<1x16x16xf32>
    %67 = tpu.matmul %65, %66, %cst_26 {dimension_numbers = #tpu.dot_dimension_numbers<[2], [2], [1], [1], [0, 0, 0, 1, 1, 1], [0], [0]>} : vector<1x16x8xbf16>, vector<1x16x8xbf16>, vector<1x16x16xf32> -> vector<1x16x16xf32>
    %cst_27 = arith.constant dense<0xFF800000> : vector<1x16xf32>
    %68 = vector.multi_reduction <maximumf>, %67, %cst_27 [2] : vector<1x16x16xf32> to vector<1x16xf32>
    %69 = vector.shape_cast %68 : vector<1x16xf32> to vector<1x16x1xf32>
    %70 = vector.broadcast %69 : vector<1x16x1xf32> to vector<1x16x16xf32>
    %71 = arith.subf %67, %70 : vector<1x16x16xf32>
    %72 = math.exp %71 : vector<1x16x16xf32>
    %cst_28 = arith.constant dense<0.000000e+00> : vector<1x16xf32>
    %73 = vector.multi_reduction <add>, %72, %cst_28 [2] : vector<1x16x16xf32> to vector<1x16xf32>
    %74 = vector.shape_cast %73 : vector<1x16xf32> to vector<1x16x1xf32>
    %75 = tpu.reciprocal %74 {approx = true} : vector<1x16x1xf32> -> vector<1x16x1xf32>
    %76 = vector.broadcast %75 : vector<1x16x1xf32> to vector<1x16x16xf32>
    %77 = arith.mulf %72, %76 : vector<1x16x16xf32>
    %78 = arith.truncf %77 : vector<1x16x16xf32> to vector<1x16x16xbf16>
    %79 = vector.extract_strided_slice %30 {offsets = [0, 0, 16], sizes = [1, 16, 8], strides = [1, 1, 1]} : vector<1x16x32xbf16> to vector<1x16x8xbf16>
    %cst_29 = arith.constant dense<0.000000e+00> : vector<1x16x8xf32>
    %80 = tpu.matmul %78, %79, %cst_29 {dimension_numbers = #tpu.dot_dimension_numbers<[2], [1], [1], [2], [0, 0, 0, 1, 1, 2], [0], [0]>} : vector<1x16x16xbf16>, vector<1x16x8xbf16>, vector<1x16x8xf32> -> vector<1x16x8xf32>
    %81 = arith.truncf %80 : vector<1x16x8xf32> to vector<1x16x8xbf16>
    %82 = vector.extract_strided_slice %25 {offsets = [0, 0, 24], sizes = [1, 16, 8], strides = [1, 1, 1]} : vector<1x16x32xbf16> to vector<1x16x8xbf16>
    %83 = vector.extract_strided_slice %28 {offsets = [0, 0, 24], sizes = [1, 16, 8], strides = [1, 1, 1]} : vector<1x16x32xbf16> to vector<1x16x8xbf16>
    %cst_30 = arith.constant dense<0.000000e+00> : vector<1x16x16xf32>
    %84 = tpu.matmul %82, %83, %cst_30 {dimension_numbers = #tpu.dot_dimension_numbers<[2], [2], [1], [1], [0, 0, 0, 1, 1, 1], [0], [0]>} : vector<1x16x8xbf16>, vector<1x16x8xbf16>, vector<1x16x16xf32> -> vector<1x16x16xf32>
    %cst_31 = arith.constant dense<0xFF800000> : vector<1x16xf32>
    %85 = vector.multi_reduction <maximumf>, %84, %cst_31 [2] : vector<1x16x16xf32> to vector<1x16xf32>
    %86 = vector.shape_cast %85 : vector<1x16xf32> to vector<1x16x1xf32>
    %87 = vector.broadcast %86 : vector<1x16x1xf32> to vector<1x16x16xf32>
    %88 = arith.subf %84, %87 : vector<1x16x16xf32>
    %89 = math.exp %88 : vector<1x16x16xf32>
    %cst_32 = arith.constant dense<0.000000e+00> : vector<1x16xf32>
    %90 = vector.multi_reduction <add>, %89, %cst_32 [2] : vector<1x16x16xf32> to vector<1x16xf32>
    %91 = vector.shape_cast %90 : vector<1x16xf32> to vector<1x16x1xf32>
    %92 = tpu.reciprocal %91 {approx = true} : vector<1x16x1xf32> -> vector<1x16x1xf32>
    %93 = vector.broadcast %92 : vector<1x16x1xf32> to vector<1x16x16xf32>
    %94 = arith.mulf %89, %93 : vector<1x16x16xf32>
    %95 = arith.truncf %94 : vector<1x16x16xf32> to vector<1x16x16xbf16>
    %96 = vector.extract_strided_slice %30 {offsets = [0, 0, 24], sizes = [1, 16, 8], strides = [1, 1, 1]} : vector<1x16x32xbf16> to vector<1x16x8xbf16>
    %cst_33 = arith.constant dense<0.000000e+00> : vector<1x16x8xf32>
    %97 = tpu.matmul %95, %96, %cst_33 {dimension_numbers = #tpu.dot_dimension_numbers<[2], [1], [1], [2], [0, 0, 0, 1, 1, 2], [0], [0]>} : vector<1x16x16xbf16>, vector<1x16x8xbf16>, vector<1x16x8xf32> -> vector<1x16x8xf32>
    %98 = arith.truncf %97 : vector<1x16x8xf32> to vector<1x16x8xbf16>
    %99 = tpu.concatenate %47, %64, %81, %98 in 2 : vector<1x16x8xbf16>, vector<1x16x8xbf16>, vector<1x16x8xbf16>, vector<1x16x8xbf16> -> vector<1x16x32xbf16>
    %100 = vector.shape_cast %99 : vector<1x16x32xbf16> to vector<16x32xbf16>
    %c0_34 = arith.constant 0 : index
    %c0_35 = arith.constant 0 : index
    %101 = vector.load %arg9[%c0_34, %c0_35] : memref<32x32xbf16, #tpu.memory_space<vmem>>, vector<32x32xbf16>
    %cst_36 = arith.constant dense<0.000000e+00> : vector<16x32xf32>
    %102 = tpu.matmul %100, %101, %cst_36 {dimension_numbers = #tpu.dot_dimension_numbers<[1], [0], [0], [1], [0, 0, 1, 1], [], []>} : vector<16x32xbf16>, vector<32x32xbf16>, vector<16x32xf32> -> vector<16x32xf32>
    %c0_37 = arith.constant 0 : index
    %c0_38 = arith.constant 0 : index
    %103 = vector.load %arg10[%c0_37, %c0_38] : memref<1x32xf32, #tpu.memory_space<vmem>>, vector<1x32xf32>
    %104 = vector.broadcast %103 : vector<1x32xf32> to vector<16x32xf32>
    %105 = arith.addf %102, %104 : vector<16x32xf32>
    %106 = vector.shape_cast %105 : vector<16x32xf32> to vector<1x16x32xf32>
    %c0_39 = arith.constant 0 : index
    %c0_40 = arith.constant 0 : index
    %c0_41 = arith.constant 0 : index
    %107 = vector.load %arg11[%c0_39, %c0_40, %c0_41] : memref<1x16x32xf32, #tpu.memory_space<vmem>>, vector<1x16x32xf32>
    tpu.vector_store %arg11[%c0_39, %c0_40, %c0_41], %106 {strides = array<i32>} : memref<1x16x32xf32, #tpu.memory_space<vmem>>, vector<1x16x32xf32>,
    return
  }
  func.func @transform_0(%arg0: i32) -> (i32, i32, i32) {
    %c0_i32 = arith.constant 0 : i32
    %c0_i32_0 = arith.constant 0 : i32
    %c0_i32_1 = arith.constant 0 : i32
    return %arg0, %c0_i32, %c0_i32_0 : i32, i32, i32
  }
  func.func @transform_1(%arg0: i32) -> (i32, i32, i32) {
    %c0_i32 = arith.constant 0 : i32
    %c0_i32_0 = arith.constant 0 : i32
    %c0_i32_1 = arith.constant 0 : i32
    return %arg0, %c0_i32, %c0_i32_0 : i32, i32, i32
  }
  func.func @transform_2(%arg0: i32) -> (i32, i32) {
    %c0_i32 = arith.constant 0 : i32
    %c0_i32_0 = arith.constant 0 : i32
    %c0_i32_1 = arith.constant 0 : i32
    return %c0_i32, %c0_i32_0 : i32, i32
  }
  func.func @transform_3(%arg0: i32) -> (i32, i32) {
    %c0_i32 = arith.constant 0 : i32
    %c0_i32_0 = arith.constant 0 : i32
    %c0_i32_1 = arith.constant 0 : i32
    return %c0_i32, %c0_i32_0 : i32, i32
  }
  func.func @transform_4(%arg0: i32) -> (i32, i32) {
    %c0_i32 = arith.constant 0 : i32
    %c0_i32_0 = arith.constant 0 : i32
    %c0_i32_1 = arith.constant 0 : i32
    return %c0_i32, %c0_i32_0 : i32, i32
  }
  func.func @transform_5(%arg0: i32) -> (i32, i32) {
    %c0_i32 = arith.constant 0 : i32
    %c0_i32_0 = arith.constant 0 : i32
    %c0_i32_1 = arith.constant 0 : i32
    return %c0_i32, %c0_i32_0 : i32, i32
  }
  func.func @transform_6(%arg0: i32) -> (i32, i32) {
    %c0_i32 = arith.constant 0 : i32
    %c0_i32_0 = arith.constant 0 : i32
    %c0_i32_1 = arith.constant 0 : i32
    return %c0_i32, %c0_i32_0 : i32, i32
  }
  func.func @transform_7(%arg0: i32) -> (i32, i32) {
    %c0_i32 = arith.constant 0 : i32
    %c0_i32_0 = arith.constant 0 : i32
    %c0_i32_1 = arith.constant 0 : i32
    return %c0_i32, %c0_i32_0 : i32, i32
  }
  func.func @transform_8(%arg0: i32) -> (i32, i32) {
    %c0_i32 = arith.constant 0 : i32
    %c0_i32_0 = arith.constant 0 : i32
    %c0_i32_1 = arith.constant 0 : i32
    return %c0_i32, %c0_i32_0 : i32, i32
  }
  func.func @transform_9(%arg0: i32) -> (i32, i32) {
    %c0_i32 = arith.constant 0 : i32
    %c0_i32_0 = arith.constant 0 : i32
    %c0_i32_1 = arith.constant 0 : i32
    return %c0_i32, %c0_i32_0 : i32, i32
  }
  func.func @transform_10(%arg0: i32) -> (i32, i32, i32) {
    %c0_i32 = arith.constant 0 : i32
    %c0_i32_0 = arith.constant 0 : i32
    %c0_i32_1 = arith.constant 0 : i32
    return %arg0, %c0_i32, %c0_i32_0 : i32, i32, i32
  }
}

module attributes {stable_mosaic.version = 11 : i64} {
  func.func @cross_attn_kernel(%arg0: i32, %arg1: memref<1x16x32xbf16, #tpu.memory_space<vmem>>, %arg2: memref<1x16x32xbf16, #tpu.memory_space<vmem>>, %arg3: memref<16x32xf32, #tpu.memory_space<vmem>>, %arg4: memref<16x32xf32, #tpu.memory_space<vmem>>, %arg5: memref<32x32xbf16, #tpu.memory_space<vmem>>, %arg6: memref<1x32xf32, #tpu.memory_space<vmem>>, %arg7: memref<32x64xbf16, #tpu.memory_space<vmem>>, %arg8: memref<1x64xf32, #tpu.memory_space<vmem>>, %arg9: memref<32x32xbf16, #tpu.memory_space<vmem>>, %arg10: memref<1x32xf32, #tpu.memory_space<vmem>>, %arg11: memref<1x16x32xf32, #tpu.memory_space<vmem>>) attributes {dimension_semantics = [#tpu.dimension_semantics<parallel>], iteration_bounds = array<i64: 2>, scalar_prefetch = 0 : i64, scratch_operands = 0 : i64, tpu.core_type = #tpu.core_type<tc>, window_params = [{transform_indices = @transform_0, window_bounds = array<i64: 1, 16, 32>}, {transform_indices = @transform_1, window_bounds = array<i64: 1, 16, 32>}, {pipeline_mode = #tpu.pipeline_mode<synchronous>, transform_indices = @transform_2, window_bounds = array<i64: 16, 32>}, {pipeline_mode = #tpu.pipeline_mode<synchronous>, transform_indices = @transform_3, window_bounds = array<i64: 16, 32>}, {pipeline_mode = #tpu.pipeline_mode<synchronous>, transform_indices = @transform_4, window_bounds = array<i64: 32, 32>}, {pipeline_mode = #tpu.pipeline_mode<synchronous>, transform_indices = @transform_5, window_bounds = array<i64: 1, 32>}, {pipeline_mode = #tpu.pipeline_mode<synchronous>, transform_indices = @transform_6, window_bounds = array<i64: 32, 64>}, {pipeline_mode = #tpu.pipeline_mode<synchronous>, transform_indices = @transform_7, window_bounds = array<i64: 1, 64>}, {pipeline_mode = #tpu.pipeline_mode<synchronous>, transform_indices = @transform_8, window_bounds = array<i64: 32, 32>}, {pipeline_mode = #tpu.pipeline_mode<synchronous>, transform_indices = @transform_9, window_bounds = array<i64: 1, 32>}, {transform_indices = @transform_10, window_bounds = array<i64: 1, 16, 32>}]} {
    %c0 = arith.constant 0 : index
    %c0_0 = arith.constant 0 : index
    %c0_1 = arith.constant 0 : index
    %0 = vector.load %arg1[%c0, %c0_0, %c0_1] : memref<1x16x32xbf16, #tpu.memory_space<vmem>>, vector<1x16x32xbf16>
    %1 = arith.extf %0 : vector<1x16x32xbf16> to vector<1x16x32xf32>
    %c0_2 = arith.constant 0 : index
    %c0_3 = arith.constant 0 : index
    %2 = vector.load %arg3[%c0_2, %c0_3] : memref<16x32xf32, #tpu.memory_space<vmem>>, vector<16x32xf32>
    %3 = vector.shape_cast %2 : vector<16x32xf32> to vector<1x16x32xf32>
    %4 = arith.addf %1, %3 : vector<1x16x32xf32>
    %c0_4 = arith.constant 0 : index
    %c0_5 = arith.constant 0 : index
    %c0_6 = arith.constant 0 : index
    %5 = vector.load %arg2[%c0_4, %c0_5, %c0_6] : memref<1x16x32xbf16, #tpu.memory_space<vmem>>, vector<1x16x32xbf16>
    %6 = arith.extf %5 : vector<1x16x32xbf16> to vector<1x16x32xf32>
    %c0_7 = arith.constant 0 : index
    %c0_8 = arith.constant 0 : index
    %7 = vector.load %arg4[%c0_7, %c0_8] : memref<16x32xf32, #tpu.memory_space<vmem>>, vector<16x32xf32>
    %8 = vector.shape_cast %7 : vector<16x32xf32> to vector<1x16x32xf32>
    %9 = arith.addf %6, %8 : vector<1x16x32xf32>
    %10 = vector.shape_cast %4 : vector<1x16x32xf32> to vector<16x32xf32>
    %11 = arith.truncf %10 : vector<16x32xf32> to vector<16x32xbf16>
    %12 = vector.shape_cast %9 : vector<1x16x32xf32> to vector<16x32xf32>
    %13 = arith.truncf %12 : vector<16x32xf32> to vector<16x32xbf16>
    %c0_9 = arith.constant 0 : index
    %c0_10 = arith.constant 0 : index
    %14 = vector.load %arg5[%c0_9, %c0_10] : memref<32x32xbf16, #tpu.memory_space<vmem>>, vector<32x32xbf16>
    %cst = arith.constant dense<0.000000e+00> : vector<16x32xf32>
    %15 = tpu.matmul %11, %14, %cst {dimension_numbers = #tpu.dot_dimension_numbers<[1], [0], [0], [1], [0, 0, 1, 1], [], []>} : vector<16x32xbf16>, vector<32x32xbf16>, vector<16x32xf32> -> vector<16x32xf32>
    %c0_11 = arith.constant 0 : index
    %c0_12 = arith.constant 0 : index
    %16 = vector.load %arg6[%c0_11, %c0_12] : memref<1x32xf32, #tpu.memory_space<vmem>>, vector<1x32xf32>
    %17 = vector.broadcast %16 : vector<1x32xf32> to vector<16x32xf32>
    %18 = arith.addf %15, %17 : vector<16x32xf32>
    %c0_13 = arith.constant 0 : index
    %c0_14 = arith.constant 0 : index
    %19 = vector.load %arg7[%c0_13, %c0_14] : memref<32x64xbf16, #tpu.memory_space<vmem>>, vector<32x64xbf16>
    %cst_15 = arith.constant dense<0.000000e+00> : vector<16x64xf32>
    %20 = tpu.matmul %13, %19, %cst_15 {dimension_numbers = #tpu.dot_dimension_numbers<[1], [0], [0], [1], [0, 0, 1, 1], [], []>} : vector<16x32xbf16>, vector<32x64xbf16>, vector<16x64xf32> -> vector<16x64xf32>
    %c0_16 = arith.constant 0 : index
    %c0_17 = arith.constant 0 : index
    %21 = vector.load %arg8[%c0_16, %c0_17] : memref<1x64xf32, #tpu.memory_space<vmem>>, vector<1x64xf32>
    %22 = vector.broadcast %21 : vector<1x64xf32> to vector<16x64xf32>
    %23 = arith.addf %20, %22 : vector<16x64xf32>
    %24 = arith.truncf %18 : vector<16x32xf32> to vector<16x32xbf16>
    %25 = vector.shape_cast %24 : vector<16x32xbf16> to vector<1x16x32xbf16>
    %26 = arith.truncf %23 : vector<16x64xf32> to vector<16x64xbf16>
    %27 = vector.extract_strided_slice %26 {offsets = [0, 0], sizes = [16, 32], strides = [1, 1]} : vector<16x64xbf16> to vector<16x32xbf16>
    %28 = vector.shape_cast %27 : vector<16x32xbf16> to vector<1x16x32xbf16>
    %29 = vector.extract_strided_slice %26 {offsets = [0, 32], sizes = [16, 32], strides = [1, 1]} : vector<16x64xbf16> to vector<16x32xbf16>
    %30 = vector.shape_cast %29 : vector<16x32xbf16> to vector<1x16x32xbf16>
    %31 = vector.extract_strided_slice %25 {offsets = [0, 0, 0], sizes = [1, 16, 8], strides = [1, 1, 1]} : vector<1x16x32xbf16> to vector<1x16x8xbf16>
    %32 = vector.extract_strided_slice %28 {offsets = [0, 0, 0], sizes = [1, 16, 8], strides = [1, 1, 1]} : vector<1x16x32xbf16> to vector<1x16x8xbf16>
    %cst_18 = arith.constant dense<0.000000e+00> : vector<1x16x16xf32>
    %33 = tpu.matmul %31, %32, %cst_18 {dimension_numbers = #tpu.dot_dimension_numbers<[2], [2], [1], [1], [0, 0, 0, 1, 1, 1], [0], [0]>} : vector<1x16x8xbf16>, vector<1x16x8xbf16>, vector<1x16x16xf32> -> vector<1x16x16xf32>
    %cst_19 = arith.constant dense<0xFF800000> : vector<1x16xf32>
    %34 = vector.multi_reduction <maximumf>, %33, %cst_19 [2] : vector<1x16x16xf32> to vector<1x16xf32>
    %35 = vector.shape_cast %34 : vector<1x16xf32> to vector<1x16x1xf32>
    %36 = vector.broadcast %35 : vector<1x16x1xf32> to vector<1x16x16xf32>
    %37 = arith.subf %33, %36 : vector<1x16x16xf32>
    %38 = math.exp %37 : vector<1x16x16xf32>
    %cst_20 = arith.constant dense<0.000000e+00> : vector<1x16xf32>
    %39 = vector.multi_reduction <add>, %38, %cst_20 [2] : vector<1x16x16xf32> to vector<1x16xf32>
    %40 = vector.shape_cast %39 : vector<1x16xf32> to vector<1x16x1xf32>
    %41 = tpu.reciprocal %40 {approx = true} : vector<1x16x1xf32> -> vector<1x16x1xf32>
    %42 = vector.broadcast %41 : vector<1x16x1xf32> to vector<1x16x16xf32>
    %43 = arith.mulf %38, %42 : vector<1x16x16xf32>
    %44 = arith.truncf %43 : vector<1x16x16xf32> to vector<1x16x16xbf16>
    %45 = vector.extract_strided_slice %30 {offsets = [0, 0, 0], sizes = [1, 16, 8], strides = [1, 1, 1]} : vector<1x16x32xbf16> to vector<1x16x8xbf16>
    %cst_21 = arith.constant dense<0.000000e+00> : vector<1x16x8xf32>
    %46 = tpu.matmul %44, %45, %cst_21 {dimension_numbers = #tpu.dot_dimension_numbers<[2], [1], [1], [2], [0, 0, 0, 1, 1, 2], [0], [0]>} : vector<1x16x16xbf16>, vector<1x16x8xbf16>, vector<1x16x8xf32> -> vector<1x16x8xf32>
    %47 = arith.truncf %46 : vector<1x16x8xf32> to vector<1x16x8xbf16>
    %48 = vector.extract_strided_slice %25 {offsets = [0, 0, 8], sizes = [1, 16, 8], strides = [1, 1, 1]} : vector<1x16x32xbf16> to vector<1x16x8xbf16>
    %49 = vector.extract_strided_slice %28 {offsets = [0, 0, 8], sizes = [1, 16, 8], strides = [1, 1, 1]} : vector<1x16x32xbf16> to vector<1x16x8xbf16>
    %cst_22 = arith.constant dense<0.000000e+00> : vector<1x16x16xf32>
    %50 = tpu.matmul %48, %49, %cst_22 {dimension_numbers = #tpu.dot_dimension_numbers<[2], [2], [1], [1], [0, 0, 0, 1, 1, 1], [0], [0]>} : vector<1x16x8xbf16>, vector<1x16x8xbf16>, vector<1x16x16xf32> -> vector<1x16x16xf32>
    %cst_23 = arith.constant dense<0xFF800000> : vector<1x16xf32>
    %51 = vector.multi_reduction <maximumf>, %50, %cst_23 [2] : vector<1x16x16xf32> to vector<1x16xf32>
    %52 = vector.shape_cast %51 : vector<1x16xf32> to vector<1x16x1xf32>
    %53 = vector.broadcast %52 : vector<1x16x1xf32> to vector<1x16x16xf32>
    %54 = arith.subf %50, %53 : vector<1x16x16xf32>
    %55 = math.exp %54 : vector<1x16x16xf32>
    %cst_24 = arith.constant dense<0.000000e+00> : vector<1x16xf32>
    %56 = vector.multi_reduction <add>, %55, %cst_24 [2] : vector<1x16x16xf32> to vector<1x16xf32>
    %57 = vector.shape_cast %56 : vector<1x16xf32> to vector<1x16x1xf32>
    %58 = tpu.reciprocal %57 {approx = true} : vector<1x16x1xf32> -> vector<1x16x1xf32>
    %59 = vector.broadcast %58 : vector<1x16x1xf32> to vector<1x16x16xf32>
    %60 = arith.mulf %55, %59 : vector<1x16x16xf32>
    %61 = arith.truncf %60 : vector<1x16x16xf32> to vector<1x16x16xbf16>
    %62 = vector.extract_strided_slice %30 {offsets = [0, 0, 8], sizes = [1, 16, 8], strides = [1, 1, 1]} : vector<1x16x32xbf16> to vector<1x16x8xbf16>
    %cst_25 = arith.constant dense<0.000000e+00> : vector<1x16x8xf32>
    %63 = tpu.matmul %61, %62, %cst_25 {dimension_numbers = #tpu.dot_dimension_numbers<[2], [1], [1], [2], [0, 0, 0, 1, 1, 2], [0], [0]>} : vector<1x16x16xbf16>, vector<1x16x8xbf16>, vector<1x16x8xf32> -> vector<1x16x8xf32>
    %64 = arith.truncf %63 : vector<1x16x8xf32> to vector<1x16x8xbf16>
    %65 = vector.extract_strided_slice %25 {offsets = [0, 0, 16], sizes = [1, 16, 8], strides = [1, 1, 1]} : vector<1x16x32xbf16> to vector<1x16x8xbf16>
    %66 = vector.extract_strided_slice %28 {offsets = [0, 0, 16], sizes = [1, 16, 8], strides = [1, 1, 1]} : vector<1x16x32xbf16> to vector<1x16x8xbf16>
    %cst_26 = arith.constant dense<0.000000e+00> : vector<1x16x16xf32>
    %67 = tpu.matmul %65, %66, %cst_26 {dimension_numbers = #tpu.dot_dimension_numbers<[2], [2], [1], [1], [0, 0, 0, 1, 1, 1], [0], [0]>} : vector<1x16x8xbf16>, vector<1x16x8xbf16>, vector<1x16x16xf32> -> vector<1x16x16xf32>
    %cst_27 = arith.constant dense<0xFF800000> : vector<1x16xf32>
    %68 = vector.multi_reduction <maximumf>, %67, %cst_27 [2] : vector<1x16x16xf32> to vector<1x16xf32>
    %69 = vector.shape_cast %68 : vector<1x16xf32> to vector<1x16x1xf32>
    %70 = vector.broadcast %69 : vector<1x16x1xf32> to vector<1x16x16xf32>
    %71 = arith.subf %67, %70 : vector<1x16x16xf32>
    %72 = math.exp %71 : vector<1x16x16xf32>
    %cst_28 = arith.constant dense<0.000000e+00> : vector<1x16xf32>
    %73 = vector.multi_reduction <add>, %72, %cst_28 [2] : vector<1x16x16xf32> to vector<1x16xf32>
    %74 = vector.shape_cast %73 : vector<1x16xf32> to vector<1x16x1xf32>
    %75 = tpu.reciprocal %74 {approx = true} : vector<1x16x1xf32> -> vector<1x16x1xf32>
    %76 = vector.broadcast %75 : vector<1x16x1xf32> to vector<1x16x16xf32>
    %77 = arith.mulf %72, %76 : vector<1x16x16xf32>
    %78 = arith.truncf %77 : vector<1x16x16xf32> to vector<1x16x16xbf16>
    %79 = vector.extract_strided_slice %30 {offsets = [0, 0, 16], sizes = [1, 16, 8], strides = [1, 1, 1]} : vector<1x16x32xbf16> to vector<1x16x8xbf16>
    %cst_29 = arith.constant dense<0.000000e+00> : vector<1x16x8xf32>
    %80 = tpu.matmul %78, %79, %cst_29 {dimension_numbers = #tpu.dot_dimension_numbers<[2], [1], [1], [2], [0, 0, 0, 1, 1, 2], [0], [0]>} : vector<1x16x16xbf16>, vector<1x16x8xbf16>, vector<1x16x8xf32> -> vector<1x16x8xf32>
    %81 = arith.truncf %80 : vector<1x16x8xf32> to vector<1x16x8xbf16>
    %82 = vector.extract_strided_slice %25 {offsets = [0, 0, 24], sizes = [1, 16, 8], strides = [1, 1, 1]} : vector<1x16x32xbf16> to vector<1x16x8xbf16>
    %83 = vector.extract_strided_slice %28 {offsets = [0, 0, 24], sizes = [1, 16, 8], strides = [1, 1, 1]} : vector<1x16x32xbf16> to vector<1x16x8xbf16>
    %cst_30 = arith.constant dense<0.000000e+00> : vector<1x16x16xf32>
    %84 = tpu.matmul %82, %83, %cst_30 {dimension_numbers = #tpu.dot_dimension_numbers<[2], [2], [1], [1], [0, 0, 0, 1, 1, 1], [0], [0]>} : vector<1x16x8xbf16>, vector<1x16x8xbf16>, vector<1x16x16xf32> -> vector<1x16x16xf32>
    %cst_31 = arith.constant dense<0xFF800000> : vector<1x16xf32>
    %85 = vector.multi_reduction <maximumf>, %84, %cst_31 [2] : vector<1x16x16xf32> to vector<1x16xf32>
    %86 = vector.shape_cast %85 : vector<1x16xf32> to vector<1x16x1xf32>
    %87 = vector.broadcast %86 : vector<1x16x1xf32> to vector<1x16x16xf32>
    %88 = arith.subf %84, %87 : vector<1x16x16xf32>
    %89 = math.exp %88 : vector<1x16x16xf32>
    %cst_32 = arith.constant dense<0.000000e+00> : vector<1x16xf32>
    %90 = vector.multi_reduction <add>, %89, %cst_32 [2] : vector<1x16x16xf32> to vector<1x16xf32>
    %91 = vector.shape_cast %90 : vector<1x16xf32> to vector<1x16x1xf32>
    %92 = tpu.reciprocal %91 {approx = true} : vector<1x16x1xf32> -> vector<1x16x1xf32>
    %93 = vector.broadcast %92 : vector<1x16x1xf32> to vector<1x16x16xf32>
    %94 = arith.mulf %89, %93 : vector<1x16x16xf32>
    %95 = arith.truncf %94 : vector<1x16x16xf32> to vector<1x16x16xbf16>
    %96 = vector.extract_strided_slice %30 {offsets = [0, 0, 24], sizes = [1, 16, 8], strides = [1, 1, 1]} : vector<1x16x32xbf16> to vector<1x16x8xbf16>
    %cst_33 = arith.constant dense<0.000000e+00> : vector<1x16x8xf32>
    %97 = tpu.matmul %95, %96, %cst_33 {dimension_numbers = #tpu.dot_dimension_numbers<[2], [1], [1], [2], [0, 0, 0, 1, 1, 2], [0], [0]>} : vector<1x16x16xbf16>, vector<1x16x8xbf16>, vector<1x16x8xf32> -> vector<1x16x8xf32>
    %98 = arith.truncf %97 : vector<1x16x8xf32> to vector<1x16x8xbf16>
    %99 = tpu.concatenate %47, %64, %81, %98 in 2 : vector<1x16x8xbf16>, vector<1x16x8xbf16>, vector<1x16x8xbf16>, vector<1x16x8xbf16> -> vector<1x16x32xbf16>
    %100 = vector.shape_cast %99 : vector<1x16x32xbf16> to vector<16x32xbf16>
    %c0_34 = arith.constant 0 : index
    %c0_35 = arith.constant 0 : index
    %101 = vector.load %arg9[%c0_34, %c0_35] : memref<32x32xbf16, #tpu.memory_space<vmem>>, vector<32x32xbf16>
    %cst_36 = arith.constant dense<0.000000e+00> : vector<16x32xf32>
    %102 = tpu.matmul %100, %101, %cst_36 {dimension_numbers = #tpu.dot_dimension_numbers<[1], [0], [0], [1], [0, 0, 1, 1], [], []>} : vector<16x32xbf16>, vector<32x32xbf16>, vector<16x32xf32> -> vector<16x32xf32>
    %c0_37 = arith.constant 0 : index
    %c0_38 = arith.constant 0 : index
    %103 = vector.load %arg10[%c0_37, %c0_38] : memref<1x32xf32, #tpu.memory_space<vmem>>, vector<1x32xf32>
    %104 = vector.broadcast %103 : vector<1x32xf32> to vector<16x32xf32>
    %105 = arith.addf %102, %104 : vector<16x32xf32>
    %106 = vector.shape_cast %105 : vector<16x32xf32> to vector<1x16x32xf32>
    %c0_39 = arith.constant 0 : index
    %c0_40 = arith.constant 0 : index
    %c0_41 = arith.constant 0 : index
    %107 = vector.load %arg11[%c0_39, %c0_40, %c0_41] : memref<1x16x32xf32, #tpu.memory_space<vmem>>, vector<1x16x32xf32>
    tpu.vector_store %arg11[%c0_39, %c0_40, %c0_41], %106 {strides = array<i32>} : memref<1x16x32xf32, #tpu.memory_space<vmem>>, vector<1x16x32xf32>,
    return
  }
  func.func @transform_0(%arg0: i32) -> (i32, i32, i32) {
    %c0_i32 = arith.constant 0 : i32
    %c0_i32_0 = arith.constant 0 : i32
    %c0_i32_1 = arith.constant 0 : i32
    return %arg0, %c0_i32, %c0_i32_0 : i32, i32, i32
  }
  func.func @transform_1(%arg0: i32) -> (i32, i32, i32) {
    %c0_i32 = arith.constant 0 : i32
    %c0_i32_0 = arith.constant 0 : i32
    %c0_i32_1 = arith.constant 0 : i32
    return %arg0, %c0_i32, %c0_i32_0 : i32, i32, i32
  }
  func.func @transform_2(%arg0: i32) -> (i32, i32) {
    %c0_i32 = arith.constant 0 : i32
    %c0_i32_0 = arith.constant 0 : i32
    %c0_i32_1 = arith.constant 0 : i32
    return %c0_i32, %c0_i32_0 : i32, i32
  }
  func.func @transform_3(%arg0: i32) -> (i32, i32) {
    %c0_i32 = arith.constant 0 : i32
    %c0_i32_0 = arith.constant 0 : i32
    %c0_i32_1 = arith.constant 0 : i32
    return %c0_i32, %c0_i32_0 : i32, i32
  }
  func.func @transform_4(%arg0: i32) -> (i32, i32) {
    %c0_i32 = arith.constant 0 : i32
    %c0_i32_0 = arith.constant 0 : i32
    %c0_i32_1 = arith.constant 0 : i32
    return %c0_i32, %c0_i32_0 : i32, i32
  }
  func.func @transform_5(%arg0: i32) -> (i32, i32) {
    %c0_i32 = arith.constant 0 : i32
    %c0_i32_0 = arith.constant 0 : i32
    %c0_i32_1 = arith.constant 0 : i32
    return %c0_i32, %c0_i32_0 : i32, i32
  }
  func.func @transform_6(%arg0: i32) -> (i32, i32) {
    %c0_i32 = arith.constant 0 : i32
    %c0_i32_0 = arith.constant 0 : i32
    %c0_i32_1 = arith.constant 0 : i32
    return %c0_i32, %c0_i32_0 : i32, i32
  }
  func.func @transform_7(%arg0: i32) -> (i32, i32) {
    %c0_i32 = arith.constant 0 : i32
    %c0_i32_0 = arith.constant 0 : i32
    %c0_i32_1 = arith.constant 0 : i32
    return %c0_i32, %c0_i32_0 : i32, i32
  }
  func.func @transform_8(%arg0: i32) -> (i32, i32) {
    %c0_i32 = arith.constant 0 : i32
    %c0_i32_0 = arith.constant 0 : i32
    %c0_i32_1 = arith.constant 0 : i32
    return %c0_i32, %c0_i32_0 : i32, i32
  }
  func.func @transform_9(%arg0: i32) -> (i32, i32) {
    %c0_i32 = arith.constant 0 : i32
    %c0_i32_0 = arith.constant 0 : i32
    %c0_i32_1 = arith.constant 0 : i32
    return %c0_i32, %c0_i32_0 : i32, i32
  }
  func.func @transform_10(%arg0: i32) -> (i32, i32, i32) {
    %c0_i32 = arith.constant 0 : i32
    %c0_i32_0 = arith.constant 0 : i32
    %c0_i32_1 = arith.constant 0 : i32
    return %arg0, %c0_i32, %c0_i32_0 : i32, i32, i32
  }
}

</mosaic_0001>

<llo_original>
// kernel: tpu_custom_call.1
$region0: #{tpu_custom_call.1}
  #allocation0 [shape = 'u32[]', space=smem, size = 0x4, offset = 0x4, fixed_abs, tag = 'smem constant byte address 0x4 - core index']
  #allocation1 [shape = 'u32[144,128]{1,0:T(1,128)}', space=vmem, size = 0x12000, scoped, tag = 'internal scratch']
  %s0 = inlined_call_operand.hbm [shape: bf16[2,16,32], index: 0, kind: input, shape index: {}]
  %s1 = inlined_call_operand.hbm [shape: bf16[2,16,32], index: 1, kind: input, shape index: {}]
  %s2 = inlined_call_operand.hbm [shape: f32[16,32], index: 2, kind: input, shape index: {}]
  %s3 = inlined_call_operand.hbm [shape: f32[16,32], index: 3, kind: input, shape index: {}]
  %s4 = inlined_call_operand.hbm [shape: bf16[32,32], index: 4, kind: input, shape index: {}]
  %s5 = inlined_call_operand.vmem [shape: f32[1,32], index: 5, kind: input, shape index: {}]
  %s6 = inlined_call_operand.vmem [shape: bf16[32,64], index: 6, kind: input, shape index: {}]
  %s7 = inlined_call_operand.vmem [shape: f32[1,64], index: 7, kind: input, shape index: {}]
  %s8 = inlined_call_operand.hbm [shape: bf16[32,32], index: 8, kind: input, shape index: {}]
  %s9 = inlined_call_operand.vmem [shape: f32[1,32], index: 9, kind: input, shape index: {}]
  %s10 = inlined_call_operand.hbm [shape: f32[2,16,32], index: 10, kind: output, shape index: {}]
  %s11 = sld [smem:[#allocation0]]
  $region97: #{tpu_custom_call.1} parent=0
    _
  %s13 = ssub.s32 1, %s11
  %s14 = scalar_select 0, %s13, %s11
  $region1: #{tpu_custom_call.1} parent=0
    #allocation2 [shape = 'u8[8192]{0}', space=vmem, size = 0x2000, scoped, tag = 'input window, operand 0']
    #allocation3 [shape = 's32[2]{0}', space=sflag, size = 0x8, scoped, tag = 'scoped memory for tpu_custom_call.1']
    #allocation4 [shape = 's32[2]{0}', space=sflag, size = 0x8, scoped, tag = 'scoped memory for tpu_custom_call.1']
    #allocation5 [shape = 'u8[8192]{0}', space=vmem, size = 0x2000, scoped, tag = 'input window, operand 1']
    #allocation6 [shape = 's32[2]{0}', space=sflag, size = 0x8, scoped, tag = 'scoped memory for tpu_custom_call.1']
    #allocation7 [shape = 'u8[8192]{0}', space=vmem, size = 0x2000, scoped, tag = 'input window, operand 2, single buffered']
    #allocation8 [shape = 'u8[8192]{0}', space=vmem, size = 0x2000, scoped, tag = 'input window, operand 3, single buffered']
    #allocation9 [shape = 's32[1]{0}', space=sflag, size = 0x4, scoped, tag = 'scoped memory for tpu_custom_call.1']
    #allocation10 [shape = 'u8[8192]{0}', space=vmem, size = 0x2000, scoped, tag = 'input window, operand 4, single buffered']
    #allocation11 [shape = 'u8[8192]{0}', space=vmem, size = 0x2000, scoped, tag = 'input window, operand 8, single buffered']
    #allocation12 [shape = 's32[1]{0}', space=sflag, size = 0x4, scoped, tag = 'scoped memory for tpu_custom_call.1']
    #allocation13 [shape = 'u8[16384]{0}', space=vmem, size = 0x4000, scoped, tag = 'output window, operand 0']
    %15 = vsyncpa [#allocation3], 0
    %s16 = scalar_lea.sflag [#allocation3], 1
    %17 = vsyncpa %s16, 0
    %18 = vsyncpa [#allocation6], 0
    %s19 = scalar_lea.sflag [#allocation6], 1
    %20 = vsyncpa %s19, 0
    %21 = vsyncpa [#allocation9], 0
    %22 = vsyncpa [#allocation12], 0
    %23 = vsyncpa [#allocation4], 0
    %s24 = scalar_lea.sflag [#allocation4], 1
    %25 = vsyncpa %s24, 0
    loop: start=0, step=1, limit=4
    $region2: #{tpu_custom_call.1} parent=1 // loop_pre_header
      _
    $region3: #{tpu_custom_call.1} parent=1 // loop_header
      %s27 = sphi 0, %s31
      %p28 = scmp.ge.s32.totalorder %s27, 4
      %s37 = sphi 0, %s39
      %s40 = sphi 0, %s37
      %s41 = sphi 0, %s40
      %s57 = sphi 0, %s41
      %s63 = sphi 0, %s65
      %s66 = sphi 0, %s63
      %s67 = sphi 0, %s66
      %s83 = sphi 0, %s67
      %s87 = sphi 0, %s87
      %s89 = sphi 0, %s87
      %s90 = sphi 0, %s89
      %s104 = sphi 0, %s90
      %s108 = sphi 0, %s108
      %s110 = sphi 0, %s108
      %s111 = sphi 0, %s110
      %s125 = sphi 0, %s111
      %s129 = sphi 0, %s129
      %s131 = sphi 0, %s129
      %s132 = sphi 0, %s131
      %s146 = sphi 0, %s132
      %s150 = sphi 0, %s150
      %s152 = sphi 0, %s150
      %s153 = sphi 0, %s152
      %s167 = sphi 0, %s153
      %s171 = sphi 0, %s171
      %s173 = sphi 0, %s171
      %s174 = sphi 0, %s173
      %s188 = sphi 0, %s174
      %s192 = sphi 0, %s192
      %s194 = sphi 0, %s192
      %s195 = sphi 0, %s194
      %s209 = sphi 0, %s195
      %s213 = sphi 0, %s213
      %s215 = sphi 0, %s213
      %s216 = sphi 0, %s215
      %s230 = sphi 0, %s216
      %s234 = sphi 0, %s234
      %s236 = sphi 0, %s234
      %s237 = sphi 0, %s236
      %s251 = sphi 0, %s237
      %s257 = sphi 0, %s259
      %s260 = sphi 0, %s257
      %s261 = sphi 0, %s260
      %s277 = sphi 0, %s261
    $region4: #{tpu_custom_call.1} parent=1 // loop_header_branch
      %30 = sbr.rel (%p28) target = $region8
    $region5: #{tpu_custom_call.1} parent=1 // loop_body
      %s32 = ssub.s32 %s27, 1
      %s33 = ssub.s32 %s27, 2
      %s34 = sadd.s32 %s27, 1
      %s35 = ssub.s32 %s27, %s34
      %p36 = scmp.eq.s32.totalorder %s35, 0
      %s38 = sadd.s32 %s37, 1
      %s39 = scalar_select %p36, %s37, %s38
      %p42 = pneg %p36
      %p43 = scmp.eq.s32.totalorder %s27, 1
      %p44 = por %p42, %p43
      %p45 = scmp.ne.s32.totalorder %s37, %s40
      %p46 = scmp.eq.s32.totalorder %s27, 0
      %p47 = por %p45, %p46
      %p48 = scmp.ne.s32.totalorder %s37, %s40
      %p49 = scmp.eq.s32.totalorder %s32, 1
      %p50 = por %p48, %p49
      %p51 = scmp.ne.s32.totalorder %s40, %s41
      %p52 = scmp.eq.s32.totalorder %s32, 0
      %p53 = por %p51, %p52
      %p54 = scmp.ne.s32.totalorder %s40, %s41
      %p55 = scmp.eq.s32.totalorder %s33, 1
      %p56 = por %p54, %p55
      %p58 = scmp.ne.s32.totalorder %s41, %s57
      %p59 = scmp.eq.s32.totalorder %s33, 0
      %p60 = por %p58, %p59
      %s61 = ssub.s32 %s27, %s34
      %p62 = scmp.eq.s32.totalorder %s61, 0
      %s64 = sadd.s32 %s63, 1
      %s65 = scalar_select %p62, %s63, %s64
      %p68 = pneg %p62
      %p69 = scmp.eq.s32.totalorder %s27, 1
      %p70 = por %p68, %p69
      %p71 = scmp.ne.s32.totalorder %s63, %s66
      %p72 = scmp.eq.s32.totalorder %s27, 0
      %p73 = por %p71, %p72
      %p74 = scmp.ne.s32.totalorder %s63, %s66
      %p75 = scmp.eq.s32.totalorder %s32, 1
      %p76 = por %p74, %p75
      %p77 = scmp.ne.s32.totalorder %s66, %s67
      %p78 = scmp.eq.s32.totalorder %s32, 0
      %p79 = por %p77, %p78
      %p80 = scmp.ne.s32.totalorder %s66, %s67
      %p81 = scmp.eq.s32.totalorder %s33, 1
      %p82 = por %p80, %p81
      %p84 = scmp.ne.s32.totalorder %s67, %s83
      %p85 = scmp.eq.s32.totalorder %s33, 0
      %p86 = por %p84, %p85
      %s88 = sadd.s32 %s87, 1
      %p91 = scmp.eq.s32.totalorder %s27, 1
      %p92 = scmp.ne.s32.totalorder %s87, %s89
      %p93 = scmp.eq.s32.totalorder %s27, 0
      %p94 = por %p92, %p93
      %p95 = scmp.ne.s32.totalorder %s87, %s89
      %p96 = scmp.eq.s32.totalorder %s32, 1
      %p97 = por %p95, %p96
      %p98 = scmp.ne.s32.totalorder %s89, %s90
      %p99 = scmp.eq.s32.totalorder %s32, 0
      %p100 = por %p98, %p99
      %p101 = scmp.ne.s32.totalorder %s89, %s90
      %p102 = scmp.eq.s32.totalorder %s33, 1
      %p103 = por %p101, %p102
      %p105 = scmp.ne.s32.totalorder %s90, %s104
      %p106 = scmp.eq.s32.totalorder %s33, 0
      %p107 = por %p105, %p106
      %s109 = sadd.s32 %s108, 1
      %p112 = scmp.eq.s32.totalorder %s27, 1
      %p113 = scmp.ne.s32.totalorder %s108, %s110
      %p114 = scmp.eq.s32.totalorder %s27, 0
      %p115 = por %p113, %p114
      %p116 = scmp.ne.s32.totalorder %s108, %s110
      %p117 = scmp.eq.s32.totalorder %s32, 1
      %p118 = por %p116, %p117
      %p119 = scmp.ne.s32.totalorder %s110, %s111
      %p120 = scmp.eq.s32.totalorder %s32, 0
      %p121 = por %p119, %p120
      %p122 = scmp.ne.s32.totalorder %s110, %s111
      %p123 = scmp.eq.s32.totalorder %s33, 1
      %p124 = por %p122, %p123
      %p126 = scmp.ne.s32.totalorder %s111, %s125
      %p127 = scmp.eq.s32.totalorder %s33, 0
      %p128 = por %p126, %p127
      %s130 = sadd.s32 %s129, 1
      %p133 = scmp.eq.s32.totalorder %s27, 1
      %p134 = scmp.ne.s32.totalorder %s129, %s131
      %p135 = scmp.eq.s32.totalorder %s27, 0
      %p136 = por %p134, %p135
      %p137 = scmp.ne.s32.totalorder %s129, %s131
      %p138 = scmp.eq.s32.totalorder %s32, 1
      %p139 = por %p137, %p138
      %p140 = scmp.ne.s32.totalorder %s131, %s132
      %p141 = scmp.eq.s32.totalorder %s32, 0
      %p142 = por %p140, %p141
      %p143 = scmp.ne.s32.totalorder %s131, %s132
      %p144 = scmp.eq.s32.totalorder %s33, 1
      %p145 = por %p143, %p144
      %p147 = scmp.ne.s32.totalorder %s132, %s146
      %p148 = scmp.eq.s32.totalorder %s33, 0
      %p149 = por %p147, %p148
      %s151 = sadd.s32 %s150, 1
      %p154 = scmp.eq.s32.totalorder %s27, 1
      %p155 = scmp.ne.s32.totalorder %s150, %s152
      %p156 = scmp.eq.s32.totalorder %s27, 0
      %p157 = por %p155, %p156
      %p158 = scmp.ne.s32.totalorder %s150, %s152
      %p159 = scmp.eq.s32.totalorder %s32, 1
      %p160 = por %p158, %p159
      %p161 = scmp.ne.s32.totalorder %s152, %s153
      %p162 = scmp.eq.s32.totalorder %s32, 0
      %p163 = por %p161, %p162
      %p164 = scmp.ne.s32.totalorder %s152, %s153
      %p165 = scmp.eq.s32.totalorder %s33, 1
      %p166 = por %p164, %p165
      %p168 = scmp.ne.s32.totalorder %s153, %s167
      %p169 = scmp.eq.s32.totalorder %s33, 0
      %p170 = por %p168, %p169
      %s172 = sadd.s32 %s171, 1
      %p175 = scmp.eq.s32.totalorder %s27, 1
      %p176 = scmp.ne.s32.totalorder %s171, %s173
      %p177 = scmp.eq.s32.totalorder %s27, 0
      %p178 = por %p176, %p177
      %p179 = scmp.ne.s32.totalorder %s171, %s173
      %p180 = scmp.eq.s32.totalorder %s32, 1
      %p181 = por %p179, %p180
      %p182 = scmp.ne.s32.totalorder %s173, %s174
      %p183 = scmp.eq.s32.totalorder %s32, 0
      %p184 = por %p182, %p183
      %p185 = scmp.ne.s32.totalorder %s173, %s174
      %p186 = scmp.eq.s32.totalorder %s33, 1
      %p187 = por %p185, %p186
      %p189 = scmp.ne.s32.totalorder %s174, %s188
      %p190 = scmp.eq.s32.totalorder %s33, 0
      %p191 = por %p189, %p190
      %s193 = sadd.s32 %s192, 1
      %p196 = scmp.eq.s32.totalorder %s27, 1
      %p197 = scmp.ne.s32.totalorder %s192, %s194
      %p198 = scmp.eq.s32.totalorder %s27, 0
      %p199 = por %p197, %p198
      %p200 = scmp.ne.s32.totalorder %s192, %s194
      %p201 = scmp.eq.s32.totalorder %s32, 1
      %p202 = por %p200, %p201
      %p203 = scmp.ne.s32.totalorder %s194, %s195
      %p204 = scmp.eq.s32.totalorder %s32, 0
      %p205 = por %p203, %p204
      %p206 = scmp.ne.s32.totalorder %s194, %s195
      %p207 = scmp.eq.s32.totalorder %s33, 1
      %p208 = por %p206, %p207
      %p210 = scmp.ne.s32.totalorder %s195, %s209
      %p211 = scmp.eq.s32.totalorder %s33, 0
      %p212 = por %p210, %p211
      %s214 = sadd.s32 %s213, 1
      %p217 = scmp.eq.s32.totalorder %s27, 1
      %p218 = scmp.ne.s32.totalorder %s213, %s215
      %p219 = scmp.eq.s32.totalorder %s27, 0
      %p220 = por %p218, %p219
      %p221 = scmp.ne.s32.totalorder %s213, %s215
      %p222 = scmp.eq.s32.totalorder %s32, 1
      %p223 = por %p221, %p222
      %p224 = scmp.ne.s32.totalorder %s215, %s216
      %p225 = scmp.eq.s32.totalorder %s32, 0
      %p226 = por %p224, %p225
      %p227 = scmp.ne.s32.totalorder %s215, %s216
      %p228 = scmp.eq.s32.totalorder %s33, 1
      %p229 = por %p227, %p228
      %p231 = scmp.ne.s32.totalorder %s216, %s230
      %p232 = scmp.eq.s32.totalorder %s33, 0
      %p233 = por %p231, %p232
      %s235 = sadd.s32 %s234, 1
      %p238 = scmp.eq.s32.totalorder %s27, 1
      %p239 = scmp.ne.s32.totalorder %s234, %s236
      %p240 = scmp.eq.s32.totalorder %s27, 0
      %p241 = por %p239, %p240
      %p242 = scmp.ne.s32.totalorder %s234, %s236
      %p243 = scmp.eq.s32.totalorder %s32, 1
      %p244 = por %p242, %p243
      %p245 = scmp.ne.s32.totalorder %s236, %s237
      %p246 = scmp.eq.s32.totalorder %s32, 0
      %p247 = por %p245, %p246
      %p248 = scmp.ne.s32.totalorder %s236, %s237
      %p249 = scmp.eq.s32.totalorder %s33, 1
      %p250 = por %p248, %p249
      %p252 = scmp.ne.s32.totalorder %s237, %s251
      %p253 = scmp.eq.s32.totalorder %s33, 0
      %p254 = por %p252, %p253
      %s255 = ssub.s32 %s27, %s34
      %p256 = scmp.eq.s32.totalorder %s255, 0
      %s258 = sadd.s32 %s257, 1
      %s259 = scalar_select %p256, %s257, %s258
      %p262 = pneg %p256
      %p263 = scmp.eq.s32.totalorder %s27, 1
      %p264 = por %p262, %p263
      %p265 = scmp.ne.s32.totalorder %s257, %s260
      %p266 = scmp.eq.s32.totalorder %s27, 0
      %p267 = por %p265, %p266
      %p268 = scmp.ne.s32.totalorder %s257, %s260
      %p269 = scmp.eq.s32.totalorder %s32, 1
      %p270 = por %p268, %p269
      %p271 = scmp.ne.s32.totalorder %s260, %s261
      %p272 = scmp.eq.s32.totalorder %s32, 0
      %p273 = por %p271, %p272
      %p274 = scmp.ne.s32.totalorder %s260, %s261
      %p275 = scmp.eq.s32.totalorder %s33, 1
      %p276 = por %p274, %p275
      %p278 = scmp.ne.s32.totalorder %s261, %s277
      %p279 = scmp.eq.s32.totalorder %s33, 0
      %p280 = por %p278, %p279
      %p281 = scmp.le.s32.totalorder 1, %s27
      %p282 = scmp.lt.s32.totalorder %s27, 3
      %p283 = pnand %p281, %p282
      %p284 = pneg %p283
      // Predicated region
      $region9: #{tpu_custom_call.1} parent=5 // pred_check
        _
      $region10: #{tpu_custom_call.1} parent=5 // pred_check_branch
        %286 = sbr.rel (%p283) target = $region12
      $region11: #{tpu_custom_call.1} parent=5 // pred_region
        %s287 = ssub.s32 %s27, 1
        // Predicated region
        $region13: #{tpu_custom_call.1} parent=11 // pred_check
          %p288 = pneg %p100
        $region14: #{tpu_custom_call.1} parent=11 // pred_check_branch
          %290 = sbr.rel (%p288) target = $region16
        $region15: #{tpu_custom_call.1} parent=11 // pred_region
          %s292 = ssub.s32 256, 256
          %293 = vsyncadd [#allocation6], %s292
          %s294 = sshll.u32 [#allocation7], 4
          %s295 = int_to_ptr.vmem [resolvable:$true] %s294
          %300 = dma.hbm_to_vmem [thread:$0]  %s2, 256, %s295, [#allocation6], 128, 128, 8
        $region16: #{tpu_custom_call.1} parent=11 // pred_fallthru
          _
        // Predicated region
        $region17: #{tpu_custom_call.1} parent=11 // pred_check
          %p301 = pneg %p121
        $region18: #{tpu_custom_call.1} parent=11 // pred_check_branch
          %303 = sbr.rel (%p301) target = $region20
        $region19: #{tpu_custom_call.1} parent=11 // pred_region
          %s305 = ssub.s32 256, 256
          %306 = vsyncadd [#allocation9], %s305
          %s307 = sshll.u32 [#allocation8], 4
          %s308 = int_to_ptr.vmem [resolvable:$true] %s307
          %313 = dma.hbm_to_vmem [thread:$0]  %s3, 256, %s308, [#allocation9], 128, 128, 8
        $region20: #{tpu_custom_call.1} parent=11 // pred_fallthru
          _
        // Predicated region
        $region21: #{tpu_custom_call.1} parent=11 // pred_check
          %p314 = pneg %p142
        $region22: #{tpu_custom_call.1} parent=11 // pred_check_branch
          %316 = sbr.rel (%p314) target = $region24
        $region23: #{tpu_custom_call.1} parent=11 // pred_region
          %s318 = ssub.s32 256, 256
          %319 = vsyncadd [#allocation9], %s318
          %s320 = sshll.u32 [#allocation10], 4
          %s321 = int_to_ptr.vmem [resolvable:$true] %s320
          %326 = dma.hbm_to_vmem [thread:$0]  %s4, 256, %s321, [#allocation9], 64, 64, 4
        $region24: #{tpu_custom_call.1} parent=11 // pred_fallthru
          _
        // Predicated region
        $region25: #{tpu_custom_call.1} parent=11 // pred_check
          %p327 = pneg %p163
        $region26: #{tpu_custom_call.1} parent=11 // pred_check_branch
          %329 = sbr.rel (%p327) target = $region28
        $region27: #{tpu_custom_call.1} parent=11 // pred_region
          _
        $region28: #{tpu_custom_call.1} parent=11 // pred_fallthru
          _
        // Predicated region
        $region29: #{tpu_custom_call.1} parent=11 // pred_check
          %p330 = pneg %p184
        $region30: #{tpu_custom_call.1} parent=11 // pred_check_branch
          %332 = sbr.rel (%p330) target = $region32
        $region31: #{tpu_custom_call.1} parent=11 // pred_region
          _
        $region32: #{tpu_custom_call.1} parent=11 // pred_fallthru
          _
        // Predicated region
        $region33: #{tpu_custom_call.1} parent=11 // pred_check
          %p333 = pneg %p205
        $region34: #{tpu_custom_call.1} parent=11 // pred_check_branch
          %335 = sbr.rel (%p333) target = $region36
        $region35: #{tpu_custom_call.1} parent=11 // pred_region
          _
        $region36: #{tpu_custom_call.1} parent=11 // pred_fallthru
          _
        // Predicated region
        $region37: #{tpu_custom_call.1} parent=11 // pred_check
          %p336 = pneg %p226
        $region38: #{tpu_custom_call.1} parent=11 // pred_check_branch
          %338 = sbr.rel (%p336) target = $region40
        $region39: #{tpu_custom_call.1} parent=11 // pred_region
          %s340 = ssub.s32 256, 256
          %341 = vsyncadd [#allocation12], %s340
          %s342 = sshll.u32 [#allocation11], 4
          %s343 = int_to_ptr.vmem [resolvable:$true] %s342
          %348 = dma.hbm_to_vmem [thread:$0]  %s8, 256, %s343, [#allocation12], 64, 64, 4
        $region40: #{tpu_custom_call.1} parent=11 // pred_fallthru
          _
        // Predicated region
        $region41: #{tpu_custom_call.1} parent=11 // pred_check
          %p349 = pneg %p247
        $region42: #{tpu_custom_call.1} parent=11 // pred_check_branch
          %351 = sbr.rel (%p349) target = $region44
        $region43: #{tpu_custom_call.1} parent=11 // pred_region
          _
        $region44: #{tpu_custom_call.1} parent=11 // pred_fallthru
          _
      $region12: #{tpu_custom_call.1} parent=5 // pred_fallthru
        _
      %p352 = scmp.lt.s32.totalorder %s27, 2
      // Predicated region
      $region45: #{tpu_custom_call.1} parent=5 // pred_check
        %p353 = pneg %p352
      $region46: #{tpu_custom_call.1} parent=5 // pred_check_branch
        %355 = sbr.rel (%p353) target = $region48
      $region47: #{tpu_custom_call.1} parent=5 // pred_region
        // Predicated region
        $region49: #{tpu_custom_call.1} parent=47 // pred_check
          %p356 = pneg %p47
        $region50: #{tpu_custom_call.1} parent=47 // pred_check_branch
          %358 = sbr.rel (%p356) target = $region52
        $region51: #{tpu_custom_call.1} parent=47 // pred_region
          %s359 = sand.u32 %s37, 1
          %s360 = scalar_lea.sflag [#allocation3], %s359
          %s361 = sand.u32 %s37, 1
          %s362 = smul.addr %s361, 8
          %s363 = scalar_lea.vmem [#allocation2], %s362
          %s365 = ssub.s32 128, 128
          %366 = vsyncadd %s360, %s365
          %s367 = smul.addr %s27, 2
          %s368 = smul.addr %s367, 64
          %s369 = scalar_lea.hbm %s0, %s368
          %s370 = sshll.u32 %s363, 4
          %s371 = int_to_ptr.vmem [resolvable:$true] %s370
          %376 = dma.hbm_to_vmem [thread:$0]  %s369, 128, %s371, %s360, 64, 64, 4
        $region52: #{tpu_custom_call.1} parent=47 // pred_fallthru
          _
        // Predicated region
        $region53: #{tpu_custom_call.1} parent=47 // pred_check
          %p377 = pneg %p73
        $region54: #{tpu_custom_call.1} parent=47 // pred_check_branch
          %379 = sbr.rel (%p377) target = $region56
        $region55: #{tpu_custom_call.1} parent=47 // pred_region
          %s380 = sand.u32 %s27, 1
          %s381 = scalar_lea.sflag [#allocation6], %s380
          %s382 = sand.u32 %s63, 1
          %s383 = smul.addr %s382, 8
          %s384 = scalar_lea.vmem [#allocation5], %s383
          %s386 = ssub.s32 128, 128
          %387 = vsyncadd %s381, %s386
          %s388 = smul.addr %s27, 2
          %s389 = smul.addr %s388, 64
          %s390 = scalar_lea.hbm %s1, %s389
          %s391 = sshll.u32 %s384, 4
          %s392 = int_to_ptr.vmem [resolvable:$true] %s391
          %397 = dma.hbm_to_vmem [thread:$0]  %s390, 128, %s392, %s381, 64, 64, 4
        $region56: #{tpu_custom_call.1} parent=47 // pred_fallthru
          _
      $region48: #{tpu_custom_call.1} parent=5 // pred_fallthru
        _
      %p398 = scmp.le.s32.totalorder 1, %s27
      %p399 = scmp.lt.s32.totalorder %s27, 3
      %p400 = pnand %p398, %p399
      %p401 = pneg %p400
      // Predicated region
      $region57: #{tpu_custom_call.1} parent=5 // pred_check
        _
      $region58: #{tpu_custom_call.1} parent=5 // pred_check_branch
        %403 = sbr.rel (%p400) target = $region60
      $region59: #{tpu_custom_call.1} parent=5 // pred_region
        %s404 = ssub.s32 %s27, 1
        %s405 = sand.u32 %s40, 1
        %s406 = scalar_lea.sflag [#allocation3], %s405
        %s407 = sand.u32 %s40, 1
        %s408 = smul.addr %s407, 8
        %s409 = scalar_lea.vmem [#allocation2], %s408
        // Predicated region
        $region61: #{tpu_custom_call.1} parent=59 // pred_check
          %p410 = pneg %p53
        $region62: #{tpu_custom_call.1} parent=59 // pred_check_branch
          %412 = sbr.rel (%p410) target = $region64
        $region63: #{tpu_custom_call.1} parent=59 // pred_region
          %413 = dma.done %s406, 128
        $region64: #{tpu_custom_call.1} parent=59 // pred_fallthru
          _
        %s414 = sand.u32 %s32, 1
        %s415 = scalar_lea.sflag [#allocation6], %s414
        %s416 = sand.u32 %s66, 1
        %s417 = smul.addr %s416, 8
        %s418 = scalar_lea.vmem [#allocation5], %s417
        // Predicated region
        $region65: #{tpu_custom_call.1} parent=59 // pred_check
          %p419 = pneg %p79
        $region66: #{tpu_custom_call.1} parent=59 // pred_check_branch
          %421 = sbr.rel (%p419) target = $region68
        $region67: #{tpu_custom_call.1} parent=59 // pred_region
          %422 = dma.done %s415, 128
        $region68: #{tpu_custom_call.1} parent=59 // pred_fallthru
          _
        // Predicated region
        $region69: #{tpu_custom_call.1} parent=59 // pred_check
          %p423 = pneg %p100
        $region70: #{tpu_custom_call.1} parent=59 // pred_check_branch
          %425 = sbr.rel (%p423) target = $region72
        $region71: #{tpu_custom_call.1} parent=59 // pred_region
          %426 = dma.done [#allocation6], 256
        $region72: #{tpu_custom_call.1} parent=59 // pred_fallthru
          _
        // Predicated region
        $region73: #{tpu_custom_call.1} parent=59 // pred_check
          %p427 = pneg %p121
        $region74: #{tpu_custom_call.1} parent=59 // pred_check_branch
          %429 = sbr.rel (%p427) target = $region76
        $region75: #{tpu_custom_call.1} parent=59 // pred_region
          %430 = dma.done [#allocation9], 256
        $region76: #{tpu_custom_call.1} parent=59 // pred_fallthru
          _
        // Predicated region
        $region77: #{tpu_custom_call.1} parent=59 // pred_check
          %p431 = pneg %p142
        $region78: #{tpu_custom_call.1} parent=59 // pred_check_branch
          %433 = sbr.rel (%p431) target = $region80
        $region79: #{tpu_custom_call.1} parent=59 // pred_region
          %434 = dma.done [#allocation9], 256
        $region80: #{tpu_custom_call.1} parent=59 // pred_fallthru
          _
        // Predicated region
        $region81: #{tpu_custom_call.1} parent=59 // pred_check
          %p435 = pneg %p226
        $region82: #{tpu_custom_call.1} parent=59 // pred_check_branch
          %437 = sbr.rel (%p435) target = $region84
        $region83: #{tpu_custom_call.1} parent=59 // pred_region
          %438 = dma.done [#allocation12], 256
        $region84: #{tpu_custom_call.1} parent=59 // pred_fallthru
          _
        %s439 = sand.u32 %s40, 1
        %s440 = scalar_lea.sflag [#allocation3], %s439
        %s441 = sand.u32 %s40, 1
        %s442 = smul.addr %s441, 8
        %s443 = scalar_lea.vmem [#allocation2], %s442
        %p444 = pneg %p53
        %p445 = pneg %p50
        %s446 = sand.u32 %s32, 1
        %s447 = scalar_lea.sflag [#allocation6], %s446
        %s448 = sand.u32 %s66, 1
        %s449 = smul.addr %s448, 8
        %s450 = scalar_lea.vmem [#allocation5], %s449
        %p451 = pneg %p79
        %p452 = pneg %p76
        %p453 = pneg %p100
        %p454 = pneg %p97
        %p455 = pneg %p121
        %p456 = pneg %p118
        %p457 = pneg %p142
        %p458 = pneg %p139
        %p459 = pneg %p163
        %p460 = pneg %p160
        %p461 = pneg %p184
        %p462 = pneg %p181
        %p463 = pneg %p205
        %p464 = pneg %p202
        %p465 = pneg %p226
        %p466 = pneg %p223
        %p467 = pneg %p247
        %p468 = pneg %p244
        %p469 = pneg %p273
        %p470 = pneg %p270
        %s471 = sand.u32 %s260, 1
        %s472 = scalar_lea.sflag [#allocation4], %s471
        %s473 = sand.u32 %s260, 1
        %s474 = smul.addr %s473, 16
        %s475 = scalar_lea.vmem [#allocation13], %s474
        %v477 = vld [vmem:[%s409] sm:$0xf]
        %v478 = vld [vmem:[%s409 + $0x4] sm:$0xf]
        %v479 = vunpack.c.l.bf16 %v477
        %v480 = vunpack.c.l.bf16 %v478
        %v481 = vld [vmem:[#allocation7] sm:$0xff]
        %v482 = vld [vmem:[#allocation7 + $0x8] sm:$0xff]
        %v483 = vadd.f32 %v479, %v481
        %v484 = vadd.f32 %v480, %v482
        %v485 = vld [vmem:[%s418] sm:$0xf]
        %v486 = vld [vmem:[%s418 + $0x4] sm:$0xf]
        %v487 = vunpack.c.l.bf16 %v485
        %v488 = vunpack.c.l.bf16 %v486
        %v489 = vld [vmem:[#allocation8] sm:$0xff]
        %v490 = vld [vmem:[#allocation8 + $0x8] sm:$0xff]
        %v491 = vadd.f32 %v487, %v489
        %v492 = vadd.f32 %v488, %v490
        %v493 = vpack.c.bf16 %v484, %v483
        %v494 = vpack.c.bf16 %v492, %v491
        %v495 = vld [vmem:[#allocation10] sm:$0xf]
        %v496 = vld [vmem:[#allocation10 + $0x4] sm:$0xf]
        %v497 = vld [vmem:[#allocation10 + $0x8] sm:$0xf]
        %v498 = vld [vmem:[#allocation10 + $0xc] sm:$0xf]
        %v499 = vld [vmem:[%s5] sm:$0x1]
        %v501 = vlaneseq
        %v502 = vshrl.u32 %v501, 7
        %v503 = vsub.s32 0, %v502
        %v504 = vrot.slane %v499, %v503
        %v510 = vunpack.c.l.b16 %v495
        %v511 = vunpack.c.l.b16 %v496
        %v512 = vunpack.c.l.b16 %v497
        %v513 = vunpack.c.l.b16 %v498
        %v514 = vpack.c.b16 %v511, %v510
        %v515 = vpack.c.b16 %v513, %v512
        %vm518 = vcmask 261120
        %v520 = vsel %vm518, %v493, 0
        %522 = vmatprep.subr.bf16.mxu0 0
        %523 = vmatpush1.bf16.msra.mxu0 %v514
        %524 = vmatprep.subr.bf16.mxu0 0
        %525 = vmatpush1.bf16.msra.mxu0 %v515
        %526 = vmatprep.subr.bf16.mxu0 0
        %527 = vmatpush1.bf16.msra.mxu0 0
        %528 = vmatprep.subr.bf16.mxu0 0
        %529 = vmatpush1.bf16.msra.mxu0 0
        %530 = vmatprep.subr.bf16.mxu0 0
        %531 = vmatpush1.bf16.msra.mxu0 0
        %532 = vmatprep.subr.bf16.mxu0 0
        %533 = vmatpush1.bf16.msra.mxu0 0
        %534 = vmatprep.subr.bf16.mxu0 0
        %535 = vmatpush1.bf16.msra.mxu0 0
        %536 = vmatprep.subr.bf16.mxu0 0
        %537 = vmatpush1.bf16.msra.mxu0 0
        %538 = vmatprep.subr.bf16.mxu0 0
        %539 = vmatpush1.bf16.msra.mxu0 0
        %540 = vmatprep.subr.bf16.mxu0 0
        %541 = vmatpush1.bf16.msra.mxu0 0
        %542 = vmatprep.subr.bf16.mxu0 0
        %543 = vmatpush1.bf16.msra.mxu0 0
        %544 = vmatprep.subr.bf16.mxu0 0
        %545 = vmatpush1.bf16.msra.mxu0 0
        %546 = vmatprep.subr.bf16.mxu0 0
        %547 = vmatpush1.bf16.msra.mxu0 0
        %548 = vmatprep.subr.bf16.mxu0 0
        %549 = vmatpush1.bf16.msra.mxu0 0
        %550 = vmatprep.subr.bf16.mxu0 0
        %551 = vmatpush1.bf16.msra.mxu0 0
        %552 = vmatprep.subr.bf16.mxu0 0
        %553 = vmatpush1.bf16.msra.mxu0 0
        %554 = vmatprep.mubr.bf16.mxu0 0
        %555 = vmatmul.mubr.bf16.gmra.mrb[0].mxu0 %v520
        %v556 = vpop.f32.mrb[0].mxu0
        %v557 = vadd.f32 %v504, %v556
        %v558 = vpop.f32.mrb[0].mxu0
        %v559 = vpop.f32.mrb[0].mxu0
        %v560 = vadd.f32 %v504, %v559
        %v561 = vpop.f32.mrb[0].mxu0
        %562 = vdwg.mxu0
        %v563 = vld [vmem:[%s6] sm:$0xf]
        %v564 = vld [vmem:[%s6 + $0x4] sm:$0xf]
        %v565 = vld [vmem:[%s6 + $0x8] sm:$0xf]
        %v566 = vld [vmem:[%s6 + $0xc] sm:$0xf]
        %v567 = vld [vmem:[%s7] sm:$0x1]
        %v569 = vlaneseq
        %v570 = vshrl.u32 %v569, 7
        %v571 = vsub.s32 0, %v570
        %v572 = vrot.slane %v567, %v571
        %v578 = vunpack.c.l.b16 %v563
        %v579 = vunpack.c.l.b16 %v564
        %v580 = vunpack.c.l.b16 %v565
        %v581 = vunpack.c.l.b16 %v566
        %v582 = vpack.c.b16 %v579, %v578
        %v583 = vpack.c.b16 %v581, %v580
        %v587 = vsel %vm518, %v494, 0
        %589 = vmatprep.subr.bf16.mxu0 0
        %590 = vmatpush1.bf16.msra.mxu0 %v582
        %591 = vmatprep.subr.bf16.mxu0 0
        %592 = vmatpush1.bf16.msra.mxu0 %v583
        %593 = vmatprep.subr.bf16.mxu0 0
        %594 = vmatpush1.bf16.msra.mxu0 0
        %595 = vmatprep.subr.bf16.mxu0 0
        %596 = vmatpush1.bf16.msra.mxu0 0
        %597 = vmatprep.subr.bf16.mxu0 0
        %598 = vmatpush1.bf16.msra.mxu0 0
        %599 = vmatprep.subr.bf16.mxu0 0
        %600 = vmatpush1.bf16.msra.mxu0 0
        %601 = vmatprep.subr.bf16.mxu0 0
        %602 = vmatpush1.bf16.msra.mxu0 0
        %603 = vmatprep.subr.bf16.mxu0 0
        %604 = vmatpush1.bf16.msra.mxu0 0
        %605 = vmatprep.subr.bf16.mxu0 0
        %606 = vmatpush1.bf16.msra.mxu0 0
        %607 = vmatprep.subr.bf16.mxu0 0
        %608 = vmatpush1.bf16.msra.mxu0 0
        %609 = vmatprep.subr.bf16.mxu0 0
        %610 = vmatpush1.bf16.msra.mxu0 0
        %611 = vmatprep.subr.bf16.mxu0 0
        %612 = vmatpush1.bf16.msra.mxu0 0
        %613 = vmatprep.subr.bf16.mxu0 0
        %614 = vmatpush1.bf16.msra.mxu0 0
        %615 = vmatprep.subr.bf16.mxu0 0
        %616 = vmatpush1.bf16.msra.mxu0 0
        %617 = vmatprep.subr.bf16.mxu0 0
        %618 = vmatpush1.bf16.msra.mxu0 0
        %619 = vmatprep.subr.bf16.mxu0 0
        %620 = vmatpush1.bf16.msra.mxu0 0
        %621 = vmatprep.mubr.bf16.mxu0 0
        %622 = vmatmul.mubr.bf16.gmra.mrb[0].mxu0 %v587
        %v623 = vpop.f32.mrb[0].mxu0
        %v624 = vadd.f32 %v572, %v623
        %v625 = vpop.f32.mrb[0].mxu0
        %v626 = vpop.f32.mrb[0].mxu0
        %v627 = vadd.f32 %v572, %v626
        %v628 = vpop.f32.mrb[0].mxu0
        %629 = vdwg.mxu0
        %v630 = vpack.c.bf16 %v560, %v557
        %v631 = vpack.c.bf16 %v627, %v624
        %vm632 = vcmask 64512
        %v634 = vsel %vm632, %v630, 0
        %v637 = vsel %vm632, %v631, 0
        %639 = vmatprep.subr.bf16.mxu0 0
        %640 = vmatpush1.bf16.xpose.msra.mxu0 %v637
        %641 = vmatprep.subr.bf16.mxu0 0
        %642 = vmatpush1.bf16.xpose.msra.mxu0 0
        %643 = vmatprep.subr.bf16.mxu0 0
        %644 = vmatpush1.bf16.xpose.msra.mxu0 0
        %645 = vmatprep.subr.bf16.mxu0 0
        %646 = vmatpush1.bf16.xpose.msra.mxu0 0
        %647 = vmatprep.subr.bf16.mxu0 0
        %648 = vmatpush1.bf16.xpose.msra.mxu0 0
        %649 = vmatprep.subr.bf16.mxu0 0
        %650 = vmatpush1.bf16.xpose.msra.mxu0 0
        %651 = vmatprep.subr.bf16.mxu0 0
        %652 = vmatpush1.bf16.xpose.msra.mxu0 0
        %653 = vmatprep.subr.bf16.mxu0 0
        %654 = vmatpush1.bf16.xpose.msra.mxu0 0
        %655 = vmatprep.subr.bf16.mxu0 0
        %656 = vmatpush1.bf16.xpose.msra.mxu0 0
        %657 = vmatprep.subr.bf16.mxu0 0
        %658 = vmatpush1.bf16.xpose.msra.mxu0 0
        %659 = vmatprep.subr.bf16.mxu0 0
        %660 = vmatpush1.bf16.xpose.msra.mxu0 0
        %661 = vmatprep.subr.bf16.mxu0 0
        %662 = vmatpush1.bf16.xpose.msra.mxu0 0
        %663 = vmatprep.subr.bf16.mxu0 0
        %664 = vmatpush1.bf16.xpose.msra.mxu0 0
        %665 = vmatprep.subr.bf16.mxu0 0
        %666 = vmatpush1.bf16.xpose.msra.mxu0 0
        %667 = vmatprep.subr.bf16.mxu0 0
        %668 = vmatpush1.bf16.xpose.msra.mxu0 0
        %669 = vmatprep.subr.bf16.mxu0 0
        %670 = vmatpush1.bf16.xpose.msra.mxu0 0
        %671 = vmatprep.mubr.bf16.mxu0 0
        %672 = vmatmul.mubr.bf16.gmra.mrb[0].mxu0 %v634
        %v673 = vpop.f32.mrb[0].mxu0
        %v674 = vadd.f32 0.0, %v673
        %v675 = vpop.f32.mrb[0].mxu0
        %v676 = vpop.f32.mrb[0].mxu0
        %v677 = vadd.f32 0.0, %v676
        %v678 = vpop.f32.mrb[0].mxu0
        %679 = vdwg.mxu0
        %vm680 = vcmask 130048
        %v681 = vsel %vm680, %v674, -inf
        %682 = vmax.xlane.f32.xlu0 %v681
        %v683 = vpop.xlane.xlu0 %682
        %v684 = vsel %vm680, %v677, -inf
        %685 = vmax.xlane.f32.xlu0 %v684
        %v686 = vpop.xlane.xlu0 %685
        %v687 = vsub.f32 %v674, %v683
        %v688 = vsub.f32 %v677, %v686
        %v689 = vmul.f32 %v687, 1.442695
        %v690 = vpow.pop %v689
        %v691 = vmul.f32 %v688, 1.442695
        %v692 = vpow.pop %v691
        %v693 = vsel %vm680, %v690, 0.0
        %694 = vadd.xlane.f32.xlu0 %v693
        %v695 = vpop.xlane.xlu0 %694
        %v696 = vsel %vm680, %v692, 0.0
        %697 = vadd.xlane.f32.xlu0 %v696
        %v698 = vpop.xlane.xlu0 %697
        %v699 = vrcp.pop %v695
        %v700 = vrcp.pop %v698
        %v701 = vmul.f32 %v690, %v699
        %v702 = vmul.f32 %v692, %v700
        %v703 = vpack.c.bf16 %v702, %v701
        %705 = vrot.lane.b32.xlu0 %v631, 96
        %v706 = vpop.permute.xlu0 %705
        %v709 = vsel %vm680, %v703, 0
        %711 = vmatprep.subr.bf16.mxu0 0
        %712 = vmatpush1.bf16.msra.mxu0 %v706
        %713 = vmatprep.subr.bf16.mxu0 0
        %714 = vmatpush1.bf16.msra.mxu0 0
        %715 = vmatprep.subr.bf16.mxu0 0
        %716 = vmatpush1.bf16.msra.mxu0 0
        %717 = vmatprep.subr.bf16.mxu0 0
        %718 = vmatpush1.bf16.msra.mxu0 0
        %719 = vmatprep.subr.bf16.mxu0 0
        %720 = vmatpush1.bf16.msra.mxu0 0
        %721 = vmatprep.subr.bf16.mxu0 0
        %722 = vmatpush1.bf16.msra.mxu0 0
        %723 = vmatprep.subr.bf16.mxu0 0
        %724 = vmatpush1.bf16.msra.mxu0 0
        %725 = vmatprep.subr.bf16.mxu0 0
        %726 = vmatpush1.bf16.msra.mxu0 0
        %727 = vmatprep.subr.bf16.mxu0 0
        %728 = vmatpush1.bf16.msra.mxu0 0
        %729 = vmatprep.subr.bf16.mxu0 0
        %730 = vmatpush1.bf16.msra.mxu0 0
        %731 = vmatprep.subr.bf16.mxu0 0
        %732 = vmatpush1.bf16.msra.mxu0 0
        %733 = vmatprep.subr.bf16.mxu0 0
        %734 = vmatpush1.bf16.msra.mxu0 0
        %735 = vmatprep.subr.bf16.mxu0 0
        %736 = vmatpush1.bf16.msra.mxu0 0
        %737 = vmatprep.subr.bf16.mxu0 0
        %738 = vmatpush1.bf16.msra.mxu0 0
        %739 = vmatprep.subr.bf16.mxu0 0
        %740 = vmatpush1.bf16.msra.mxu0 0
        %741 = vmatprep.subr.bf16.mxu0 0
        %742 = vmatpush1.bf16.msra.mxu0 0
        %743 = vmatprep.mubr.bf16.mxu0 0
        %744 = vmatmul.mubr.bf16.gmra.mrb[0].mxu0 %v709
        %v745 = vpop.f32.mrb[0].mxu0
        %v746 = vadd.f32 0.0, %v745
        %v747 = vpop.f32.mrb[0].mxu0
        %v748 = vpop.f32.mrb[0].mxu0
        %v749 = vadd.f32 0.0, %v748
        %v750 = vpop.f32.mrb[0].mxu0
        %751 = vdwg.mxu0
        %v752 = vpack.c.bf16 %v749, %v746
        %754 = vrot.lane.b32.xlu0 %v630, 120
        %v755 = vpop.permute.xlu0 %754
        %756 = vrot.lane.b32.xlu0 %v631, 120
        %v757 = vpop.permute.xlu0 %756
        %v759 = vsel %vm632, %v755, 0
        %v762 = vsel %vm632, %v757, 0
        %764 = vmatprep.subr.bf16.mxu0 0
        %765 = vmatpush1.bf16.xpose.msra.mxu0 %v762
        %766 = vmatprep.subr.bf16.mxu0 0
        %767 = vmatpush1.bf16.xpose.msra.mxu0 0
        %768 = vmatprep.subr.bf16.mxu0 0
        %769 = vmatpush1.bf16.xpose.msra.mxu0 0
        %770 = vmatprep.subr.bf16.mxu0 0
        %771 = vmatpush1.bf16.xpose.msra.mxu0 0
        %772 = vmatprep.subr.bf16.mxu0 0
        %773 = vmatpush1.bf16.xpose.msra.mxu0 0
        %774 = vmatprep.subr.bf16.mxu0 0
        %775 = vmatpush1.bf16.xpose.msra.mxu0 0
        %776 = vmatprep.subr.bf16.mxu0 0
        %777 = vmatpush1.bf16.xpose.msra.mxu0 0
        %778 = vmatprep.subr.bf16.mxu0 0
        %779 = vmatpush1.bf16.xpose.msra.mxu0 0
        %780 = vmatprep.subr.bf16.mxu0 0
        %781 = vmatpush1.bf16.xpose.msra.mxu0 0
        %782 = vmatprep.subr.bf16.mxu0 0
        %783 = vmatpush1.bf16.xpose.msra.mxu0 0
        %784 = vmatprep.subr.bf16.mxu0 0
        %785 = vmatpush1.bf16.xpose.msra.mxu0 0
        %786 = vmatprep.subr.bf16.mxu0 0
        %787 = vmatpush1.bf16.xpose.msra.mxu0 0
        %788 = vmatprep.subr.bf16.mxu0 0
        %789 = vmatpush1.bf16.xpose.msra.mxu0 0
        %790 = vmatprep.subr.bf16.mxu0 0
        %791 = vmatpush1.bf16.xpose.msra.mxu0 0
        %792 = vmatprep.subr.bf16.mxu0 0
        %793 = vmatpush1.bf16.xpose.msra.mxu0 0
        %794 = vmatprep.subr.bf16.mxu0 0
        %795 = vmatpush1.bf16.xpose.msra.mxu0 0
        %796 = vmatprep.mubr.bf16.mxu0 0
        %797 = vmatmul.mubr.bf16.gmra.mrb[0].mxu0 %v759
        %v798 = vpop.f32.mrb[0].mxu0
        %v799 = vadd.f32 0.0, %v798
        %v800 = vpop.f32.mrb[0].mxu0
        %v801 = vpop.f32.mrb[0].mxu0
        %v802 = vadd.f32 0.0, %v801
        %v803 = vpop.f32.mrb[0].mxu0
        %804 = vdwg.mxu0
        %v805 = vsel %vm680, %v799, -inf
        %806 = vmax.xlane.f32.xlu0 %v805
        %v807 = vpop.xlane.xlu0 %806
        %v808 = vsel %vm680, %v802, -inf
        %809 = vmax.xlane.f32.xlu0 %v808
        %v810 = vpop.xlane.xlu0 %809
        %v811 = vsub.f32 %v799, %v807
        %v812 = vsub.f32 %v802, %v810
        %v813 = vmul.f32 %v811, 1.442695
        %v814 = vpow.pop %v813
        %v815 = vmul.f32 %v812, 1.442695
        %v816 = vpow.pop %v815
        %v817 = vsel %vm680, %v814, 0.0
        %818 = vadd.xlane.f32.xlu0 %v817
        %v819 = vpop.xlane.xlu0 %818
        %v820 = vsel %vm680, %v816, 0.0
        %821 = vadd.xlane.f32.xlu0 %v820
        %v822 = vpop.xlane.xlu0 %821
        %v823 = vrcp.pop %v819
        %v824 = vrcp.pop %v822
        %v825 = vmul.f32 %v814, %v823
        %v826 = vmul.f32 %v816, %v824
        %v827 = vpack.c.bf16 %v826, %v825
        %828 = vrot.lane.b32.xlu0 %v631, 88
        %v829 = vpop.permute.xlu0 %828
        %v832 = vsel %vm680, %v827, 0
        %834 = vmatprep.subr.bf16.mxu0 0
        %835 = vmatpush1.bf16.msra.mxu0 %v829
        %836 = vmatprep.subr.bf16.mxu0 0
        %837 = vmatpush1.bf16.msra.mxu0 0
        %838 = vmatprep.subr.bf16.mxu0 0
        %839 = vmatpush1.bf16.msra.mxu0 0
        %840 = vmatprep.subr.bf16.mxu0 0
        %841 = vmatpush1.bf16.msra.mxu0 0
        %842 = vmatprep.subr.bf16.mxu0 0
        %843 = vmatpush1.bf16.msra.mxu0 0
        %844 = vmatprep.subr.bf16.mxu0 0
        %845 = vmatpush1.bf16.msra.mxu0 0
        %846 = vmatprep.subr.bf16.mxu0 0
        %847 = vmatpush1.bf16.msra.mxu0 0
        %848 = vmatprep.subr.bf16.mxu0 0
        %849 = vmatpush1.bf16.msra.mxu0 0
        %850 = vmatprep.subr.bf16.mxu0 0
        %851 = vmatpush1.bf16.msra.mxu0 0
        %852 = vmatprep.subr.bf16.mxu0 0
        %853 = vmatpush1.bf16.msra.mxu0 0
        %854 = vmatprep.subr.bf16.mxu0 0
        %855 = vmatpush1.bf16.msra.mxu0 0
        %856 = vmatprep.subr.bf16.mxu0 0
        %857 = vmatpush1.bf16.msra.mxu0 0
        %858 = vmatprep.subr.bf16.mxu0 0
        %859 = vmatpush1.bf16.msra.mxu0 0
        %860 = vmatprep.subr.bf16.mxu0 0
        %861 = vmatpush1.bf16.msra.mxu0 0
        %862 = vmatprep.subr.bf16.mxu0 0
        %863 = vmatpush1.bf16.msra.mxu0 0
        %864 = vmatprep.subr.bf16.mxu0 0
        %865 = vmatpush1.bf16.msra.mxu0 0
        %866 = vmatprep.mubr.bf16.mxu0 0
        %867 = vmatmul.mubr.bf16.gmra.mrb[0].mxu0 %v832
        %v868 = vpop.f32.mrb[0].mxu0
        %v869 = vadd.f32 0.0, %v868
        %v870 = vpop.f32.mrb[0].mxu0
        %v871 = vpop.f32.mrb[0].mxu0
        %v872 = vadd.f32 0.0, %v871
        %v873 = vpop.f32.mrb[0].mxu0
        %874 = vdwg.mxu0
        %v875 = vpack.c.bf16 %v872, %v869
        %876 = vrot.lane.b32.xlu0 %v630, 112
        %v877 = vpop.permute.xlu0 %876
        %878 = vrot.lane.b32.xlu0 %v631, 112
        %v879 = vpop.permute.xlu0 %878
        %v881 = vsel %vm632, %v877, 0
        %v884 = vsel %vm632, %v879, 0
        %886 = vmatprep.subr.bf16.mxu0 0
        %887 = vmatpush1.bf16.xpose.msra.mxu0 %v884
        %888 = vmatprep.subr.bf16.mxu0 0
        %889 = vmatpush1.bf16.xpose.msra.mxu0 0
        %890 = vmatprep.subr.bf16.mxu0 0
        %891 = vmatpush1.bf16.xpose.msra.mxu0 0
        %892 = vmatprep.subr.bf16.mxu0 0
        %893 = vmatpush1.bf16.xpose.msra.mxu0 0
        %894 = vmatprep.subr.bf16.mxu0 0
        %895 = vmatpush1.bf16.xpose.msra.mxu0 0
        %896 = vmatprep.subr.bf16.mxu0 0
        %897 = vmatpush1.bf16.xpose.msra.mxu0 0
        %898 = vmatprep.subr.bf16.mxu0 0
        %899 = vmatpush1.bf16.xpose.msra.mxu0 0
        %900 = vmatprep.subr.bf16.mxu0 0
        %901 = vmatpush1.bf16.xpose.msra.mxu0 0
        %902 = vmatprep.subr.bf16.mxu0 0
        %903 = vmatpush1.bf16.xpose.msra.mxu0 0
        %904 = vmatprep.subr.bf16.mxu0 0
        %905 = vmatpush1.bf16.xpose.msra.mxu0 0
        %906 = vmatprep.subr.bf16.mxu0 0
        %907 = vmatpush1.bf16.xpose.msra.mxu0 0
        %908 = vmatprep.subr.bf16.mxu0 0
        %909 = vmatpush1.bf16.xpose.msra.mxu0 0
        %910 = vmatprep.subr.bf16.mxu0 0
        %911 = vmatpush1.bf16.xpose.msra.mxu0 0
        %912 = vmatprep.subr.bf16.mxu0 0
        %913 = vmatpush1.bf16.xpose.msra.mxu0 0
        %914 = vmatprep.subr.bf16.mxu0 0
        %915 = vmatpush1.bf16.xpose.msra.mxu0 0
        %916 = vmatprep.subr.bf16.mxu0 0
        %917 = vmatpush1.bf16.xpose.msra.mxu0 0
        %918 = vmatprep.mubr.bf16.mxu0 0
        %919 = vmatmul.mubr.bf16.gmra.mrb[0].mxu0 %v881
        %v920 = vpop.f32.mrb[0].mxu0
        %v921 = vadd.f32 0.0, %v920
        %v922 = vpop.f32.mrb[0].mxu0
        %v923 = vpop.f32.mrb[0].mxu0
        %v924 = vadd.f32 0.0, %v923
        %v925 = vpop.f32.mrb[0].mxu0
        %926 = vdwg.mxu0
        %v927 = vsel %vm680, %v921, -inf
        %928 = vmax.xlane.f32.xlu0 %v927
        %v929 = vpop.xlane.xlu0 %928
        %v930 = vsel %vm680, %v924, -inf
        %931 = vmax.xlane.f32.xlu0 %v930
        %v932 = vpop.xlane.xlu0 %931
        %v933 = vsub.f32 %v921, %v929
        %v934 = vsub.f32 %v924, %v932
        %v935 = vmul.f32 %v933, 1.442695
        %v936 = vpow.pop %v935
        %v937 = vmul.f32 %v934, 1.442695
        %v938 = vpow.pop %v937
        %v939 = vsel %vm680, %v936, 0.0
        %940 = vadd.xlane.f32.xlu0 %v939
        %v941 = vpop.xlane.xlu0 %940
        %v942 = vsel %vm680, %v938, 0.0
        %943 = vadd.xlane.f32.xlu0 %v942
        %v944 = vpop.xlane.xlu0 %943
        %v945 = vrcp.pop %v941
        %v946 = vrcp.pop %v944
        %v947 = vmul.f32 %v936, %v945
        %v948 = vmul.f32 %v938, %v946
        %v949 = vpack.c.bf16 %v948, %v947
        %950 = vrot.lane.b32.xlu0 %v631, 80
        %v951 = vpop.permute.xlu0 %950
        %v954 = vsel %vm680, %v949, 0
        %956 = vmatprep.subr.bf16.mxu0 0
        %957 = vmatpush1.bf16.msra.mxu0 %v951
        %958 = vmatprep.subr.bf16.mxu0 0
        %959 = vmatpush1.bf16.msra.mxu0 0
        %960 = vmatprep.subr.bf16.mxu0 0
        %961 = vmatpush1.bf16.msra.mxu0 0
        %962 = vmatprep.subr.bf16.mxu0 0
        %963 = vmatpush1.bf16.msra.mxu0 0
        %964 = vmatprep.subr.bf16.mxu0 0
        %965 = vmatpush1.bf16.msra.mxu0 0
        %966 = vmatprep.subr.bf16.mxu0 0
        %967 = vmatpush1.bf16.msra.mxu0 0
        %968 = vmatprep.subr.bf16.mxu0 0
        %969 = vmatpush1.bf16.msra.mxu0 0
        %970 = vmatprep.subr.bf16.mxu0 0
        %971 = vmatpush1.bf16.msra.mxu0 0
        %972 = vmatprep.subr.bf16.mxu0 0
        %973 = vmatpush1.bf16.msra.mxu0 0
        %974 = vmatprep.subr.bf16.mxu0 0
        %975 = vmatpush1.bf16.msra.mxu0 0
        %976 = vmatprep.subr.bf16.mxu0 0
        %977 = vmatpush1.bf16.msra.mxu0 0
        %978 = vmatprep.subr.bf16.mxu0 0
        %979 = vmatpush1.bf16.msra.mxu0 0
        %980 = vmatprep.subr.bf16.mxu0 0
        %981 = vmatpush1.bf16.msra.mxu0 0
        %982 = vmatprep.subr.bf16.mxu0 0
        %983 = vmatpush1.bf16.msra.mxu0 0
        %984 = vmatprep.subr.bf16.mxu0 0
        %985 = vmatpush1.bf16.msra.mxu0 0
        %986 = vmatprep.subr.bf16.mxu0 0
        %987 = vmatpush1.bf16.msra.mxu0 0
        %988 = vmatprep.mubr.bf16.mxu0 0
        %989 = vmatmul.mubr.bf16.gmra.mrb[0].mxu0 %v954
        %v990 = vpop.f32.mrb[0].mxu0
        %v991 = vadd.f32 0.0, %v990
        %v992 = vpop.f32.mrb[0].mxu0
        %v993 = vpop.f32.mrb[0].mxu0
        %v994 = vadd.f32 0.0, %v993
        %v995 = vpop.f32.mrb[0].mxu0
        %996 = vdwg.mxu0
        %v997 = vpack.c.bf16 %v994, %v991
        %998 = vrot.lane.b32.xlu0 %v630, 104
        %v999 = vpop.permute.xlu0 %998
        %1000 = vrot.lane.b32.xlu0 %v631, 104
        %v1001 = vpop.permute.xlu0 %1000
        %v1003 = vsel %vm632, %v999, 0
        %v1006 = vsel %vm632, %v1001, 0
        %1008 = vmatprep.subr.bf16.mxu0 0
        %1009 = vmatpush1.bf16.xpose.msra.mxu0 %v1006
        %1010 = vmatprep.subr.bf16.mxu0 0
        %1011 = vmatpush1.bf16.xpose.msra.mxu0 0
        %1012 = vmatprep.subr.bf16.mxu0 0
        %1013 = vmatpush1.bf16.xpose.msra.mxu0 0
        %1014 = vmatprep.subr.bf16.mxu0 0
        %1015 = vmatpush1.bf16.xpose.msra.mxu0 0
        %1016 = vmatprep.subr.bf16.mxu0 0
        %1017 = vmatpush1.bf16.xpose.msra.mxu0 0
        %1018 = vmatprep.subr.bf16.mxu0 0
        %1019 = vmatpush1.bf16.xpose.msra.mxu0 0
        %1020 = vmatprep.subr.bf16.mxu0 0
        %1021 = vmatpush1.bf16.xpose.msra.mxu0 0
        %1022 = vmatprep.subr.bf16.mxu0 0
        %1023 = vmatpush1.bf16.xpose.msra.mxu0 0
        %1024 = vmatprep.subr.bf16.mxu0 0
        %1025 = vmatpush1.bf16.xpose.msra.mxu0 0
        %1026 = vmatprep.subr.bf16.mxu0 0
        %1027 = vmatpush1.bf16.xpose.msra.mxu0 0
        %1028 = vmatprep.subr.bf16.mxu0 0
        %1029 = vmatpush1.bf16.xpose.msra.mxu0 0
        %1030 = vmatprep.subr.bf16.mxu0 0
        %1031 = vmatpush1.bf16.xpose.msra.mxu0 0
        %1032 = vmatprep.subr.bf16.mxu0 0
        %1033 = vmatpush1.bf16.xpose.msra.mxu0 0
        %1034 = vmatprep.subr.bf16.mxu0 0
        %1035 = vmatpush1.bf16.xpose.msra.mxu0 0
        %1036 = vmatprep.subr.bf16.mxu0 0
        %1037 = vmatpush1.bf16.xpose.msra.mxu0 0
        %1038 = vmatprep.subr.bf16.mxu0 0
        %1039 = vmatpush1.bf16.xpose.msra.mxu0 0
        %1040 = vmatprep.mubr.bf16.mxu0 0
        %1041 = vmatmul.mubr.bf16.gmra.mrb[0].mxu0 %v1003
        %v1042 = vpop.f32.mrb[0].mxu0
        %v1043 = vadd.f32 0.0, %v1042
        %v1044 = vpop.f32.mrb[0].mxu0
        %v1045 = vpop.f32.mrb[0].mxu0
        %v1046 = vadd.f32 0.0, %v1045
        %v1047 = vpop.f32.mrb[0].mxu0
        %1048 = vdwg.mxu0
        %v1049 = vsel %vm680, %v1043, -inf
        %1050 = vmax.xlane.f32.xlu0 %v1049
        %v1051 = vpop.xlane.xlu0 %1050
        %v1052 = vsel %vm680, %v1046, -inf
        %1053 = vmax.xlane.f32.xlu0 %v1052
        %v1054 = vpop.xlane.xlu0 %1053
        %v1055 = vsub.f32 %v1043, %v1051
        %v1056 = vsub.f32 %v1046, %v1054
        %v1057 = vmul.f32 %v1055, 1.442695
        %v1058 = vpow.pop %v1057
        %v1059 = vmul.f32 %v1056, 1.442695
        %v1060 = vpow.pop %v1059
        %v1061 = vsel %vm680, %v1058, 0.0
        %1062 = vadd.xlane.f32.xlu0 %v1061
        %v1063 = vpop.xlane.xlu0 %1062
        %v1064 = vsel %vm680, %v1060, 0.0
        %1065 = vadd.xlane.f32.xlu0 %v1064
        %v1066 = vpop.xlane.xlu0 %1065
        %v1067 = vrcp.pop %v1063
        %v1068 = vrcp.pop %v1066
        %v1069 = vmul.f32 %v1058, %v1067
        %v1070 = vmul.f32 %v1060, %v1068
        %v1071 = vpack.c.bf16 %v1070, %v1069
        %1072 = vrot.lane.b32.xlu0 %v631, 72
        %v1073 = vpop.permute.xlu0 %1072
        %v1076 = vsel %vm680, %v1071, 0
        %1078 = vmatprep.subr.bf16.mxu0 0
        %1079 = vmatpush1.bf16.msra.mxu0 %v1073
        %1080 = vmatprep.subr.bf16.mxu0 0
        %1081 = vmatpush1.bf16.msra.mxu0 0
        %1082 = vmatprep.subr.bf16.mxu0 0
        %1083 = vmatpush1.bf16.msra.mxu0 0
        %1084 = vmatprep.subr.bf16.mxu0 0
        %1085 = vmatpush1.bf16.msra.mxu0 0
        %1086 = vmatprep.subr.bf16.mxu0 0
        %1087 = vmatpush1.bf16.msra.mxu0 0
        %1088 = vmatprep.subr.bf16.mxu0 0
        %1089 = vmatpush1.bf16.msra.mxu0 0
        %1090 = vmatprep.subr.bf16.mxu0 0
        %1091 = vmatpush1.bf16.msra.mxu0 0
        %1092 = vmatprep.subr.bf16.mxu0 0
        %1093 = vmatpush1.bf16.msra.mxu0 0
        %1094 = vmatprep.subr.bf16.mxu0 0
        %1095 = vmatpush1.bf16.msra.mxu0 0
        %1096 = vmatprep.subr.bf16.mxu0 0
        %1097 = vmatpush1.bf16.msra.mxu0 0
        %1098 = vmatprep.subr.bf16.mxu0 0
        %1099 = vmatpush1.bf16.msra.mxu0 0
        %1100 = vmatprep.subr.bf16.mxu0 0
        %1101 = vmatpush1.bf16.msra.mxu0 0
        %1102 = vmatprep.subr.bf16.mxu0 0
        %1103 = vmatpush1.bf16.msra.mxu0 0
        %1104 = vmatprep.subr.bf16.mxu0 0
        %1105 = vmatpush1.bf16.msra.mxu0 0
        %1106 = vmatprep.subr.bf16.mxu0 0
        %1107 = vmatpush1.bf16.msra.mxu0 0
        %1108 = vmatprep.subr.bf16.mxu0 0
        %1109 = vmatpush1.bf16.msra.mxu0 0
        %1110 = vmatprep.mubr.bf16.mxu0 0
        %1111 = vmatmul.mubr.bf16.gmra.mrb[0].mxu0 %v1076
        %v1112 = vpop.f32.mrb[0].mxu0
        %v1113 = vadd.f32 0.0, %v1112
        %v1114 = vpop.f32.mrb[0].mxu0
        %v1115 = vpop.f32.mrb[0].mxu0
        %v1116 = vadd.f32 0.0, %v1115
        %v1117 = vpop.f32.mrb[0].mxu0
        %1118 = vdwg.mxu0
        %v1119 = vpack.c.bf16 %v1116, %v1113
        %1121 = vrot.lane.b32.xlu0 %v875, 8
        %v1122 = vpop.permute.xlu0 %1121
        %1124 = vrot.lane.b32.xlu0 %v997, 16
        %v1125 = vpop.permute.xlu0 %1124
        %1127 = vrot.lane.b32.xlu0 %v1119, 24
        %v1128 = vpop.permute.xlu0 %1127
        %v1131 = vsel %vm632, %v752, %v1122
        %v1133 = vsel %vm680, %v1131, %v1125
        %vm1134 = vcmask 195584
        %v1136 = vsel %vm1134, %v1133, %v1128
        %v1137 = vld [vmem:[#allocation11] sm:$0xf]
        %v1138 = vld [vmem:[#allocation11 + $0x4] sm:$0xf]
        %v1139 = vld [vmem:[#allocation11 + $0x8] sm:$0xf]
        %v1140 = vld [vmem:[#allocation11 + $0xc] sm:$0xf]
        %v1141 = vld [vmem:[%s9] sm:$0x1]
        %v1143 = vlaneseq
        %v1144 = vshrl.u32 %v1143, 7
        %v1145 = vsub.s32 0, %v1144
        %v1146 = vrot.slane %v1141, %v1145
        %v1152 = vunpack.c.l.b16 %v1137
        %v1153 = vunpack.c.l.b16 %v1138
        %v1154 = vunpack.c.l.b16 %v1139
        %v1155 = vunpack.c.l.b16 %v1140
        %v1156 = vpack.c.b16 %v1153, %v1152
        %v1157 = vpack.c.b16 %v1155, %v1154
        %v1160 = vsel %vm518, %v1136, 0
        %1162 = vmatprep.subr.bf16.mxu0 0
        %1163 = vmatpush1.bf16.msra.mxu0 %v1156
        %1164 = vmatprep.subr.bf16.mxu0 0
        %1165 = vmatpush1.bf16.msra.mxu0 %v1157
        %1166 = vmatprep.subr.bf16.mxu0 0
        %1167 = vmatpush1.bf16.msra.mxu0 0
        %1168 = vmatprep.subr.bf16.mxu0 0
        %1169 = vmatpush1.bf16.msra.mxu0 0
        %1170 = vmatprep.subr.bf16.mxu0 0
        %1171 = vmatpush1.bf16.msra.mxu0 0
        %1172 = vmatprep.subr.bf16.mxu0 0
        %1173 = vmatpush1.bf16.msra.mxu0 0
        %1174 = vmatprep.subr.bf16.mxu0 0
        %1175 = vmatpush1.bf16.msra.mxu0 0
        %1176 = vmatprep.subr.bf16.mxu0 0
        %1177 = vmatpush1.bf16.msra.mxu0 0
        %1178 = vmatprep.subr.bf16.mxu0 0
        %1179 = vmatpush1.bf16.msra.mxu0 0
        %1180 = vmatprep.subr.bf16.mxu0 0
        %1181 = vmatpush1.bf16.msra.mxu0 0
        %1182 = vmatprep.subr.bf16.mxu0 0
        %1183 = vmatpush1.bf16.msra.mxu0 0
        %1184 = vmatprep.subr.bf16.mxu0 0
        %1185 = vmatpush1.bf16.msra.mxu0 0
        %1186 = vmatprep.subr.bf16.mxu0 0
        %1187 = vmatpush1.bf16.msra.mxu0 0
        %1188 = vmatprep.subr.bf16.mxu0 0
        %1189 = vmatpush1.bf16.msra.mxu0 0
        %1190 = vmatprep.subr.bf16.mxu0 0
        %1191 = vmatpush1.bf16.msra.mxu0 0
        %1192 = vmatprep.subr.bf16.mxu0 0
        %1193 = vmatpush1.bf16.msra.mxu0 0
        %1194 = vmatprep.mubr.bf16.mxu0 0
        %1195 = vmatmul.mubr.bf16.gmra.mrb[0].mxu0 %v1160
        %v1196 = vpop.f32.mrb[0].mxu0
        %v1197 = vadd.f32 %v1146, %v1196
        %v1198 = vpop.f32.mrb[0].mxu0
        %v1199 = vpop.f32.mrb[0].mxu0
        %v1200 = vadd.f32 %v1146, %v1199
        %v1201 = vpop.f32.mrb[0].mxu0
        %1202 = vdwg.mxu0
        %1203 = vst.msk [vmem:[%s475] sm:$0xff] %vm518, %v1197
        %1204 = vst.msk [vmem:[%s475 + $0x8] sm:$0xff] %vm518, %v1200
        %s1205 = sand.u32 %s260, 1
        %s1206 = scalar_lea.sflag [#allocation4], %s1205
        %s1207 = sand.u32 %s260, 1
        %s1208 = smul.addr %s1207, 16
        %s1209 = scalar_lea.vmem [#allocation13], %s1208
        // Predicated region
        $region85: #{tpu_custom_call.1} parent=59 // pred_check
          %p1210 = pneg %p270
        $region86: #{tpu_custom_call.1} parent=59 // pred_check_branch
          %1212 = sbr.rel (%p1210) target = $region88
        $region87: #{tpu_custom_call.1} parent=59 // pred_region
          %s1214 = ssub.s32 256, 256
          %1215 = vsyncadd %s1206, %s1214
          %s1216 = smul.addr %s32, 2
          %s1217 = smul.addr %s1216, 128
          %s1218 = scalar_lea.hbm %s10, %s1217
          %s1219 = sshll.u32 %s1209, 4
          %s1220 = int_to_ptr.vmem [resolvable:$true] %s1219
          %1225 = dma.vmem_to_hbm [thread:$0]  %s1220, 256, %s1218, %s1206, 128, 128, 8
        $region88: #{tpu_custom_call.1} parent=59 // pred_fallthru
          _
      $region60: #{tpu_custom_call.1} parent=5 // pred_fallthru
        _
      %p1226 = scmp.le.s32.totalorder 2, %s27
      // Predicated region
      $region89: #{tpu_custom_call.1} parent=5 // pred_check
        %p1227 = pneg %p1226
      $region90: #{tpu_custom_call.1} parent=5 // pred_check_branch
        %1229 = sbr.rel (%p1227) target = $region92
      $region91: #{tpu_custom_call.1} parent=5 // pred_region
        %s1230 = ssub.s32 %s27, 2
        // Predicated region
        $region93: #{tpu_custom_call.1} parent=91 // pred_check
          %p1231 = pneg %p276
        $region94: #{tpu_custom_call.1} parent=91 // pred_check_branch
          %1233 = sbr.rel (%p1231) target = $region96
        $region95: #{tpu_custom_call.1} parent=91 // pred_region
          %s1234 = sand.u32 %s261, 1
          %s1235 = scalar_lea.sflag [#allocation4], %s1234
          %s1236 = sand.u32 %s261, 1
          %s1237 = smul.addr %s1236, 16
          %s1238 = scalar_lea.vmem [#allocation13], %s1237
          %1239 = dma.done %s1235, 256
        $region96: #{tpu_custom_call.1} parent=91 // pred_fallthru
          _
      $region92: #{tpu_custom_call.1} parent=5 // pred_fallthru
        _
    $region6: #{tpu_custom_call.1} parent=1 // loop_footer
      %s31 = sadd.s32 1, %s27
    $region7: #{tpu_custom_call.1} parent=1 // loop_footer_branch
      %26 = sbr.rel target = $region3
    $region8: #{tpu_custom_call.1} parent=1 // loop_exit
      _
    %1240 = vsyncpa [#allocation3], 1
    %s1241 = scalar_lea.sflag [#allocation3], 1
    %1242 = vsyncpa %s1241, 1
    %1243 = vsyncpa [#allocation6], 1
    %s1244 = scalar_lea.sflag [#allocation6], 1
    %1245 = vsyncpa %s1244, 1
    %1246 = vsyncpa [#allocation9], 1
    %1247 = vsyncpa [#allocation12], 1
    %1248 = vsyncpa [#allocation4], 1
    %s1249 = scalar_lea.sflag [#allocation4], 1
    %1250 = vsyncpa %s1249, 1

// kernel: tpu_custom_call.1
$region0: #{tpu_custom_call.1}
  #allocation0 [shape = 'u32[]', space=smem, size = 0x4, offset = 0x4, fixed_abs, tag = 'smem constant byte address 0x4 - core index']
  #allocation1 [shape = 'u32[144,128]{1,0:T(1,128)}', space=vmem, size = 0x12000, scoped, tag = 'internal scratch']
  %s0 = inlined_call_operand.hbm [shape: bf16[2,16,32], index: 0, kind: input, shape index: {}]
  %s1 = inlined_call_operand.hbm [shape: bf16[2,16,32], index: 1, kind: input, shape index: {}]
  %s2 = inlined_call_operand.hbm [shape: f32[16,32], index: 2, kind: input, shape index: {}]
  %s3 = inlined_call_operand.hbm [shape: f32[16,32], index: 3, kind: input, shape index: {}]
  %s4 = inlined_call_operand.hbm [shape: bf16[32,32], index: 4, kind: input, shape index: {}]
  %s5 = inlined_call_operand.vmem [shape: f32[1,32], index: 5, kind: input, shape index: {}]
  %s6 = inlined_call_operand.vmem [shape: bf16[32,64], index: 6, kind: input, shape index: {}]
  %s7 = inlined_call_operand.vmem [shape: f32[1,64], index: 7, kind: input, shape index: {}]
  %s8 = inlined_call_operand.hbm [shape: bf16[32,32], index: 8, kind: input, shape index: {}]
  %s9 = inlined_call_operand.vmem [shape: f32[1,32], index: 9, kind: input, shape index: {}]
  %s10 = inlined_call_operand.hbm [shape: f32[2,16,32], index: 10, kind: output, shape index: {}]
  %s11 = sld [smem:[#allocation0]]
  $region97: #{tpu_custom_call.1} parent=0
    _
  %s13 = ssub.s32 1, %s11
  %s14 = scalar_select 0, %s13, %s11
  $region1: #{tpu_custom_call.1} parent=0
    #allocation2 [shape = 'u8[8192]{0}', space=vmem, size = 0x2000, scoped, tag = 'input window, operand 0']
    #allocation3 [shape = 's32[2]{0}', space=sflag, size = 0x8, scoped, tag = 'scoped memory for tpu_custom_call.1']
    #allocation4 [shape = 's32[2]{0}', space=sflag, size = 0x8, scoped, tag = 'scoped memory for tpu_custom_call.1']
    #allocation5 [shape = 'u8[8192]{0}', space=vmem, size = 0x2000, scoped, tag = 'input window, operand 1']
    #allocation6 [shape = 's32[2]{0}', space=sflag, size = 0x8, scoped, tag = 'scoped memory for tpu_custom_call.1']
    #allocation7 [shape = 'u8[8192]{0}', space=vmem, size = 0x2000, scoped, tag = 'input window, operand 2, single buffered']
    #allocation8 [shape = 'u8[8192]{0}', space=vmem, size = 0x2000, scoped, tag = 'input window, operand 3, single buffered']
    #allocation9 [shape = 's32[1]{0}', space=sflag, size = 0x4, scoped, tag = 'scoped memory for tpu_custom_call.1']
    #allocation10 [shape = 'u8[8192]{0}', space=vmem, size = 0x2000, scoped, tag = 'input window, operand 4, single buffered']
    #allocation11 [shape = 'u8[8192]{0}', space=vmem, size = 0x2000, scoped, tag = 'input window, operand 8, single buffered']
    #allocation12 [shape = 's32[1]{0}', space=sflag, size = 0x4, scoped, tag = 'scoped memory for tpu_custom_call.1']
    #allocation13 [shape = 'u8[16384]{0}', space=vmem, size = 0x4000, scoped, tag = 'output window, operand 0']
    %15 = vsyncpa [#allocation3], 0
    %s16 = scalar_lea.sflag [#allocation3], 1
    %17 = vsyncpa %s16, 0
    %18 = vsyncpa [#allocation6], 0
    %s19 = scalar_lea.sflag [#allocation6], 1
    %20 = vsyncpa %s19, 0
    %21 = vsyncpa [#allocation9], 0
    %22 = vsyncpa [#allocation12], 0
    %23 = vsyncpa [#allocation4], 0
    %s24 = scalar_lea.sflag [#allocation4], 1
    %25 = vsyncpa %s24, 0
    loop: start=0, step=1, limit=4
    $region2: #{tpu_custom_call.1} parent=1 // loop_pre_header
      _
    $region3: #{tpu_custom_call.1} parent=1 // loop_header
      %s27 = sphi 0, %s31
      %p28 = scmp.ge.s32.totalorder %s27, 4
      %s37 = sphi 0, %s39
      %s40 = sphi 0, %s37
      %s41 = sphi 0, %s40
      %s57 = sphi 0, %s41
      %s63 = sphi 0, %s65
      %s66 = sphi 0, %s63
      %s67 = sphi 0, %s66
      %s83 = sphi 0, %s67
      %s87 = sphi 0, %s87
      %s89 = sphi 0, %s87
      %s90 = sphi 0, %s89
      %s104 = sphi 0, %s90
      %s108 = sphi 0, %s108
      %s110 = sphi 0, %s108
      %s111 = sphi 0, %s110
      %s125 = sphi 0, %s111
      %s129 = sphi 0, %s129
      %s131 = sphi 0, %s129
      %s132 = sphi 0, %s131
      %s146 = sphi 0, %s132
      %s150 = sphi 0, %s150
      %s152 = sphi 0, %s150
      %s153 = sphi 0, %s152
      %s167 = sphi 0, %s153
      %s171 = sphi 0, %s171
      %s173 = sphi 0, %s171
      %s174 = sphi 0, %s173
      %s188 = sphi 0, %s174
      %s192 = sphi 0, %s192
      %s194 = sphi 0, %s192
      %s195 = sphi 0, %s194
      %s209 = sphi 0, %s195
      %s213 = sphi 0, %s213
      %s215 = sphi 0, %s213
      %s216 = sphi 0, %s215
      %s230 = sphi 0, %s216
      %s234 = sphi 0, %s234
      %s236 = sphi 0, %s234
      %s237 = sphi 0, %s236
      %s251 = sphi 0, %s237
      %s257 = sphi 0, %s259
      %s260 = sphi 0, %s257
      %s261 = sphi 0, %s260
      %s277 = sphi 0, %s261
    $region4: #{tpu_custom_call.1} parent=1 // loop_header_branch
      %30 = sbr.rel (%p28) target = $region8
    $region5: #{tpu_custom_call.1} parent=1 // loop_body
      %s32 = ssub.s32 %s27, 1
      %s33 = ssub.s32 %s27, 2
      %s34 = sadd.s32 %s27, 1
      %s35 = ssub.s32 %s27, %s34
      %p36 = scmp.eq.s32.totalorder %s35, 0
      %s38 = sadd.s32 %s37, 1
      %s39 = scalar_select %p36, %s37, %s38
      %p42 = pneg %p36
      %p43 = scmp.eq.s32.totalorder %s27, 1
      %p44 = por %p42, %p43
      %p45 = scmp.ne.s32.totalorder %s37, %s40
      %p46 = scmp.eq.s32.totalorder %s27, 0
      %p47 = por %p45, %p46
      %p48 = scmp.ne.s32.totalorder %s37, %s40
      %p49 = scmp.eq.s32.totalorder %s32, 1
      %p50 = por %p48, %p49
      %p51 = scmp.ne.s32.totalorder %s40, %s41
      %p52 = scmp.eq.s32.totalorder %s32, 0
      %p53 = por %p51, %p52
      %p54 = scmp.ne.s32.totalorder %s40, %s41
      %p55 = scmp.eq.s32.totalorder %s33, 1
      %p56 = por %p54, %p55
      %p58 = scmp.ne.s32.totalorder %s41, %s57
      %p59 = scmp.eq.s32.totalorder %s33, 0
      %p60 = por %p58, %p59
      %s61 = ssub.s32 %s27, %s34
      %p62 = scmp.eq.s32.totalorder %s61, 0
      %s64 = sadd.s32 %s63, 1
      %s65 = scalar_select %p62, %s63, %s64
      %p68 = pneg %p62
      %p69 = scmp.eq.s32.totalorder %s27, 1
      %p70 = por %p68, %p69
      %p71 = scmp.ne.s32.totalorder %s63, %s66
      %p72 = scmp.eq.s32.totalorder %s27, 0
      %p73 = por %p71, %p72
      %p74 = scmp.ne.s32.totalorder %s63, %s66
      %p75 = scmp.eq.s32.totalorder %s32, 1
      %p76 = por %p74, %p75
      %p77 = scmp.ne.s32.totalorder %s66, %s67
      %p78 = scmp.eq.s32.totalorder %s32, 0
      %p79 = por %p77, %p78
      %p80 = scmp.ne.s32.totalorder %s66, %s67
      %p81 = scmp.eq.s32.totalorder %s33, 1
      %p82 = por %p80, %p81
      %p84 = scmp.ne.s32.totalorder %s67, %s83
      %p85 = scmp.eq.s32.totalorder %s33, 0
      %p86 = por %p84, %p85
      %s88 = sadd.s32 %s87, 1
      %p91 = scmp.eq.s32.totalorder %s27, 1
      %p92 = scmp.ne.s32.totalorder %s87, %s89
      %p93 = scmp.eq.s32.totalorder %s27, 0
      %p94 = por %p92, %p93
      %p95 = scmp.ne.s32.totalorder %s87, %s89
      %p96 = scmp.eq.s32.totalorder %s32, 1
      %p97 = por %p95, %p96
      %p98 = scmp.ne.s32.totalorder %s89, %s90
      %p99 = scmp.eq.s32.totalorder %s32, 0
      %p100 = por %p98, %p99
      %p101 = scmp.ne.s32.totalorder %s89, %s90
      %p102 = scmp.eq.s32.totalorder %s33, 1
      %p103 = por %p101, %p102
      %p105 = scmp.ne.s32.totalorder %s90, %s104
      %p106 = scmp.eq.s32.totalorder %s33, 0
      %p107 = por %p105, %p106
      %s109 = sadd.s32 %s108, 1
      %p112 = scmp.eq.s32.totalorder %s27, 1
      %p113 = scmp.ne.s32.totalorder %s108, %s110
      %p114 = scmp.eq.s32.totalorder %s27, 0
      %p115 = por %p113, %p114
      %p116 = scmp.ne.s32.totalorder %s108, %s110
      %p117 = scmp.eq.s32.totalorder %s32, 1
      %p118 = por %p116, %p117
      %p119 = scmp.ne.s32.totalorder %s110, %s111
      %p120 = scmp.eq.s32.totalorder %s32, 0
      %p121 = por %p119, %p120
      %p122 = scmp.ne.s32.totalorder %s110, %s111
      %p123 = scmp.eq.s32.totalorder %s33, 1
      %p124 = por %p122, %p123
      %p126 = scmp.ne.s32.totalorder %s111, %s125
      %p127 = scmp.eq.s32.totalorder %s33, 0
      %p128 = por %p126, %p127
      %s130 = sadd.s32 %s129, 1
      %p133 = scmp.eq.s32.totalorder %s27, 1
      %p134 = scmp.ne.s32.totalorder %s129, %s131
      %p135 = scmp.eq.s32.totalorder %s27, 0
      %p136 = por %p134, %p135
      %p137 = scmp.ne.s32.totalorder %s129, %s131
      %p138 = scmp.eq.s32.totalorder %s32, 1
      %p139 = por %p137, %p138
      %p140 = scmp.ne.s32.totalorder %s131, %s132
      %p141 = scmp.eq.s32.totalorder %s32, 0
      %p142 = por %p140, %p141
      %p143 = scmp.ne.s32.totalorder %s131, %s132
      %p144 = scmp.eq.s32.totalorder %s33, 1
      %p145 = por %p143, %p144
      %p147 = scmp.ne.s32.totalorder %s132, %s146
      %p148 = scmp.eq.s32.totalorder %s33, 0
      %p149 = por %p147, %p148
      %s151 = sadd.s32 %s150, 1
      %p154 = scmp.eq.s32.totalorder %s27, 1
      %p155 = scmp.ne.s32.totalorder %s150, %s152
      %p156 = scmp.eq.s32.totalorder %s27, 0
      %p157 = por %p155, %p156
      %p158 = scmp.ne.s32.totalorder %s150, %s152
      %p159 = scmp.eq.s32.totalorder %s32, 1
      %p160 = por %p158, %p159
      %p161 = scmp.ne.s32.totalorder %s152, %s153
      %p162 = scmp.eq.s32.totalorder %s32, 0
      %p163 = por %p161, %p162
      %p164 = scmp.ne.s32.totalorder %s152, %s153
      %p165 = scmp.eq.s32.totalorder %s33, 1
      %p166 = por %p164, %p165
      %p168 = scmp.ne.s32.totalorder %s153, %s167
      %p169 = scmp.eq.s32.totalorder %s33, 0
      %p170 = por %p168, %p169
      %s172 = sadd.s32 %s171, 1
      %p175 = scmp.eq.s32.totalorder %s27, 1
      %p176 = scmp.ne.s32.totalorder %s171, %s173
      %p177 = scmp.eq.s32.totalorder %s27, 0
      %p178 = por %p176, %p177
      %p179 = scmp.ne.s32.totalorder %s171, %s173
      %p180 = scmp.eq.s32.totalorder %s32, 1
      %p181 = por %p179, %p180
      %p182 = scmp.ne.s32.totalorder %s173, %s174
      %p183 = scmp.eq.s32.totalorder %s32, 0
      %p184 = por %p182, %p183
      %p185 = scmp.ne.s32.totalorder %s173, %s174
      %p186 = scmp.eq.s32.totalorder %s33, 1
      %p187 = por %p185, %p186
      %p189 = scmp.ne.s32.totalorder %s174, %s188
      %p190 = scmp.eq.s32.totalorder %s33, 0
      %p191 = por %p189, %p190
      %s193 = sadd.s32 %s192, 1
      %p196 = scmp.eq.s32.totalorder %s27, 1
      %p197 = scmp.ne.s32.totalorder %s192, %s194
      %p198 = scmp.eq.s32.totalorder %s27, 0
      %p199 = por %p197, %p198
      %p200 = scmp.ne.s32.totalorder %s192, %s194
      %p201 = scmp.eq.s32.totalorder %s32, 1
      %p202 = por %p200, %p201
      %p203 = scmp.ne.s32.totalorder %s194, %s195
      %p204 = scmp.eq.s32.totalorder %s32, 0
      %p205 = por %p203, %p204
      %p206 = scmp.ne.s32.totalorder %s194, %s195
      %p207 = scmp.eq.s32.totalorder %s33, 1
      %p208 = por %p206, %p207
      %p210 = scmp.ne.s32.totalorder %s195, %s209
      %p211 = scmp.eq.s32.totalorder %s33, 0
      %p212 = por %p210, %p211
      %s214 = sadd.s32 %s213, 1
      %p217 = scmp.eq.s32.totalorder %s27, 1
      %p218 = scmp.ne.s32.totalorder %s213, %s215
      %p219 = scmp.eq.s32.totalorder %s27, 0
      %p220 = por %p218, %p219
      %p221 = scmp.ne.s32.totalorder %s213, %s215
      %p222 = scmp.eq.s32.totalorder %s32, 1
      %p223 = por %p221, %p222
      %p224 = scmp.ne.s32.totalorder %s215, %s216
      %p225 = scmp.eq.s32.totalorder %s32, 0
      %p226 = por %p224, %p225
      %p227 = scmp.ne.s32.totalorder %s215, %s216
      %p228 = scmp.eq.s32.totalorder %s33, 1
      %p229 = por %p227, %p228
      %p231 = scmp.ne.s32.totalorder %s216, %s230
      %p232 = scmp.eq.s32.totalorder %s33, 0
      %p233 = por %p231, %p232
      %s235 = sadd.s32 %s234, 1
      %p238 = scmp.eq.s32.totalorder %s27, 1
      %p239 = scmp.ne.s32.totalorder %s234, %s236
      %p240 = scmp.eq.s32.totalorder %s27, 0
      %p241 = por %p239, %p240
      %p242 = scmp.ne.s32.totalorder %s234, %s236
      %p243 = scmp.eq.s32.totalorder %s32, 1
      %p244 = por %p242, %p243
      %p245 = scmp.ne.s32.totalorder %s236, %s237
      %p246 = scmp.eq.s32.totalorder %s32, 0
      %p247 = por %p245, %p246
      %p248 = scmp.ne.s32.totalorder %s236, %s237
      %p249 = scmp.eq.s32.totalorder %s33, 1
      %p250 = por %p248, %p249
      %p252 = scmp.ne.s32.totalorder %s237, %s251
      %p253 = scmp.eq.s32.totalorder %s33, 0
      %p254 = por %p252, %p253
      %s255 = ssub.s32 %s27, %s34
      %p256 = scmp.eq.s32.totalorder %s255, 0
      %s258 = sadd.s32 %s257, 1
      %s259 = scalar_select %p256, %s257, %s258
      %p262 = pneg %p256
      %p263 = scmp.eq.s32.totalorder %s27, 1
      %p264 = por %p262, %p263
      %p265 = scmp.ne.s32.totalorder %s257, %s260
      %p266 = scmp.eq.s32.totalorder %s27, 0
      %p267 = por %p265, %p266
      %p268 = scmp.ne.s32.totalorder %s257, %s260
      %p269 = scmp.eq.s32.totalorder %s32, 1
      %p270 = por %p268, %p269
      %p271 = scmp.ne.s32.totalorder %s260, %s261
      %p272 = scmp.eq.s32.totalorder %s32, 0
      %p273 = por %p271, %p272
      %p274 = scmp.ne.s32.totalorder %s260, %s261
      %p275 = scmp.eq.s32.totalorder %s33, 1
      %p276 = por %p274, %p275
      %p278 = scmp.ne.s32.totalorder %s261, %s277
      %p279 = scmp.eq.s32.totalorder %s33, 0
      %p280 = por %p278, %p279
      %p281 = scmp.le.s32.totalorder 1, %s27
      %p282 = scmp.lt.s32.totalorder %s27, 3
      %p283 = pnand %p281, %p282
      %p284 = pneg %p283
      // Predicated region
      $region9: #{tpu_custom_call.1} parent=5 // pred_check
        _
      $region10: #{tpu_custom_call.1} parent=5 // pred_check_branch
        %286 = sbr.rel (%p283) target = $region12
      $region11: #{tpu_custom_call.1} parent=5 // pred_region
        %s287 = ssub.s32 %s27, 1
        // Predicated region
        $region13: #{tpu_custom_call.1} parent=11 // pred_check
          %p288 = pneg %p100
        $region14: #{tpu_custom_call.1} parent=11 // pred_check_branch
          %290 = sbr.rel (%p288) target = $region16
        $region15: #{tpu_custom_call.1} parent=11 // pred_region
          %s292 = ssub.s32 256, 256
          %293 = vsyncadd [#allocation6], %s292
          %s294 = sshll.u32 [#allocation7], 4
          %s295 = int_to_ptr.vmem [resolvable:$true] %s294
          %300 = dma.hbm_to_vmem [thread:$0]  %s2, 256, %s295, [#allocation6], 128, 128, 8
        $region16: #{tpu_custom_call.1} parent=11 // pred_fallthru
          _
        // Predicated region
        $region17: #{tpu_custom_call.1} parent=11 // pred_check
          %p301 = pneg %p121
        $region18: #{tpu_custom_call.1} parent=11 // pred_check_branch
          %303 = sbr.rel (%p301) target = $region20
        $region19: #{tpu_custom_call.1} parent=11 // pred_region
          %s305 = ssub.s32 256, 256
          %306 = vsyncadd [#allocation9], %s305
          %s307 = sshll.u32 [#allocation8], 4
          %s308 = int_to_ptr.vmem [resolvable:$true] %s307
          %313 = dma.hbm_to_vmem [thread:$0]  %s3, 256, %s308, [#allocation9], 128, 128, 8
        $region20: #{tpu_custom_call.1} parent=11 // pred_fallthru
          _
        // Predicated region
        $region21: #{tpu_custom_call.1} parent=11 // pred_check
          %p314 = pneg %p142
        $region22: #{tpu_custom_call.1} parent=11 // pred_check_branch
          %316 = sbr.rel (%p314) target = $region24
        $region23: #{tpu_custom_call.1} parent=11 // pred_region
          %s318 = ssub.s32 256, 256
          %319 = vsyncadd [#allocation9], %s318
          %s320 = sshll.u32 [#allocation10], 4
          %s321 = int_to_ptr.vmem [resolvable:$true] %s320
          %326 = dma.hbm_to_vmem [thread:$0]  %s4, 256, %s321, [#allocation9], 64, 64, 4
        $region24: #{tpu_custom_call.1} parent=11 // pred_fallthru
          _
        // Predicated region
        $region25: #{tpu_custom_call.1} parent=11 // pred_check
          %p327 = pneg %p163
        $region26: #{tpu_custom_call.1} parent=11 // pred_check_branch
          %329 = sbr.rel (%p327) target = $region28
        $region27: #{tpu_custom_call.1} parent=11 // pred_region
          _
        $region28: #{tpu_custom_call.1} parent=11 // pred_fallthru
          _
        // Predicated region
        $region29: #{tpu_custom_call.1} parent=11 // pred_check
          %p330 = pneg %p184
        $region30: #{tpu_custom_call.1} parent=11 // pred_check_branch
          %332 = sbr.rel (%p330) target = $region32
        $region31: #{tpu_custom_call.1} parent=11 // pred_region
          _
        $region32: #{tpu_custom_call.1} parent=11 // pred_fallthru
          _
        // Predicated region
        $region33: #{tpu_custom_call.1} parent=11 // pred_check
          %p333 = pneg %p205
        $region34: #{tpu_custom_call.1} parent=11 // pred_check_branch
          %335 = sbr.rel (%p333) target = $region36
        $region35: #{tpu_custom_call.1} parent=11 // pred_region
          _
        $region36: #{tpu_custom_call.1} parent=11 // pred_fallthru
          _
        // Predicated region
        $region37: #{tpu_custom_call.1} parent=11 // pred_check
          %p336 = pneg %p226
        $region38: #{tpu_custom_call.1} parent=11 // pred_check_branch
          %338 = sbr.rel (%p336) target = $region40
        $region39: #{tpu_custom_call.1} parent=11 // pred_region
          %s340 = ssub.s32 256, 256
          %341 = vsyncadd [#allocation12], %s340
          %s342 = sshll.u32 [#allocation11], 4
          %s343 = int_to_ptr.vmem [resolvable:$true] %s342
          %348 = dma.hbm_to_vmem [thread:$0]  %s8, 256, %s343, [#allocation12], 64, 64, 4
        $region40: #{tpu_custom_call.1} parent=11 // pred_fallthru
          _
        // Predicated region
        $region41: #{tpu_custom_call.1} parent=11 // pred_check
          %p349 = pneg %p247
        $region42: #{tpu_custom_call.1} parent=11 // pred_check_branch
          %351 = sbr.rel (%p349) target = $region44
        $region43: #{tpu_custom_call.1} parent=11 // pred_region
          _
        $region44: #{tpu_custom_call.1} parent=11 // pred_fallthru
          _
      $region12: #{tpu_custom_call.1} parent=5 // pred_fallthru
        _
      %p352 = scmp.lt.s32.totalorder %s27, 2
      // Predicated region
      $region45: #{tpu_custom_call.1} parent=5 // pred_check
        %p353 = pneg %p352
      $region46: #{tpu_custom_call.1} parent=5 // pred_check_branch
        %355 = sbr.rel (%p353) target = $region48
      $region47: #{tpu_custom_call.1} parent=5 // pred_region
        // Predicated region
        $region49: #{tpu_custom_call.1} parent=47 // pred_check
          %p356 = pneg %p47
        $region50: #{tpu_custom_call.1} parent=47 // pred_check_branch
          %358 = sbr.rel (%p356) target = $region52
        $region51: #{tpu_custom_call.1} parent=47 // pred_region
          %s359 = sand.u32 %s37, 1
          %s360 = scalar_lea.sflag [#allocation3], %s359
          %s361 = sand.u32 %s37, 1
          %s362 = smul.addr %s361, 8
          %s363 = scalar_lea.vmem [#allocation2], %s362
          %s365 = ssub.s32 128, 128
          %366 = vsyncadd %s360, %s365
          %s367 = smul.addr %s27, 2
          %s368 = smul.addr %s367, 64
          %s369 = scalar_lea.hbm %s0, %s368
          %s370 = sshll.u32 %s363, 4
          %s371 = int_to_ptr.vmem [resolvable:$true] %s370
          %376 = dma.hbm_to_vmem [thread:$0]  %s369, 128, %s371, %s360, 64, 64, 4
        $region52: #{tpu_custom_call.1} parent=47 // pred_fallthru
          _
        // Predicated region
        $region53: #{tpu_custom_call.1} parent=47 // pred_check
          %p377 = pneg %p73
        $region54: #{tpu_custom_call.1} parent=47 // pred_check_branch
          %379 = sbr.rel (%p377) target = $region56
        $region55: #{tpu_custom_call.1} parent=47 // pred_region
          %s380 = sand.u32 %s27, 1
          %s381 = scalar_lea.sflag [#allocation6], %s380
          %s382 = sand.u32 %s63, 1
          %s383 = smul.addr %s382, 8
          %s384 = scalar_lea.vmem [#allocation5], %s383
          %s386 = ssub.s32 128, 128
          %387 = vsyncadd %s381, %s386
          %s388 = smul.addr %s27, 2
          %s389 = smul.addr %s388, 64
          %s390 = scalar_lea.hbm %s1, %s389
          %s391 = sshll.u32 %s384, 4
          %s392 = int_to_ptr.vmem [resolvable:$true] %s391
          %397 = dma.hbm_to_vmem [thread:$0]  %s390, 128, %s392, %s381, 64, 64, 4
        $region56: #{tpu_custom_call.1} parent=47 // pred_fallthru
          _
      $region48: #{tpu_custom_call.1} parent=5 // pred_fallthru
        _
      %p398 = scmp.le.s32.totalorder 1, %s27
      %p399 = scmp.lt.s32.totalorder %s27, 3
      %p400 = pnand %p398, %p399
      %p401 = pneg %p400
      // Predicated region
      $region57: #{tpu_custom_call.1} parent=5 // pred_check
        _
      $region58: #{tpu_custom_call.1} parent=5 // pred_check_branch
        %403 = sbr.rel (%p400) target = $region60
      $region59: #{tpu_custom_call.1} parent=5 // pred_region
        %s404 = ssub.s32 %s27, 1
        %s405 = sand.u32 %s40, 1
        %s406 = scalar_lea.sflag [#allocation3], %s405
        %s407 = sand.u32 %s40, 1
        %s408 = smul.addr %s407, 8
        %s409 = scalar_lea.vmem [#allocation2], %s408
        // Predicated region
        $region61: #{tpu_custom_call.1} parent=59 // pred_check
          %p410 = pneg %p53
        $region62: #{tpu_custom_call.1} parent=59 // pred_check_branch
          %412 = sbr.rel (%p410) target = $region64
        $region63: #{tpu_custom_call.1} parent=59 // pred_region
          %413 = dma.done %s406, 128
        $region64: #{tpu_custom_call.1} parent=59 // pred_fallthru
          _
        %s414 = sand.u32 %s32, 1
        %s415 = scalar_lea.sflag [#allocation6], %s414
        %s416 = sand.u32 %s66, 1
        %s417 = smul.addr %s416, 8
        %s418 = scalar_lea.vmem [#allocation5], %s417
        // Predicated region
        $region65: #{tpu_custom_call.1} parent=59 // pred_check
          %p419 = pneg %p79
        $region66: #{tpu_custom_call.1} parent=59 // pred_check_branch
          %421 = sbr.rel (%p419) target = $region68
        $region67: #{tpu_custom_call.1} parent=59 // pred_region
          %422 = dma.done %s415, 128
        $region68: #{tpu_custom_call.1} parent=59 // pred_fallthru
          _
        // Predicated region
        $region69: #{tpu_custom_call.1} parent=59 // pred_check
          %p423 = pneg %p100
        $region70: #{tpu_custom_call.1} parent=59 // pred_check_branch
          %425 = sbr.rel (%p423) target = $region72
        $region71: #{tpu_custom_call.1} parent=59 // pred_region
          %426 = dma.done [#allocation6], 256
        $region72: #{tpu_custom_call.1} parent=59 // pred_fallthru
          _
        // Predicated region
        $region73: #{tpu_custom_call.1} parent=59 // pred_check
          %p427 = pneg %p121
        $region74: #{tpu_custom_call.1} parent=59 // pred_check_branch
          %429 = sbr.rel (%p427) target = $region76
        $region75: #{tpu_custom_call.1} parent=59 // pred_region
          %430 = dma.done [#allocation9], 256
        $region76: #{tpu_custom_call.1} parent=59 // pred_fallthru
          _
        // Predicated region
        $region77: #{tpu_custom_call.1} parent=59 // pred_check
          %p431 = pneg %p142
        $region78: #{tpu_custom_call.1} parent=59 // pred_check_branch
          %433 = sbr.rel (%p431) target = $region80
        $region79: #{tpu_custom_call.1} parent=59 // pred_region
          %434 = dma.done [#allocation9], 256
        $region80: #{tpu_custom_call.1} parent=59 // pred_fallthru
          _
        // Predicated region
        $region81: #{tpu_custom_call.1} parent=59 // pred_check
          %p435 = pneg %p226
        $region82: #{tpu_custom_call.1} parent=59 // pred_check_branch
          %437 = sbr.rel (%p435) target = $region84
        $region83: #{tpu_custom_call.1} parent=59 // pred_region
          %438 = dma.done [#allocation12], 256
        $region84: #{tpu_custom_call.1} parent=59 // pred_fallthru
          _
        %s439 = sand.u32 %s40, 1
        %s440 = scalar_lea.sflag [#allocation3], %s439
        %s441 = sand.u32 %s40, 1
        %s442 = smul.addr %s441, 8
        %s443 = scalar_lea.vmem [#allocation2], %s442
        %p444 = pneg %p53
        %p445 = pneg %p50
        %s446 = sand.u32 %s32, 1
        %s447 = scalar_lea.sflag [#allocation6], %s446
        %s448 = sand.u32 %s66, 1
        %s449 = smul.addr %s448, 8
        %s450 = scalar_lea.vmem [#allocation5], %s449
        %p451 = pneg %p79
        %p452 = pneg %p76
        %p453 = pneg %p100
        %p454 = pneg %p97
        %p455 = pneg %p121
        %p456 = pneg %p118
        %p457 = pneg %p142
        %p458 = pneg %p139
        %p459 = pneg %p163
        %p460 = pneg %p160
        %p461 = pneg %p184
        %p462 = pneg %p181
        %p463 = pneg %p205
        %p464 = pneg %p202
        %p465 = pneg %p226
        %p466 = pneg %p223
        %p467 = pneg %p247
        %p468 = pneg %p244
        %p469 = pneg %p273
        %p470 = pneg %p270
        %s471 = sand.u32 %s260, 1
        %s472 = scalar_lea.sflag [#allocation4], %s471
        %s473 = sand.u32 %s260, 1
        %s474 = smul.addr %s473, 16
        %s475 = scalar_lea.vmem [#allocation13], %s474
        %v477 = vld [vmem:[%s409] sm:$0xf]
        %v478 = vld [vmem:[%s409 + $0x4] sm:$0xf]
        %v479 = vunpack.c.l.bf16 %v477
        %v480 = vunpack.c.l.bf16 %v478
        %v481 = vld [vmem:[#allocation7] sm:$0xff]
        %v482 = vld [vmem:[#allocation7 + $0x8] sm:$0xff]
        %v483 = vadd.f32 %v479, %v481
        %v484 = vadd.f32 %v480, %v482
        %v485 = vld [vmem:[%s418] sm:$0xf]
        %v486 = vld [vmem:[%s418 + $0x4] sm:$0xf]
        %v487 = vunpack.c.l.bf16 %v485
        %v488 = vunpack.c.l.bf16 %v486
        %v489 = vld [vmem:[#allocation8] sm:$0xff]
        %v490 = vld [vmem:[#allocation8 + $0x8] sm:$0xff]
        %v491 = vadd.f32 %v487, %v489
        %v492 = vadd.f32 %v488, %v490
        %v493 = vpack.c.bf16 %v484, %v483
        %v494 = vpack.c.bf16 %v492, %v491
        %v495 = vld [vmem:[#allocation10] sm:$0xf]
        %v496 = vld [vmem:[#allocation10 + $0x4] sm:$0xf]
        %v497 = vld [vmem:[#allocation10 + $0x8] sm:$0xf]
        %v498 = vld [vmem:[#allocation10 + $0xc] sm:$0xf]
        %v499 = vld [vmem:[%s5] sm:$0x1]
        %v501 = vlaneseq
        %v502 = vshrl.u32 %v501, 7
        %v503 = vsub.s32 0, %v502
        %v504 = vrot.slane %v499, %v503
        %v510 = vunpack.c.l.b16 %v495
        %v511 = vunpack.c.l.b16 %v496
        %v512 = vunpack.c.l.b16 %v497
        %v513 = vunpack.c.l.b16 %v498
        %v514 = vpack.c.b16 %v511, %v510
        %v515 = vpack.c.b16 %v513, %v512
        %vm518 = vcmask 261120
        %v520 = vsel %vm518, %v493, 0
        %522 = vmatprep.subr.bf16.mxu0 0
        %523 = vmatpush1.bf16.msra.mxu0 %v514
        %524 = vmatprep.subr.bf16.mxu0 0
        %525 = vmatpush1.bf16.msra.mxu0 %v515
        %526 = vmatprep.subr.bf16.mxu0 0
        %527 = vmatpush1.bf16.msra.mxu0 0
        %528 = vmatprep.subr.bf16.mxu0 0
        %529 = vmatpush1.bf16.msra.mxu0 0
        %530 = vmatprep.subr.bf16.mxu0 0
        %531 = vmatpush1.bf16.msra.mxu0 0
        %532 = vmatprep.subr.bf16.mxu0 0
        %533 = vmatpush1.bf16.msra.mxu0 0
        %534 = vmatprep.subr.bf16.mxu0 0
        %535 = vmatpush1.bf16.msra.mxu0 0
        %536 = vmatprep.subr.bf16.mxu0 0
        %537 = vmatpush1.bf16.msra.mxu0 0
        %538 = vmatprep.subr.bf16.mxu0 0
        %539 = vmatpush1.bf16.msra.mxu0 0
        %540 = vmatprep.subr.bf16.mxu0 0
        %541 = vmatpush1.bf16.msra.mxu0 0
        %542 = vmatprep.subr.bf16.mxu0 0
        %543 = vmatpush1.bf16.msra.mxu0 0
        %544 = vmatprep.subr.bf16.mxu0 0
        %545 = vmatpush1.bf16.msra.mxu0 0
        %546 = vmatprep.subr.bf16.mxu0 0
        %547 = vmatpush1.bf16.msra.mxu0 0
        %548 = vmatprep.subr.bf16.mxu0 0
        %549 = vmatpush1.bf16.msra.mxu0 0
        %550 = vmatprep.subr.bf16.mxu0 0
        %551 = vmatpush1.bf16.msra.mxu0 0
        %552 = vmatprep.subr.bf16.mxu0 0
        %553 = vmatpush1.bf16.msra.mxu0 0
        %554 = vmatprep.mubr.bf16.mxu0 0
        %555 = vmatmul.mubr.bf16.gmra.mrb[0].mxu0 %v520
        %v556 = vpop.f32.mrb[0].mxu0
        %v557 = vadd.f32 %v504, %v556
        %v558 = vpop.f32.mrb[0].mxu0
        %v559 = vpop.f32.mrb[0].mxu0
        %v560 = vadd.f32 %v504, %v559
        %v561 = vpop.f32.mrb[0].mxu0
        %562 = vdwg.mxu0
        %v563 = vld [vmem:[%s6] sm:$0xf]
        %v564 = vld [vmem:[%s6 + $0x4] sm:$0xf]
        %v565 = vld [vmem:[%s6 + $0x8] sm:$0xf]
        %v566 = vld [vmem:[%s6 + $0xc] sm:$0xf]
        %v567 = vld [vmem:[%s7] sm:$0x1]
        %v569 = vlaneseq
        %v570 = vshrl.u32 %v569, 7
        %v571 = vsub.s32 0, %v570
        %v572 = vrot.slane %v567, %v571
        %v578 = vunpack.c.l.b16 %v563
        %v579 = vunpack.c.l.b16 %v564
        %v580 = vunpack.c.l.b16 %v565
        %v581 = vunpack.c.l.b16 %v566
        %v582 = vpack.c.b16 %v579, %v578
        %v583 = vpack.c.b16 %v581, %v580
        %v587 = vsel %vm518, %v494, 0
        %589 = vmatprep.subr.bf16.mxu0 0
        %590 = vmatpush1.bf16.msra.mxu0 %v582
        %591 = vmatprep.subr.bf16.mxu0 0
        %592 = vmatpush1.bf16.msra.mxu0 %v583
        %593 = vmatprep.subr.bf16.mxu0 0
        %594 = vmatpush1.bf16.msra.mxu0 0
        %595 = vmatprep.subr.bf16.mxu0 0
        %596 = vmatpush1.bf16.msra.mxu0 0
        %597 = vmatprep.subr.bf16.mxu0 0
        %598 = vmatpush1.bf16.msra.mxu0 0
        %599 = vmatprep.subr.bf16.mxu0 0
        %600 = vmatpush1.bf16.msra.mxu0 0
        %601 = vmatprep.subr.bf16.mxu0 0
        %602 = vmatpush1.bf16.msra.mxu0 0
        %603 = vmatprep.subr.bf16.mxu0 0
        %604 = vmatpush1.bf16.msra.mxu0 0
        %605 = vmatprep.subr.bf16.mxu0 0
        %606 = vmatpush1.bf16.msra.mxu0 0
        %607 = vmatprep.subr.bf16.mxu0 0
        %608 = vmatpush1.bf16.msra.mxu0 0
        %609 = vmatprep.subr.bf16.mxu0 0
        %610 = vmatpush1.bf16.msra.mxu0 0
        %611 = vmatprep.subr.bf16.mxu0 0
        %612 = vmatpush1.bf16.msra.mxu0 0
        %613 = vmatprep.subr.bf16.mxu0 0
        %614 = vmatpush1.bf16.msra.mxu0 0
        %615 = vmatprep.subr.bf16.mxu0 0
        %616 = vmatpush1.bf16.msra.mxu0 0
        %617 = vmatprep.subr.bf16.mxu0 0
        %618 = vmatpush1.bf16.msra.mxu0 0
        %619 = vmatprep.subr.bf16.mxu0 0
        %620 = vmatpush1.bf16.msra.mxu0 0
        %621 = vmatprep.mubr.bf16.mxu0 0
        %622 = vmatmul.mubr.bf16.gmra.mrb[0].mxu0 %v587
        %v623 = vpop.f32.mrb[0].mxu0
        %v624 = vadd.f32 %v572, %v623
        %v625 = vpop.f32.mrb[0].mxu0
        %v626 = vpop.f32.mrb[0].mxu0
        %v627 = vadd.f32 %v572, %v626
        %v628 = vpop.f32.mrb[0].mxu0
        %629 = vdwg.mxu0
        %v630 = vpack.c.bf16 %v560, %v557
        %v631 = vpack.c.bf16 %v627, %v624
        %vm632 = vcmask 64512
        %v634 = vsel %vm632, %v630, 0
        %v637 = vsel %vm632, %v631, 0
        %639 = vmatprep.subr.bf16.mxu0 0
        %640 = vmatpush1.bf16.xpose.msra.mxu0 %v637
        %641 = vmatprep.subr.bf16.mxu0 0
        %642 = vmatpush1.bf16.xpose.msra.mxu0 0
        %643 = vmatprep.subr.bf16.mxu0 0
        %644 = vmatpush1.bf16.xpose.msra.mxu0 0
        %645 = vmatprep.subr.bf16.mxu0 0
        %646 = vmatpush1.bf16.xpose.msra.mxu0 0
        %647 = vmatprep.subr.bf16.mxu0 0
        %648 = vmatpush1.bf16.xpose.msra.mxu0 0
        %649 = vmatprep.subr.bf16.mxu0 0
        %650 = vmatpush1.bf16.xpose.msra.mxu0 0
        %651 = vmatprep.subr.bf16.mxu0 0
        %652 = vmatpush1.bf16.xpose.msra.mxu0 0
        %653 = vmatprep.subr.bf16.mxu0 0
        %654 = vmatpush1.bf16.xpose.msra.mxu0 0
        %655 = vmatprep.subr.bf16.mxu0 0
        %656 = vmatpush1.bf16.xpose.msra.mxu0 0
        %657 = vmatprep.subr.bf16.mxu0 0
        %658 = vmatpush1.bf16.xpose.msra.mxu0 0
        %659 = vmatprep.subr.bf16.mxu0 0
        %660 = vmatpush1.bf16.xpose.msra.mxu0 0
        %661 = vmatprep.subr.bf16.mxu0 0
        %662 = vmatpush1.bf16.xpose.msra.mxu0 0
        %663 = vmatprep.subr.bf16.mxu0 0
        %664 = vmatpush1.bf16.xpose.msra.mxu0 0
        %665 = vmatprep.subr.bf16.mxu0 0
        %666 = vmatpush1.bf16.xpose.msra.mxu0 0
        %667 = vmatprep.subr.bf16.mxu0 0
        %668 = vmatpush1.bf16.xpose.msra.mxu0 0
        %669 = vmatprep.subr.bf16.mxu0 0
        %670 = vmatpush1.bf16.xpose.msra.mxu0 0
        %671 = vmatprep.mubr.bf16.mxu0 0
        %672 = vmatmul.mubr.bf16.gmra.mrb[0].mxu0 %v634
        %v673 = vpop.f32.mrb[0].mxu0
        %v674 = vadd.f32 0.0, %v673
        %v675 = vpop.f32.mrb[0].mxu0
        %v676 = vpop.f32.mrb[0].mxu0
        %v677 = vadd.f32 0.0, %v676
        %v678 = vpop.f32.mrb[0].mxu0
        %679 = vdwg.mxu0
        %vm680 = vcmask 130048
        %v681 = vsel %vm680, %v674, -inf
        %682 = vmax.xlane.f32.xlu0 %v681
        %v683 = vpop.xlane.xlu0 %682
        %v684 = vsel %vm680, %v677, -inf
        %685 = vmax.xlane.f32.xlu0 %v684
        %v686 = vpop.xlane.xlu0 %685
        %v687 = vsub.f32 %v674, %v683
        %v688 = vsub.f32 %v677, %v686
        %v689 = vmul.f32 %v687, 1.442695
        %v690 = vpow.pop %v689
        %v691 = vmul.f32 %v688, 1.442695
        %v692 = vpow.pop %v691
        %v693 = vsel %vm680, %v690, 0.0
        %694 = vadd.xlane.f32.xlu0 %v693
        %v695 = vpop.xlane.xlu0 %694
        %v696 = vsel %vm680, %v692, 0.0
        %697 = vadd.xlane.f32.xlu0 %v696
        %v698 = vpop.xlane.xlu0 %697
        %v699 = vrcp.pop %v695
        %v700 = vrcp.pop %v698
        %v701 = vmul.f32 %v690, %v699
        %v702 = vmul.f32 %v692, %v700
        %v703 = vpack.c.bf16 %v702, %v701
        %705 = vrot.lane.b32.xlu0 %v631, 96
        %v706 = vpop.permute.xlu0 %705
        %v709 = vsel %vm680, %v703, 0
        %711 = vmatprep.subr.bf16.mxu0 0
        %712 = vmatpush1.bf16.msra.mxu0 %v706
        %713 = vmatprep.subr.bf16.mxu0 0
        %714 = vmatpush1.bf16.msra.mxu0 0
        %715 = vmatprep.subr.bf16.mxu0 0
        %716 = vmatpush1.bf16.msra.mxu0 0
        %717 = vmatprep.subr.bf16.mxu0 0
        %718 = vmatpush1.bf16.msra.mxu0 0
        %719 = vmatprep.subr.bf16.mxu0 0
        %720 = vmatpush1.bf16.msra.mxu0 0
        %721 = vmatprep.subr.bf16.mxu0 0
        %722 = vmatpush1.bf16.msra.mxu0 0
        %723 = vmatprep.subr.bf16.mxu0 0
        %724 = vmatpush1.bf16.msra.mxu0 0
        %725 = vmatprep.subr.bf16.mxu0 0
        %726 = vmatpush1.bf16.msra.mxu0 0
        %727 = vmatprep.subr.bf16.mxu0 0
        %728 = vmatpush1.bf16.msra.mxu0 0
        %729 = vmatprep.subr.bf16.mxu0 0
        %730 = vmatpush1.bf16.msra.mxu0 0
        %731 = vmatprep.subr.bf16.mxu0 0
        %732 = vmatpush1.bf16.msra.mxu0 0
        %733 = vmatprep.subr.bf16.mxu0 0
        %734 = vmatpush1.bf16.msra.mxu0 0
        %735 = vmatprep.subr.bf16.mxu0 0
        %736 = vmatpush1.bf16.msra.mxu0 0
        %737 = vmatprep.subr.bf16.mxu0 0
        %738 = vmatpush1.bf16.msra.mxu0 0
        %739 = vmatprep.subr.bf16.mxu0 0
        %740 = vmatpush1.bf16.msra.mxu0 0
        %741 = vmatprep.subr.bf16.mxu0 0
        %742 = vmatpush1.bf16.msra.mxu0 0
        %743 = vmatprep.mubr.bf16.mxu0 0
        %744 = vmatmul.mubr.bf16.gmra.mrb[0].mxu0 %v709
        %v745 = vpop.f32.mrb[0].mxu0
        %v746 = vadd.f32 0.0, %v745
        %v747 = vpop.f32.mrb[0].mxu0
        %v748 = vpop.f32.mrb[0].mxu0
        %v749 = vadd.f32 0.0, %v748
        %v750 = vpop.f32.mrb[0].mxu0
        %751 = vdwg.mxu0
        %v752 = vpack.c.bf16 %v749, %v746
        %754 = vrot.lane.b32.xlu0 %v630, 120
        %v755 = vpop.permute.xlu0 %754
        %756 = vrot.lane.b32.xlu0 %v631, 120
        %v757 = vpop.permute.xlu0 %756
        %v759 = vsel %vm632, %v755, 0
        %v762 = vsel %vm632, %v757, 0
        %764 = vmatprep.subr.bf16.mxu0 0
        %765 = vmatpush1.bf16.xpose.msra.mxu0 %v762
        %766 = vmatprep.subr.bf16.mxu0 0
        %767 = vmatpush1.bf16.xpose.msra.mxu0 0
        %768 = vmatprep.subr.bf16.mxu0 0
        %769 = vmatpush1.bf16.xpose.msra.mxu0 0
        %770 = vmatprep.subr.bf16.mxu0 0
        %771 = vmatpush1.bf16.xpose.msra.mxu0 0
        %772 = vmatprep.subr.bf16.mxu0 0
        %773 = vmatpush1.bf16.xpose.msra.mxu0 0
        %774 = vmatprep.subr.bf16.mxu0 0
        %775 = vmatpush1.bf16.xpose.msra.mxu0 0
        %776 = vmatprep.subr.bf16.mxu0 0
        %777 = vmatpush1.bf16.xpose.msra.mxu0 0
        %778 = vmatprep.subr.bf16.mxu0 0
        %779 = vmatpush1.bf16.xpose.msra.mxu0 0
        %780 = vmatprep.subr.bf16.mxu0 0
        %781 = vmatpush1.bf16.xpose.msra.mxu0 0
        %782 = vmatprep.subr.bf16.mxu0 0
        %783 = vmatpush1.bf16.xpose.msra.mxu0 0
        %784 = vmatprep.subr.bf16.mxu0 0
        %785 = vmatpush1.bf16.xpose.msra.mxu0 0
        %786 = vmatprep.subr.bf16.mxu0 0
        %787 = vmatpush1.bf16.xpose.msra.mxu0 0
        %788 = vmatprep.subr.bf16.mxu0 0
        %789 = vmatpush1.bf16.xpose.msra.mxu0 0
        %790 = vmatprep.subr.bf16.mxu0 0
        %791 = vmatpush1.bf16.xpose.msra.mxu0 0
        %792 = vmatprep.subr.bf16.mxu0 0
        %793 = vmatpush1.bf16.xpose.msra.mxu0 0
        %794 = vmatprep.subr.bf16.mxu0 0
        %795 = vmatpush1.bf16.xpose.msra.mxu0 0
        %796 = vmatprep.mubr.bf16.mxu0 0
        %797 = vmatmul.mubr.bf16.gmra.mrb[0].mxu0 %v759
        %v798 = vpop.f32.mrb[0].mxu0
        %v799 = vadd.f32 0.0, %v798
        %v800 = vpop.f32.mrb[0].mxu0
        %v801 = vpop.f32.mrb[0].mxu0
        %v802 = vadd.f32 0.0, %v801
        %v803 = vpop.f32.mrb[0].mxu0
        %804 = vdwg.mxu0
        %v805 = vsel %vm680, %v799, -inf
        %806 = vmax.xlane.f32.xlu0 %v805
        %v807 = vpop.xlane.xlu0 %806
        %v808 = vsel %vm680, %v802, -inf
        %809 = vmax.xlane.f32.xlu0 %v808
        %v810 = vpop.xlane.xlu0 %809
        %v811 = vsub.f32 %v799, %v807
        %v812 = vsub.f32 %v802, %v810
        %v813 = vmul.f32 %v811, 1.442695
        %v814 = vpow.pop %v813
        %v815 = vmul.f32 %v812, 1.442695
        %v816 = vpow.pop %v815
        %v817 = vsel %vm680, %v814, 0.0
        %818 = vadd.xlane.f32.xlu0 %v817
        %v819 = vpop.xlane.xlu0 %818
        %v820 = vsel %vm680, %v816, 0.0
        %821 = vadd.xlane.f32.xlu0 %v820
        %v822 = vpop.xlane.xlu0 %821
        %v823 = vrcp.pop %v819
        %v824 = vrcp.pop %v822
        %v825 = vmul.f32 %v814, %v823
        %v826 = vmul.f32 %v816, %v824
        %v827 = vpack.c.bf16 %v826, %v825
        %828 = vrot.lane.b32.xlu0 %v631, 88
        %v829 = vpop.permute.xlu0 %828
        %v832 = vsel %vm680, %v827, 0
        %834 = vmatprep.subr.bf16.mxu0 0
        %835 = vmatpush1.bf16.msra.mxu0 %v829
        %836 = vmatprep.subr.bf16.mxu0 0
        %837 = vmatpush1.bf16.msra.mxu0 0
        %838 = vmatprep.subr.bf16.mxu0 0
        %839 = vmatpush1.bf16.msra.mxu0 0
        %840 = vmatprep.subr.bf16.mxu0 0
        %841 = vmatpush1.bf16.msra.mxu0 0
        %842 = vmatprep.subr.bf16.mxu0 0
        %843 = vmatpush1.bf16.msra.mxu0 0
        %844 = vmatprep.subr.bf16.mxu0 0
        %845 = vmatpush1.bf16.msra.mxu0 0
        %846 = vmatprep.subr.bf16.mxu0 0
        %847 = vmatpush1.bf16.msra.mxu0 0
        %848 = vmatprep.subr.bf16.mxu0 0
        %849 = vmatpush1.bf16.msra.mxu0 0
        %850 = vmatprep.subr.bf16.mxu0 0
        %851 = vmatpush1.bf16.msra.mxu0 0
        %852 = vmatprep.subr.bf16.mxu0 0
        %853 = vmatpush1.bf16.msra.mxu0 0
        %854 = vmatprep.subr.bf16.mxu0 0
        %855 = vmatpush1.bf16.msra.mxu0 0
        %856 = vmatprep.subr.bf16.mxu0 0
        %857 = vmatpush1.bf16.msra.mxu0 0
        %858 = vmatprep.subr.bf16.mxu0 0
        %859 = vmatpush1.bf16.msra.mxu0 0
        %860 = vmatprep.subr.bf16.mxu0 0
        %861 = vmatpush1.bf16.msra.mxu0 0
        %862 = vmatprep.subr.bf16.mxu0 0
        %863 = vmatpush1.bf16.msra.mxu0 0
        %864 = vmatprep.subr.bf16.mxu0 0
        %865 = vmatpush1.bf16.msra.mxu0 0
        %866 = vmatprep.mubr.bf16.mxu0 0
        %867 = vmatmul.mubr.bf16.gmra.mrb[0].mxu0 %v832
        %v868 = vpop.f32.mrb[0].mxu0
        %v869 = vadd.f32 0.0, %v868
        %v870 = vpop.f32.mrb[0].mxu0
        %v871 = vpop.f32.mrb[0].mxu0
        %v872 = vadd.f32 0.0, %v871
        %v873 = vpop.f32.mrb[0].mxu0
        %874 = vdwg.mxu0
        %v875 = vpack.c.bf16 %v872, %v869
        %876 = vrot.lane.b32.xlu0 %v630, 112
        %v877 = vpop.permute.xlu0 %876
        %878 = vrot.lane.b32.xlu0 %v631, 112
        %v879 = vpop.permute.xlu0 %878
        %v881 = vsel %vm632, %v877, 0
        %v884 = vsel %vm632, %v879, 0
        %886 = vmatprep.subr.bf16.mxu0 0
        %887 = vmatpush1.bf16.xpose.msra.mxu0 %v884
        %888 = vmatprep.subr.bf16.mxu0 0
        %889 = vmatpush1.bf16.xpose.msra.mxu0 0
        %890 = vmatprep.subr.bf16.mxu0 0
        %891 = vmatpush1.bf16.xpose.msra.mxu0 0
        %892 = vmatprep.subr.bf16.mxu0 0
        %893 = vmatpush1.bf16.xpose.msra.mxu0 0
        %894 = vmatprep.subr.bf16.mxu0 0
        %895 = vmatpush1.bf16.xpose.msra.mxu0 0
        %896 = vmatprep.subr.bf16.mxu0 0
        %897 = vmatpush1.bf16.xpose.msra.mxu0 0
        %898 = vmatprep.subr.bf16.mxu0 0
        %899 = vmatpush1.bf16.xpose.msra.mxu0 0
        %900 = vmatprep.subr.bf16.mxu0 0
        %901 = vmatpush1.bf16.xpose.msra.mxu0 0
        %902 = vmatprep.subr.bf16.mxu0 0
        %903 = vmatpush1.bf16.xpose.msra.mxu0 0
        %904 = vmatprep.subr.bf16.mxu0 0
        %905 = vmatpush1.bf16.xpose.msra.mxu0 0
        %906 = vmatprep.subr.bf16.mxu0 0
        %907 = vmatpush1.bf16.xpose.msra.mxu0 0
        %908 = vmatprep.subr.bf16.mxu0 0
        %909 = vmatpush1.bf16.xpose.msra.mxu0 0
        %910 = vmatprep.subr.bf16.mxu0 0
        %911 = vmatpush1.bf16.xpose.msra.mxu0 0
        %912 = vmatprep.subr.bf16.mxu0 0
        %913 = vmatpush1.bf16.xpose.msra.mxu0 0
        %914 = vmatprep.subr.bf16.mxu0 0
        %915 = vmatpush1.bf16.xpose.msra.mxu0 0
        %916 = vmatprep.subr.bf16.mxu0 0
        %917 = vmatpush1.bf16.xpose.msra.mxu0 0
        %918 = vmatprep.mubr.bf16.mxu0 0
        %919 = vmatmul.mubr.bf16.gmra.mrb[0].mxu0 %v881
        %v920 = vpop.f32.mrb[0].mxu0
        %v921 = vadd.f32 0.0, %v920
        %v922 = vpop.f32.mrb[0].mxu0
        %v923 = vpop.f32.mrb[0].mxu0
        %v924 = vadd.f32 0.0, %v923
        %v925 = vpop.f32.mrb[0].mxu0
        %926 = vdwg.mxu0
        %v927 = vsel %vm680, %v921, -inf
        %928 = vmax.xlane.f32.xlu0 %v927
        %v929 = vpop.xlane.xlu0 %928
        %v930 = vsel %vm680, %v924, -inf
        %931 = vmax.xlane.f32.xlu0 %v930
        %v932 = vpop.xlane.xlu0 %931
        %v933 = vsub.f32 %v921, %v929
        %v934 = vsub.f32 %v924, %v932
        %v935 = vmul.f32 %v933, 1.442695
        %v936 = vpow.pop %v935
        %v937 = vmul.f32 %v934, 1.442695
        %v938 = vpow.pop %v937
        %v939 = vsel %vm680, %v936, 0.0
        %940 = vadd.xlane.f32.xlu0 %v939
        %v941 = vpop.xlane.xlu0 %940
        %v942 = vsel %vm680, %v938, 0.0
        %943 = vadd.xlane.f32.xlu0 %v942
        %v944 = vpop.xlane.xlu0 %943
        %v945 = vrcp.pop %v941
        %v946 = vrcp.pop %v944
        %v947 = vmul.f32 %v936, %v945
        %v948 = vmul.f32 %v938, %v946
        %v949 = vpack.c.bf16 %v948, %v947
        %950 = vrot.lane.b32.xlu0 %v631, 80
        %v951 = vpop.permute.xlu0 %950
        %v954 = vsel %vm680, %v949, 0
        %956 = vmatprep.subr.bf16.mxu0 0
        %957 = vmatpush1.bf16.msra.mxu0 %v951
        %958 = vmatprep.subr.bf16.mxu0 0
        %959 = vmatpush1.bf16.msra.mxu0 0
        %960 = vmatprep.subr.bf16.mxu0 0
        %961 = vmatpush1.bf16.msra.mxu0 0
        %962 = vmatprep.subr.bf16.mxu0 0
        %963 = vmatpush1.bf16.msra.mxu0 0
        %964 = vmatprep.subr.bf16.mxu0 0
        %965 = vmatpush1.bf16.msra.mxu0 0
        %966 = vmatprep.subr.bf16.mxu0 0
        %967 = vmatpush1.bf16.msra.mxu0 0
        %968 = vmatprep.subr.bf16.mxu0 0
        %969 = vmatpush1.bf16.msra.mxu0 0
        %970 = vmatprep.subr.bf16.mxu0 0
        %971 = vmatpush1.bf16.msra.mxu0 0
        %972 = vmatprep.subr.bf16.mxu0 0
        %973 = vmatpush1.bf16.msra.mxu0 0
        %974 = vmatprep.subr.bf16.mxu0 0
        %975 = vmatpush1.bf16.msra.mxu0 0
        %976 = vmatprep.subr.bf16.mxu0 0
        %977 = vmatpush1.bf16.msra.mxu0 0
        %978 = vmatprep.subr.bf16.mxu0 0
        %979 = vmatpush1.bf16.msra.mxu0 0
        %980 = vmatprep.subr.bf16.mxu0 0
        %981 = vmatpush1.bf16.msra.mxu0 0
        %982 = vmatprep.subr.bf16.mxu0 0
        %983 = vmatpush1.bf16.msra.mxu0 0
        %984 = vmatprep.subr.bf16.mxu0 0
        %985 = vmatpush1.bf16.msra.mxu0 0
        %986 = vmatprep.subr.bf16.mxu0 0
        %987 = vmatpush1.bf16.msra.mxu0 0
        %988 = vmatprep.mubr.bf16.mxu0 0
        %989 = vmatmul.mubr.bf16.gmra.mrb[0].mxu0 %v954
        %v990 = vpop.f32.mrb[0].mxu0
        %v991 = vadd.f32 0.0, %v990
        %v992 = vpop.f32.mrb[0].mxu0
        %v993 = vpop.f32.mrb[0].mxu0
        %v994 = vadd.f32 0.0, %v993
        %v995 = vpop.f32.mrb[0].mxu0
        %996 = vdwg.mxu0
        %v997 = vpack.c.bf16 %v994, %v991
        %998 = vrot.lane.b32.xlu0 %v630, 104
        %v999 = vpop.permute.xlu0 %998
        %1000 = vrot.lane.b32.xlu0 %v631, 104
        %v1001 = vpop.permute.xlu0 %1000
        %v1003 = vsel %vm632, %v999, 0
        %v1006 = vsel %vm632, %v1001, 0
        %1008 = vmatprep.subr.bf16.mxu0 0
        %1009 = vmatpush1.bf16.xpose.msra.mxu0 %v1006
        %1010 = vmatprep.subr.bf16.mxu0 0
        %1011 = vmatpush1.bf16.xpose.msra.mxu0 0
        %1012 = vmatprep.subr.bf16.mxu0 0
        %1013 = vmatpush1.bf16.xpose.msra.mxu0 0
        %1014 = vmatprep.subr.bf16.mxu0 0
        %1015 = vmatpush1.bf16.xpose.msra.mxu0 0
        %1016 = vmatprep.subr.bf16.mxu0 0
        %1017 = vmatpush1.bf16.xpose.msra.mxu0 0
        %1018 = vmatprep.subr.bf16.mxu0 0
        %1019 = vmatpush1.bf16.xpose.msra.mxu0 0
        %1020 = vmatprep.subr.bf16.mxu0 0
        %1021 = vmatpush1.bf16.xpose.msra.mxu0 0
        %1022 = vmatprep.subr.bf16.mxu0 0
        %1023 = vmatpush1.bf16.xpose.msra.mxu0 0
        %1024 = vmatprep.subr.bf16.mxu0 0
        %1025 = vmatpush1.bf16.xpose.msra.mxu0 0
        %1026 = vmatprep.subr.bf16.mxu0 0
        %1027 = vmatpush1.bf16.xpose.msra.mxu0 0
        %1028 = vmatprep.subr.bf16.mxu0 0
        %1029 = vmatpush1.bf16.xpose.msra.mxu0 0
        %1030 = vmatprep.subr.bf16.mxu0 0
        %1031 = vmatpush1.bf16.xpose.msra.mxu0 0
        %1032 = vmatprep.subr.bf16.mxu0 0
        %1033 = vmatpush1.bf16.xpose.msra.mxu0 0
        %1034 = vmatprep.subr.bf16.mxu0 0
        %1035 = vmatpush1.bf16.xpose.msra.mxu0 0
        %1036 = vmatprep.subr.bf16.mxu0 0
        %1037 = vmatpush1.bf16.xpose.msra.mxu0 0
        %1038 = vmatprep.subr.bf16.mxu0 0
        %1039 = vmatpush1.bf16.xpose.msra.mxu0 0
        %1040 = vmatprep.mubr.bf16.mxu0 0
        %1041 = vmatmul.mubr.bf16.gmra.mrb[0].mxu0 %v1003
        %v1042 = vpop.f32.mrb[0].mxu0
        %v1043 = vadd.f32 0.0, %v1042
        %v1044 = vpop.f32.mrb[0].mxu0
        %v1045 = vpop.f32.mrb[0].mxu0
        %v1046 = vadd.f32 0.0, %v1045
        %v1047 = vpop.f32.mrb[0].mxu0
        %1048 = vdwg.mxu0
        %v1049 = vsel %vm680, %v1043, -inf
        %1050 = vmax.xlane.f32.xlu0 %v1049
        %v1051 = vpop.xlane.xlu0 %1050
        %v1052 = vsel %vm680, %v1046, -inf
        %1053 = vmax.xlane.f32.xlu0 %v1052
        %v1054 = vpop.xlane.xlu0 %1053
        %v1055 = vsub.f32 %v1043, %v1051
        %v1056 = vsub.f32 %v1046, %v1054
        %v1057 = vmul.f32 %v1055, 1.442695
        %v1058 = vpow.pop %v1057
        %v1059 = vmul.f32 %v1056, 1.442695
        %v1060 = vpow.pop %v1059
        %v1061 = vsel %vm680, %v1058, 0.0
        %1062 = vadd.xlane.f32.xlu0 %v1061
        %v1063 = vpop.xlane.xlu0 %1062
        %v1064 = vsel %vm680, %v1060, 0.0
        %1065 = vadd.xlane.f32.xlu0 %v1064
        %v1066 = vpop.xlane.xlu0 %1065
        %v1067 = vrcp.pop %v1063
        %v1068 = vrcp.pop %v1066
        %v1069 = vmul.f32 %v1058, %v1067
        %v1070 = vmul.f32 %v1060, %v1068
        %v1071 = vpack.c.bf16 %v1070, %v1069
        %1072 = vrot.lane.b32.xlu0 %v631, 72
        %v1073 = vpop.permute.xlu0 %1072
        %v1076 = vsel %vm680, %v1071, 0
        %1078 = vmatprep.subr.bf16.mxu0 0
        %1079 = vmatpush1.bf16.msra.mxu0 %v1073
        %1080 = vmatprep.subr.bf16.mxu0 0
        %1081 = vmatpush1.bf16.msra.mxu0 0
        %1082 = vmatprep.subr.bf16.mxu0 0
        %1083 = vmatpush1.bf16.msra.mxu0 0
        %1084 = vmatprep.subr.bf16.mxu0 0
        %1085 = vmatpush1.bf16.msra.mxu0 0
        %1086 = vmatprep.subr.bf16.mxu0 0
        %1087 = vmatpush1.bf16.msra.mxu0 0
        %1088 = vmatprep.subr.bf16.mxu0 0
        %1089 = vmatpush1.bf16.msra.mxu0 0
        %1090 = vmatprep.subr.bf16.mxu0 0
        %1091 = vmatpush1.bf16.msra.mxu0 0
        %1092 = vmatprep.subr.bf16.mxu0 0
        %1093 = vmatpush1.bf16.msra.mxu0 0
        %1094 = vmatprep.subr.bf16.mxu0 0
        %1095 = vmatpush1.bf16.msra.mxu0 0
        %1096 = vmatprep.subr.bf16.mxu0 0
        %1097 = vmatpush1.bf16.msra.mxu0 0
        %1098 = vmatprep.subr.bf16.mxu0 0
        %1099 = vmatpush1.bf16.msra.mxu0 0
        %1100 = vmatprep.subr.bf16.mxu0 0
        %1101 = vmatpush1.bf16.msra.mxu0 0
        %1102 = vmatprep.subr.bf16.mxu0 0
        %1103 = vmatpush1.bf16.msra.mxu0 0
        %1104 = vmatprep.subr.bf16.mxu0 0
        %1105 = vmatpush1.bf16.msra.mxu0 0
        %1106 = vmatprep.subr.bf16.mxu0 0
        %1107 = vmatpush1.bf16.msra.mxu0 0
        %1108 = vmatprep.subr.bf16.mxu0 0
        %1109 = vmatpush1.bf16.msra.mxu0 0
        %1110 = vmatprep.mubr.bf16.mxu0 0
        %1111 = vmatmul.mubr.bf16.gmra.mrb[0].mxu0 %v1076
        %v1112 = vpop.f32.mrb[0].mxu0
        %v1113 = vadd.f32 0.0, %v1112
        %v1114 = vpop.f32.mrb[0].mxu0
        %v1115 = vpop.f32.mrb[0].mxu0
        %v1116 = vadd.f32 0.0, %v1115
        %v1117 = vpop.f32.mrb[0].mxu0
        %1118 = vdwg.mxu0
        %v1119 = vpack.c.bf16 %v1116, %v1113
        %1121 = vrot.lane.b32.xlu0 %v875, 8
        %v1122 = vpop.permute.xlu0 %1121
        %1124 = vrot.lane.b32.xlu0 %v997, 16
        %v1125 = vpop.permute.xlu0 %1124
        %1127 = vrot.lane.b32.xlu0 %v1119, 24
        %v1128 = vpop.permute.xlu0 %1127
        %v1131 = vsel %vm632, %v752, %v1122
        %v1133 = vsel %vm680, %v1131, %v1125
        %vm1134 = vcmask 195584
        %v1136 = vsel %vm1134, %v1133, %v1128
        %v1137 = vld [vmem:[#allocation11] sm:$0xf]
        %v1138 = vld [vmem:[#allocation11 + $0x4] sm:$0xf]
        %v1139 = vld [vmem:[#allocation11 + $0x8] sm:$0xf]
        %v1140 = vld [vmem:[#allocation11 + $0xc] sm:$0xf]
        %v1141 = vld [vmem:[%s9] sm:$0x1]
        %v1143 = vlaneseq
        %v1144 = vshrl.u32 %v1143, 7
        %v1145 = vsub.s32 0, %v1144
        %v1146 = vrot.slane %v1141, %v1145
        %v1152 = vunpack.c.l.b16 %v1137
        %v1153 = vunpack.c.l.b16 %v1138
        %v1154 = vunpack.c.l.b16 %v1139
        %v1155 = vunpack.c.l.b16 %v1140
        %v1156 = vpack.c.b16 %v1153, %v1152
        %v1157 = vpack.c.b16 %v1155, %v1154
        %v1160 = vsel %vm518, %v1136, 0
        %1162 = vmatprep.subr.bf16.mxu0 0
        %1163 = vmatpush1.bf16.msra.mxu0 %v1156
        %1164 = vmatprep.subr.bf16.mxu0 0
        %1165 = vmatpush1.bf16.msra.mxu0 %v1157
        %1166 = vmatprep.subr.bf16.mxu0 0
        %1167 = vmatpush1.bf16.msra.mxu0 0
        %1168 = vmatprep.subr.bf16.mxu0 0
        %1169 = vmatpush1.bf16.msra.mxu0 0
        %1170 = vmatprep.subr.bf16.mxu0 0
        %1171 = vmatpush1.bf16.msra.mxu0 0
        %1172 = vmatprep.subr.bf16.mxu0 0
        %1173 = vmatpush1.bf16.msra.mxu0 0
        %1174 = vmatprep.subr.bf16.mxu0 0
        %1175 = vmatpush1.bf16.msra.mxu0 0
        %1176 = vmatprep.subr.bf16.mxu0 0
        %1177 = vmatpush1.bf16.msra.mxu0 0
        %1178 = vmatprep.subr.bf16.mxu0 0
        %1179 = vmatpush1.bf16.msra.mxu0 0
        %1180 = vmatprep.subr.bf16.mxu0 0
        %1181 = vmatpush1.bf16.msra.mxu0 0
        %1182 = vmatprep.subr.bf16.mxu0 0
        %1183 = vmatpush1.bf16.msra.mxu0 0
        %1184 = vmatprep.subr.bf16.mxu0 0
        %1185 = vmatpush1.bf16.msra.mxu0 0
        %1186 = vmatprep.subr.bf16.mxu0 0
        %1187 = vmatpush1.bf16.msra.mxu0 0
        %1188 = vmatprep.subr.bf16.mxu0 0
        %1189 = vmatpush1.bf16.msra.mxu0 0
        %1190 = vmatprep.subr.bf16.mxu0 0
        %1191 = vmatpush1.bf16.msra.mxu0 0
        %1192 = vmatprep.subr.bf16.mxu0 0
        %1193 = vmatpush1.bf16.msra.mxu0 0
        %1194 = vmatprep.mubr.bf16.mxu0 0
        %1195 = vmatmul.mubr.bf16.gmra.mrb[0].mxu0 %v1160
        %v1196 = vpop.f32.mrb[0].mxu0
        %v1197 = vadd.f32 %v1146, %v1196
        %v1198 = vpop.f32.mrb[0].mxu0
        %v1199 = vpop.f32.mrb[0].mxu0
        %v1200 = vadd.f32 %v1146, %v1199
        %v1201 = vpop.f32.mrb[0].mxu0
        %1202 = vdwg.mxu0
        %1203 = vst.msk [vmem:[%s475] sm:$0xff] %vm518, %v1197
        %1204 = vst.msk [vmem:[%s475 + $0x8] sm:$0xff] %vm518, %v1200
        %s1205 = sand.u32 %s260, 1
        %s1206 = scalar_lea.sflag [#allocation4], %s1205
        %s1207 = sand.u32 %s260, 1
        %s1208 = smul.addr %s1207, 16
        %s1209 = scalar_lea.vmem [#allocation13], %s1208
        // Predicated region
        $region85: #{tpu_custom_call.1} parent=59 // pred_check
          %p1210 = pneg %p270
        $region86: #{tpu_custom_call.1} parent=59 // pred_check_branch
          %1212 = sbr.rel (%p1210) target = $region88
        $region87: #{tpu_custom_call.1} parent=59 // pred_region
          %s1214 = ssub.s32 256, 256
          %1215 = vsyncadd %s1206, %s1214
          %s1216 = smul.addr %s32, 2
          %s1217 = smul.addr %s1216, 128
          %s1218 = scalar_lea.hbm %s10, %s1217
          %s1219 = sshll.u32 %s1209, 4
          %s1220 = int_to_ptr.vmem [resolvable:$true] %s1219
          %1225 = dma.vmem_to_hbm [thread:$0]  %s1220, 256, %s1218, %s1206, 128, 128, 8
        $region88: #{tpu_custom_call.1} parent=59 // pred_fallthru
          _
      $region60: #{tpu_custom_call.1} parent=5 // pred_fallthru
        _
      %p1226 = scmp.le.s32.totalorder 2, %s27
      // Predicated region
      $region89: #{tpu_custom_call.1} parent=5 // pred_check
        %p1227 = pneg %p1226
      $region90: #{tpu_custom_call.1} parent=5 // pred_check_branch
        %1229 = sbr.rel (%p1227) target = $region92
      $region91: #{tpu_custom_call.1} parent=5 // pred_region
        %s1230 = ssub.s32 %s27, 2
        // Predicated region
        $region93: #{tpu_custom_call.1} parent=91 // pred_check
          %p1231 = pneg %p276
        $region94: #{tpu_custom_call.1} parent=91 // pred_check_branch
          %1233 = sbr.rel (%p1231) target = $region96
        $region95: #{tpu_custom_call.1} parent=91 // pred_region
          %s1234 = sand.u32 %s261, 1
          %s1235 = scalar_lea.sflag [#allocation4], %s1234
          %s1236 = sand.u32 %s261, 1
          %s1237 = smul.addr %s1236, 16
          %s1238 = scalar_lea.vmem [#allocation13], %s1237
          %1239 = dma.done %s1235, 256
        $region96: #{tpu_custom_call.1} parent=91 // pred_fallthru
          _
      $region92: #{tpu_custom_call.1} parent=5 // pred_fallthru
        _
    $region6: #{tpu_custom_call.1} parent=1 // loop_footer
      %s31 = sadd.s32 1, %s27
    $region7: #{tpu_custom_call.1} parent=1 // loop_footer_branch
      %26 = sbr.rel target = $region3
    $region8: #{tpu_custom_call.1} parent=1 // loop_exit
      _
    %1240 = vsyncpa [#allocation3], 1
    %s1241 = scalar_lea.sflag [#allocation3], 1
    %1242 = vsyncpa %s1241, 1
    %1243 = vsyncpa [#allocation6], 1
    %s1244 = scalar_lea.sflag [#allocation6], 1
    %1245 = vsyncpa %s1244, 1
    %1246 = vsyncpa [#allocation9], 1
    %1247 = vsyncpa [#allocation12], 1
    %1248 = vsyncpa [#allocation4], 1
    %s1249 = scalar_lea.sflag [#allocation4], 1
    %1250 = vsyncpa %s1249, 1

</llo_original>
